<compile_context>
chip_gen: v7x
topology: tpu7x:2x2x1
jax: 0.10.0
libtpu: 0.0.40
codegen_flags: <defaults>
</compile_context>

<pallas_src>
import functools

import jax
import jax.numpy as jnp
from jax.experimental import pallas as pl
from jax.experimental.pallas import tpu as pltpu

_DPAD = 128  # lane-dense padded FC output width


# ----------------------------------------------------------------------------
# Fused Pallas kernel: stem conv -> residual block -> GAP -> FC, TB images/step
# ----------------------------------------------------------------------------
def _siamese_kernel(x_ref, m_ref, w_ref, b_ref, fcw_ref, fcb_ref, o_ref,
                    *, H, W, C, TB):
    """One grid step = full feature extraction for TB images.

    x_ref:   (C, TB*H*W)   channel-major, lane-concatenated images
    m_ref:   (4, TB*H*W)   tap validity masks [top, bottom, left, right]
    w_ref:   (3, 9, C, C)  conv weights per (layer, tap), each (cout, cin)
    b_ref:   (3, C, 1)     conv biases
    fcw_ref: (C, _DPAD)    FC weights (zero-padded to 128 lanes)
    fcb_ref: (1, _DPAD)    FC bias
    o_ref:   (1, TB, _DPAD) output features (lane-dense)
    """
    HW = H * W
    N = TB * HW

    # Edge-validity masks.  All circular wrap of pltpu.roll (across rows,
    # across images and across the slab ends) lands on positions these masks
    # zero out, so no halo is needed anywhere.
    v_mask = {-1: m_ref[0:1, :], 0: None, 1: m_ref[1:2, :]}   # row shift dr
    h_mask = {-1: m_ref[2:3, :], 0: None, 1: m_ref[3:4, :]}   # col shift dc

    def conv3x3(x, layer, residual=None):
        acc = None
        for k in range(9):
            r, c = divmod(k, 3)
            dr, dc = r - 1, c - 1
            # tap[p] = x[p + dr*W + dc]  (where valid)  -> roll by -(dr*W+dc)
            shift = (-(dr * W + dc)) % N
            tap = pltpu.roll(x, shift=shift, axis=1) if shift else x
            if v_mask[dr] is not None:
                tap = tap * v_mask[dr]
            if h_mask[dc] is not None:
                tap = tap * h_mask[dc]
            part = jnp.dot(w_ref[layer, k], tap,
                           preferred_element_type=jnp.float32)   # (C, N)
            acc = part if acc is None else acc + part
        acc = acc + b_ref[layer]                                  # (C, 1) bcast
        if residual is not None:
            acc = acc + residual
        return jnp.maximum(acc, 0.0)

    # Stem conv reads the input slab directly (no initial VMEM->VMEM copy).
    x = x_ref[...]                       # (C, N)
    s = conv3x3(x, 0)
    # Basic residual block: conv-relu-conv + skip + relu (all in registers).
    y1 = conv3x3(s, 1)
    y2 = conv3x3(y1, 2, residual=s)

    # Global average pool (per image, lane reduction) + linear head.
    fcw = fcw_ref[...]                   # (C, _DPAD)
    fcb = fcb_ref[...]                   # (1, _DPAD)
    inv_hw = 1.0 / HW
    rows = []
    for b in range(TB):                  # static unroll, TB is small
        yb = y2[:, b * HW:(b + 1) * HW]                      # lane-aligned slice
        pooled = jnp.sum(yb, axis=1, keepdims=True) * inv_hw  # (C, 1)
        rows.append(jnp.sum(fcw * pooled, axis=0, keepdims=True) + fcb)
    feats = jnp.concatenate(rows, axis=0) if TB > 1 else rows[0]   # (TB, _DPAD)
    o_ref[0] = feats


# ----------------------------------------------------------------------------
# Wrapper: layout prep + single pallas_call over the combined batch
# ----------------------------------------------------------------------------
def _pack_conv(w_hwio, c):
    """(3, 3, cin, cout) HWIO -> (9, c, c) per-tap (cout, cin) matrices,
    zero-padding cin/cout up to c."""
    kh, kw, cin, cout = w_hwio.shape
    w = jnp.transpose(w_hwio, (0, 1, 3, 2))                 # (3, 3, cout, cin)
    w = jnp.pad(w, ((0, 0), (0, 0), (0, c - cout), (0, c - cin)))
    return w.reshape(kh * kw, c, c)


def _choose_batch_tile(n, max_tb=4):
    """Largest per-step image tile (<= max_tb) that keeps >= 2 grid steps
    (v7x megacore) and divides n."""
    tb = 1
    for cand in range(1, min(n, max_tb) + 1):
        if n % cand == 0 and n // cand >= 2:
            tb = cand
    return tb


def _extract_features(params, imgs):
    n, cin, H, W = imgs.shape
    cmid = params["stem_w"].shape[-1]
    d = params["fc_w"].shape[-1]
    HW = H * W
    assert cmid % 8 == 0 and cin <= cmid, "channels must fit (8,128) tiling"
    assert d <= _DPAD

    tb = _choose_batch_tile(n)
    steps = n // tb
    assert (tb * HW) % 128 == 0, "per-step lane block must be 128-aligned"

    # Channel-major, lane-concatenated slab: element (c, b*HW + i*W + j).
    x = imgs.astype(jnp.float32)
    if cin < cmid:
        x = jnp.pad(x, ((0, 0), (0, cmid - cin), (0, 0), (0, 0)))
    x2d = jnp.transpose(x.reshape(n, cmid, HW), (1, 0, 2)).reshape(cmid, n * HW)

    # Tap validity masks (computed once on host/XLA, tiled over the tile batch).
    col = jnp.arange(HW, dtype=jnp.int32) % W
    row = jnp.arange(HW, dtype=jnp.int32) // W
    masks = jnp.stack([(row > 0), (row < H - 1),
                       (col > 0), (col < W - 1)]).astype(jnp.float32)
    masks = jnp.tile(masks, (1, tb))                          # (4, tb*HW)

    conv_w = jnp.stack([_pack_conv(params["stem_w"], cmid),
                        _pack_conv(params["b1_w"], cmid),
                        _pack_conv(params["b2_w"], cmid)])    # (3, 9, C, C)
    conv_b = jnp.stack([params["stem_b"], params["b1_b"],
                        params["b2_b"]]).reshape(3, cmid, 1)  # (3, C, 1)
    fcw = jnp.pad(params["fc_w"], ((0, 0), (0, _DPAD - d)))   # (C, 128)
    fcb = jnp.pad(params["fc_b"], (0, _DPAD - d)).reshape(1, _DPAD)

    kernel = functools.partial(_siamese_kernel, H=H, W=W, C=cmid, TB=tb)

    out = pl.pallas_call(
        kernel,
        out_shape=jax.ShapeDtypeStruct((steps, tb, _DPAD), jnp.float32),
        grid=(steps,),
        in_specs=[
            pl.BlockSpec((cmid, tb * HW), lambda i: (0, i)),          # images
            pl.BlockSpec((4, tb * HW), lambda i: (0, 0)),             # masks
            pl.BlockSpec((3, 9, cmid, cmid), lambda i: (0, 0, 0, 0)),  # conv W
            pl.BlockSpec((3, cmid, 1), lambda i: (0, 0, 0)),          # conv b
            pl.BlockSpec((cmid, _DPAD), lambda i: (0, 0)),            # FC W
            pl.BlockSpec((1, _DPAD), lambda i: (0, 0)),               # FC b
        ],
        out_specs=pl.BlockSpec((1, tb, _DPAD), lambda i: (i, 0, 0)),
        compiler_params=pltpu.CompilerParams(
            dimension_semantics=("parallel",)),
    )(x2d, masks, conv_w, conv_b, fcw, fcb)

    return out.reshape(n, _DPAD)[:, :d]


@jax.jit
def siamese_forward(params, img1, img2):
    """Matches SiameseNetwork.forward: shared extractor applied to both images;
    both branches handled by ONE fused pallas_call over the combined batch."""
    b = img1.shape[0]
    feats = _extract_features(params, jnp.concatenate([img1, img2], axis=0))
    return feats[:b], feats[b:]


# ----------------------------------------------------------------------------
# Parameters + pure-JAX reference (numerical self-check)
# ----------------------------------------------------------------------------
def init_params(key, cin=4, cmid=8, output_dim=32):
    ks = jax.random.split(key, 4)

    def w(k, shape, fan_in):
        return jax.random.normal(k, shape, jnp.float32) / jnp.sqrt(float(fan_in))

    return {
        "stem_w": w(ks[0], (3, 3, cin, cmid), 9 * cin),
        "stem_b": jnp.zeros((cmid,), jnp.float32),
        "b1_w": w(ks[1], (3, 3, cmid, cmid), 9 * cmid),
        "b1_b": jnp.zeros((cmid,), jnp.float32),
        "b2_w": w(ks[2], (3, 3, cmid, cmid), 9 * cmid),
        "b2_b": jnp.zeros((cmid,), jnp.float32),
        "fc_w": w(ks[3], (cmid, output_dim), cmid),
        "fc_b": jnp.zeros((output_dim,), jnp.float32),
    }


def _reference_extract(params, img):
    """Plain XLA implementation of the same extractor (correctness check)."""
    x = jnp.transpose(img, (0, 2, 3, 1)).astype(jnp.float32)   # NHWC

    def conv(h, w, b):
        y = jax.lax.conv_general_dilated(
            h, w, window_strides=(1, 1), padding="SAME",
            dimension_numbers=("NHWC", "HWIO", "NHWC"),
            precision=jax.lax.Precision.HIGHEST)
        return y + b

    s = jnp.maximum(conv(x, params["stem_w"], params["stem_b"]), 0.0)
    y1 = jnp.maximum(conv(s, params["b1_w"], params["b1_b"]), 0.0)
    y2 = jnp.maximum(conv(y1, params["b2_w"], params["b2_b"]) + s, 0.0)
    pooled = jnp.mean(y2, axis=(1, 2))
    return pooled @ params["fc_w"] + params["fc_b"]


# ----------------------------------------------------------------------------
if __name__ == "__main__":
    B, CIN, H, W = 2, 4, 16, 16
    OUTPUT_DIM = 32

    key = jax.random.PRNGKey(0)
    k_img1, k_img2, k_params = jax.random.split(key, 3)

    img1 = jax.random.normal(k_img1, (B, CIN, H, W), jnp.float32)
    img2 = jax.random.normal(k_img2, (B, CIN, H, W), jnp.float32)
    params = init_params(k_params, cin=CIN, cmid=8, output_dim=OUTPUT_DIM)

    feat1, feat2 = siamese_forward(params, img1, img2)
    jax.block_until_ready((feat1, feat2))

    assert feat1.shape == (B, OUTPUT_DIM) and feat2.shape == (B, OUTPUT_DIM)
    assert feat1.dtype == jnp.float32 and feat2.dtype == jnp.float32

    # Numerical self-check against the pure-JAX reference of the same network.
    ref1 = _reference_extract(params, img1)
    ref2 = _reference_extract(params, img2)
    err = max(float(jnp.max(jnp.abs(feat1 - ref1))),
              float(jnp.max(jnp.abs(feat2 - ref2))))
    assert err < 5e-2, f"kernel/reference mismatch: max abs err {err}"

    print("KERNEL_OK")
</pallas_src>

<mosaic_0001>
module attributes {stable_mosaic.version = 11 : i64} {
  func.func @_siamese_kernel(%arg0: i32, %arg1: memref<8x512xf32, #tpu.memory_space<vmem>>, %arg2: memref<4x512xf32, #tpu.memory_space<vmem>>, %arg3: memref<3x9x8x8xf32, #tpu.memory_space<vmem>>, %arg4: memref<3x8x1xf32, #tpu.memory_space<vmem>>, %arg5: memref<8x128xf32, #tpu.memory_space<vmem>>, %arg6: memref<1x128xf32, #tpu.memory_space<vmem>>, %arg7: memref<1x2x128xf32, #tpu.memory_space<vmem>>) attributes {dimension_semantics = [#tpu.dimension_semantics<parallel>], iteration_bounds = array<i64: 2>, scalar_prefetch = 0 : i64, scratch_operands = 0 : i64, tpu.core_type = #tpu.core_type<tc>, window_params = [{transform_indices = @transform_0, window_bounds = array<i64: 8, 512>}, {pipeline_mode = #tpu.pipeline_mode<synchronous>, transform_indices = @transform_1, window_bounds = array<i64: 4, 512>}, {pipeline_mode = #tpu.pipeline_mode<synchronous>, transform_indices = @transform_2, window_bounds = array<i64: 3, 9, 8, 8>}, {pipeline_mode = #tpu.pipeline_mode<synchronous>, transform_indices = @transform_3, window_bounds = array<i64: 3, 8, 1>}, {pipeline_mode = #tpu.pipeline_mode<synchronous>, transform_indices = @transform_4, window_bounds = array<i64: 8, 128>}, {pipeline_mode = #tpu.pipeline_mode<synchronous>, transform_indices = @transform_5, window_bounds = array<i64: 1, 128>}, {transform_indices = @transform_6, window_bounds = array<i64: 1, 2, 128>}]} {
    %c0 = arith.constant 0 : index
    %c0_0 = arith.constant 0 : index
    %0 = vector.load %arg2[%c0, %c0_0] : memref<4x512xf32, #tpu.memory_space<vmem>>, vector<1x512xf32>
    %c1 = arith.constant 1 : index
    %c0_1 = arith.constant 0 : index
    %1 = vector.load %arg2[%c1, %c0_1] : memref<4x512xf32, #tpu.memory_space<vmem>>, vector<1x512xf32>
    %c2 = arith.constant 2 : index
    %c0_2 = arith.constant 0 : index
    %2 = vector.load %arg2[%c2, %c0_2] : memref<4x512xf32, #tpu.memory_space<vmem>>, vector<1x512xf32>
    %c3 = arith.constant 3 : index
    %c0_3 = arith.constant 0 : index
    %3 = vector.load %arg2[%c3, %c0_3] : memref<4x512xf32, #tpu.memory_space<vmem>>, vector<1x512xf32>
    %c0_4 = arith.constant 0 : index
    %c0_5 = arith.constant 0 : index
    %4 = vector.load %arg1[%c0_4, %c0_5] : memref<8x512xf32, #tpu.memory_space<vmem>>, vector<8x512xf32>
    %c17_i32 = arith.constant 17 : i32
    %5 = tpu.dynamic_rotate %4 by %c17_i32 dim 1 : vector<8x512xf32>, i32 -> vector<8x512xf32>
    %6 = vector.broadcast %0 : vector<1x512xf32> to vector<8x512xf32>
    %7 = arith.mulf %5, %6 : vector<8x512xf32>
    %8 = vector.broadcast %2 : vector<1x512xf32> to vector<8x512xf32>
    %9 = arith.mulf %7, %8 : vector<8x512xf32>
    %c0_6 = arith.constant 0 : index
    %c0_7 = arith.constant 0 : index
    %c0_8 = arith.constant 0 : index
    %c0_9 = arith.constant 0 : index
    %10 = vector.load %arg3[%c0_6, %c0_7, %c0_8, %c0_9] : memref<3x9x8x8xf32, #tpu.memory_space<vmem>>, vector<1x1x8x8xf32>
    %11 = vector.shape_cast %10 : vector<1x1x8x8xf32> to vector<8x8xf32>
    %cst = arith.constant dense<0.000000e+00> : vector<8x512xf32>
    %12 = tpu.matmul %11, %9, %cst {dimension_numbers = #tpu.dot_dimension_numbers<[1], [0], [0], [1], [0, 0, 1, 1], [], []>} : vector<8x8xf32>, vector<8x512xf32>, vector<8x512xf32> -> vector<8x512xf32>
    %c16_i32 = arith.constant 16 : i32
    %13 = tpu.dynamic_rotate %4 by %c16_i32 dim 1 : vector<8x512xf32>, i32 -> vector<8x512xf32>
    %14 = vector.broadcast %0 : vector<1x512xf32> to vector<8x512xf32>
    %15 = arith.mulf %13, %14 : vector<8x512xf32>
    %c0_10 = arith.constant 0 : index
    %c1_11 = arith.constant 1 : index
    %c0_12 = arith.constant 0 : index
    %c0_13 = arith.constant 0 : index
    %16 = vector.load %arg3[%c0_10, %c1_11, %c0_12, %c0_13] : memref<3x9x8x8xf32, #tpu.memory_space<vmem>>, vector<1x1x8x8xf32>
    %17 = vector.shape_cast %16 : vector<1x1x8x8xf32> to vector<8x8xf32>
    %cst_14 = arith.constant dense<0.000000e+00> : vector<8x512xf32>
    %18 = tpu.matmul %17, %15, %cst_14 {dimension_numbers = #tpu.dot_dimension_numbers<[1], [0], [0], [1], [0, 0, 1, 1], [], []>} : vector<8x8xf32>, vector<8x512xf32>, vector<8x512xf32> -> vector<8x512xf32>
    %19 = arith.addf %12, %18 : vector<8x512xf32>
    %c15_i32 = arith.constant 15 : i32
    %20 = tpu.dynamic_rotate %4 by %c15_i32 dim 1 : vector<8x512xf32>, i32 -> vector<8x512xf32>
    %21 = vector.broadcast %0 : vector<1x512xf32> to vector<8x512xf32>
    %22 = arith.mulf %20, %21 : vector<8x512xf32>
    %23 = vector.broadcast %3 : vector<1x512xf32> to vector<8x512xf32>
    %24 = arith.mulf %22, %23 : vector<8x512xf32>
    %c0_15 = arith.constant 0 : index
    %c2_16 = arith.constant 2 : index
    %c0_17 = arith.constant 0 : index
    %c0_18 = arith.constant 0 : index
    %25 = vector.load %arg3[%c0_15, %c2_16, %c0_17, %c0_18] : memref<3x9x8x8xf32, #tpu.memory_space<vmem>>, vector<1x1x8x8xf32>
    %26 = vector.shape_cast %25 : vector<1x1x8x8xf32> to vector<8x8xf32>
    %cst_19 = arith.constant dense<0.000000e+00> : vector<8x512xf32>
    %27 = tpu.matmul %26, %24, %cst_19 {dimension_numbers = #tpu.dot_dimension_numbers<[1], [0], [0], [1], [0, 0, 1, 1], [], []>} : vector<8x8xf32>, vector<8x512xf32>, vector<8x512xf32> -> vector<8x512xf32>
    %28 = arith.addf %19, %27 : vector<8x512xf32>
    %c1_i32 = arith.constant 1 : i32
    %29 = tpu.dynamic_rotate %4 by %c1_i32 dim 1 : vector<8x512xf32>, i32 -> vector<8x512xf32>
    %30 = vector.broadcast %2 : vector<1x512xf32> to vector<8x512xf32>
    %31 = arith.mulf %29, %30 : vector<8x512xf32>
    %c0_20 = arith.constant 0 : index
    %c3_21 = arith.constant 3 : index
    %c0_22 = arith.constant 0 : index
    %c0_23 = arith.constant 0 : index
    %32 = vector.load %arg3[%c0_20, %c3_21, %c0_22, %c0_23] : memref<3x9x8x8xf32, #tpu.memory_space<vmem>>, vector<1x1x8x8xf32>
    %33 = vector.shape_cast %32 : vector<1x1x8x8xf32> to vector<8x8xf32>
    %cst_24 = arith.constant dense<0.000000e+00> : vector<8x512xf32>
    %34 = tpu.matmul %33, %31, %cst_24 {dimension_numbers = #tpu.dot_dimension_numbers<[1], [0], [0], [1], [0, 0, 1, 1], [], []>} : vector<8x8xf32>, vector<8x512xf32>, vector<8x512xf32> -> vector<8x512xf32>
    %35 = arith.addf %28, %34 : vector<8x512xf32>
    %c0_25 = arith.constant 0 : index
    %c4 = arith.constant 4 : index
    %c0_26 = arith.constant 0 : index
    %c0_27 = arith.constant 0 : index
    %36 = vector.load %arg3[%c0_25, %c4, %c0_26, %c0_27] : memref<3x9x8x8xf32, #tpu.memory_space<vmem>>, vector<1x1x8x8xf32>
    %37 = vector.shape_cast %36 : vector<1x1x8x8xf32> to vector<8x8xf32>
    %cst_28 = arith.constant dense<0.000000e+00> : vector<8x512xf32>
    %38 = tpu.matmul %37, %4, %cst_28 {dimension_numbers = #tpu.dot_dimension_numbers<[1], [0], [0], [1], [0, 0, 1, 1], [], []>} : vector<8x8xf32>, vector<8x512xf32>, vector<8x512xf32> -> vector<8x512xf32>
    %39 = arith.addf %35, %38 : vector<8x512xf32>
    %c511_i32 = arith.constant 511 : i32
    %40 = tpu.dynamic_rotate %4 by %c511_i32 dim 1 : vector<8x512xf32>, i32 -> vector<8x512xf32>
    %41 = vector.broadcast %3 : vector<1x512xf32> to vector<8x512xf32>
    %42 = arith.mulf %40, %41 : vector<8x512xf32>
    %c0_29 = arith.constant 0 : index
    %c5 = arith.constant 5 : index
    %c0_30 = arith.constant 0 : index
    %c0_31 = arith.constant 0 : index
    %43 = vector.load %arg3[%c0_29, %c5, %c0_30, %c0_31] : memref<3x9x8x8xf32, #tpu.memory_space<vmem>>, vector<1x1x8x8xf32>
    %44 = vector.shape_cast %43 : vector<1x1x8x8xf32> to vector<8x8xf32>
    %cst_32 = arith.constant dense<0.000000e+00> : vector<8x512xf32>
    %45 = tpu.matmul %44, %42, %cst_32 {dimension_numbers = #tpu.dot_dimension_numbers<[1], [0], [0], [1], [0, 0, 1, 1], [], []>} : vector<8x8xf32>, vector<8x512xf32>, vector<8x512xf32> -> vector<8x512xf32>
    %46 = arith.addf %39, %45 : vector<8x512xf32>
    %c497_i32 = arith.constant 497 : i32
    %47 = tpu.dynamic_rotate %4 by %c497_i32 dim 1 : vector<8x512xf32>, i32 -> vector<8x512xf32>
    %48 = vector.broadcast %1 : vector<1x512xf32> to vector<8x512xf32>
    %49 = arith.mulf %47, %48 : vector<8x512xf32>
    %50 = vector.broadcast %2 : vector<1x512xf32> to vector<8x512xf32>
    %51 = arith.mulf %49, %50 : vector<8x512xf32>
    %c0_33 = arith.constant 0 : index
    %c6 = arith.constant 6 : index
    %c0_34 = arith.constant 0 : index
    %c0_35 = arith.constant 0 : index
    %52 = vector.load %arg3[%c0_33, %c6, %c0_34, %c0_35] : memref<3x9x8x8xf32, #tpu.memory_space<vmem>>, vector<1x1x8x8xf32>
    %53 = vector.shape_cast %52 : vector<1x1x8x8xf32> to vector<8x8xf32>
    %cst_36 = arith.constant dense<0.000000e+00> : vector<8x512xf32>
    %54 = tpu.matmul %53, %51, %cst_36 {dimension_numbers = #tpu.dot_dimension_numbers<[1], [0], [0], [1], [0, 0, 1, 1], [], []>} : vector<8x8xf32>, vector<8x512xf32>, vector<8x512xf32> -> vector<8x512xf32>
    %55 = arith.addf %46, %54 : vector<8x512xf32>
    %c496_i32 = arith.constant 496 : i32
    %56 = tpu.dynamic_rotate %4 by %c496_i32 dim 1 : vector<8x512xf32>, i32 -> vector<8x512xf32>
    %57 = vector.broadcast %1 : vector<1x512xf32> to vector<8x512xf32>
    %58 = arith.mulf %56, %57 : vector<8x512xf32>
    %c0_37 = arith.constant 0 : index
    %c7 = arith.constant 7 : index
    %c0_38 = arith.constant 0 : index
    %c0_39 = arith.constant 0 : index
    %59 = vector.load %arg3[%c0_37, %c7, %c0_38, %c0_39] : memref<3x9x8x8xf32, #tpu.memory_space<vmem>>, vector<1x1x8x8xf32>
    %60 = vector.shape_cast %59 : vector<1x1x8x8xf32> to vector<8x8xf32>
    %cst_40 = arith.constant dense<0.000000e+00> : vector<8x512xf32>
    %61 = tpu.matmul %60, %58, %cst_40 {dimension_numbers = #tpu.dot_dimension_numbers<[1], [0], [0], [1], [0, 0, 1, 1], [], []>} : vector<8x8xf32>, vector<8x512xf32>, vector<8x512xf32> -> vector<8x512xf32>
    %62 = arith.addf %55, %61 : vector<8x512xf32>
    %c495_i32 = arith.constant 495 : i32
    %63 = tpu.dynamic_rotate %4 by %c495_i32 dim 1 : vector<8x512xf32>, i32 -> vector<8x512xf32>
    %64 = vector.broadcast %1 : vector<1x512xf32> to vector<8x512xf32>
    %65 = arith.mulf %63, %64 : vector<8x512xf32>
    %66 = vector.broadcast %3 : vector<1x512xf32> to vector<8x512xf32>
    %67 = arith.mulf %65, %66 : vector<8x512xf32>
    %c0_41 = arith.constant 0 : index
    %c8 = arith.constant 8 : index
    %c0_42 = arith.constant 0 : index
    %c0_43 = arith.constant 0 : index
    %68 = vector.load %arg3[%c0_41, %c8, %c0_42, %c0_43] : memref<3x9x8x8xf32, #tpu.memory_space<vmem>>, vector<1x1x8x8xf32>
    %69 = vector.shape_cast %68 : vector<1x1x8x8xf32> to vector<8x8xf32>
    %cst_44 = arith.constant dense<0.000000e+00> : vector<8x512xf32>
    %70 = tpu.matmul %69, %67, %cst_44 {dimension_numbers = #tpu.dot_dimension_numbers<[1], [0], [0], [1], [0, 0, 1, 1], [], []>} : vector<8x8xf32>, vector<8x512xf32>, vector<8x512xf32> -> vector<8x512xf32>
    %71 = arith.addf %62, %70 : vector<8x512xf32>
    %c0_45 = arith.constant 0 : index
    %c0_46 = arith.constant 0 : index
    %c0_47 = arith.constant 0 : index
    %72 = vector.load %arg4[%c0_45, %c0_46, %c0_47] : memref<3x8x1xf32, #tpu.memory_space<vmem>>, vector<1x8x1xf32>
    %73 = vector.shape_cast %72 : vector<1x8x1xf32> to vector<8x1xf32>
    %74 = vector.broadcast %73 : vector<8x1xf32> to vector<8x512xf32>
    %75 = arith.addf %71, %74 : vector<8x512xf32>
    %cst_48 = arith.constant 0.000000e+00 : f32
    %76 = vector.broadcast %cst_48 : f32 to vector<8x512xf32>
    %77 = arith.maximumf %75, %76 : vector<8x512xf32>
    %c17_i32_49 = arith.constant 17 : i32
    %78 = tpu.dynamic_rotate %77 by %c17_i32_49 dim 1 : vector<8x512xf32>, i32 -> vector<8x512xf32>
    %79 = vector.broadcast %0 : vector<1x512xf32> to vector<8x512xf32>
    %80 = arith.mulf %78, %79 : vector<8x512xf32>
    %81 = vector.broadcast %2 : vector<1x512xf32> to vector<8x512xf32>
    %82 = arith.mulf %80, %81 : vector<8x512xf32>
    %c1_50 = arith.constant 1 : index
    %c0_51 = arith.constant 0 : index
    %c0_52 = arith.constant 0 : index
    %c0_53 = arith.constant 0 : index
    %83 = vector.load %arg3[%c1_50, %c0_51, %c0_52, %c0_53] : memref<3x9x8x8xf32, #tpu.memory_space<vmem>>, vector<1x1x8x8xf32>
    %84 = vector.shape_cast %83 : vector<1x1x8x8xf32> to vector<8x8xf32>
    %cst_54 = arith.constant dense<0.000000e+00> : vector<8x512xf32>
    %85 = tpu.matmul %84, %82, %cst_54 {dimension_numbers = #tpu.dot_dimension_numbers<[1], [0], [0], [1], [0, 0, 1, 1], [], []>} : vector<8x8xf32>, vector<8x512xf32>, vector<8x512xf32> -> vector<8x512xf32>
    %c16_i32_55 = arith.constant 16 : i32
    %86 = tpu.dynamic_rotate %77 by %c16_i32_55 dim 1 : vector<8x512xf32>, i32 -> vector<8x512xf32>
    %87 = vector.broadcast %0 : vector<1x512xf32> to vector<8x512xf32>
    %88 = arith.mulf %86, %87 : vector<8x512xf32>
    %c1_56 = arith.constant 1 : index
    %c1_57 = arith.constant 1 : index
    %c0_58 = arith.constant 0 : index
    %c0_59 = arith.constant 0 : index
    %89 = vector.load %arg3[%c1_56, %c1_57, %c0_58, %c0_59] : memref<3x9x8x8xf32, #tpu.memory_space<vmem>>, vector<1x1x8x8xf32>
    %90 = vector.shape_cast %89 : vector<1x1x8x8xf32> to vector<8x8xf32>
    %cst_60 = arith.constant dense<0.000000e+00> : vector<8x512xf32>
    %91 = tpu.matmul %90, %88, %cst_60 {dimension_numbers = #tpu.dot_dimension_numbers<[1], [0], [0], [1], [0, 0, 1, 1], [], []>} : vector<8x8xf32>, vector<8x512xf32>, vector<8x512xf32> -> vector<8x512xf32>
    %92 = arith.addf %85, %91 : vector<8x512xf32>
    %c15_i32_61 = arith.constant 15 : i32
    %93 = tpu.dynamic_rotate %77 by %c15_i32_61 dim 1 : vector<8x512xf32>, i32 -> vector<8x512xf32>
    %94 = vector.broadcast %0 : vector<1x512xf32> to vector<8x512xf32>
    %95 = arith.mulf %93, %94 : vector<8x512xf32>
    %96 = vector.broadcast %3 : vector<1x512xf32> to vector<8x512xf32>
    %97 = arith.mulf %95, %96 : vector<8x512xf32>
    %c1_62 = arith.constant 1 : index
    %c2_63 = arith.constant 2 : index
    %c0_64 = arith.constant 0 : index
    %c0_65 = arith.constant 0 : index
    %98 = vector.load %arg3[%c1_62, %c2_63, %c0_64, %c0_65] : memref<3x9x8x8xf32, #tpu.memory_space<vmem>>, vector<1x1x8x8xf32>
    %99 = vector.shape_cast %98 : vector<1x1x8x8xf32> to vector<8x8xf32>
    %cst_66 = arith.constant dense<0.000000e+00> : vector<8x512xf32>
    %100 = tpu.matmul %99, %97, %cst_66 {dimension_numbers = #tpu.dot_dimension_numbers<[1], [0], [0], [1], [0, 0, 1, 1], [], []>} : vector<8x8xf32>, vector<8x512xf32>, vector<8x512xf32> -> vector<8x512xf32>
    %101 = arith.addf %92, %100 : vector<8x512xf32>
    %c1_i32_67 = arith.constant 1 : i32
    %102 = tpu.dynamic_rotate %77 by %c1_i32_67 dim 1 : vector<8x512xf32>, i32 -> vector<8x512xf32>
    %103 = vector.broadcast %2 : vector<1x512xf32> to vector<8x512xf32>
    %104 = arith.mulf %102, %103 : vector<8x512xf32>
    %c1_68 = arith.constant 1 : index
    %c3_69 = arith.constant 3 : index
    %c0_70 = arith.constant 0 : index
    %c0_71 = arith.constant 0 : index
    %105 = vector.load %arg3[%c1_68, %c3_69, %c0_70, %c0_71] : memref<3x9x8x8xf32, #tpu.memory_space<vmem>>, vector<1x1x8x8xf32>
    %106 = vector.shape_cast %105 : vector<1x1x8x8xf32> to vector<8x8xf32>
    %cst_72 = arith.constant dense<0.000000e+00> : vector<8x512xf32>
    %107 = tpu.matmul %106, %104, %cst_72 {dimension_numbers = #tpu.dot_dimension_numbers<[1], [0], [0], [1], [0, 0, 1, 1], [], []>} : vector<8x8xf32>, vector<8x512xf32>, vector<8x512xf32> -> vector<8x512xf32>
    %108 = arith.addf %101, %107 : vector<8x512xf32>
    %c1_73 = arith.constant 1 : index
    %c4_74 = arith.constant 4 : index
    %c0_75 = arith.constant 0 : index
    %c0_76 = arith.constant 0 : index
    %109 = vector.load %arg3[%c1_73, %c4_74, %c0_75, %c0_76] : memref<3x9x8x8xf32, #tpu.memory_space<vmem>>, vector<1x1x8x8xf32>
    %110 = vector.shape_cast %109 : vector<1x1x8x8xf32> to vector<8x8xf32>
    %cst_77 = arith.constant dense<0.000000e+00> : vector<8x512xf32>
    %111 = tpu.matmul %110, %77, %cst_77 {dimension_numbers = #tpu.dot_dimension_numbers<[1], [0], [0], [1], [0, 0, 1, 1], [], []>} : vector<8x8xf32>, vector<8x512xf32>, vector<8x512xf32> -> vector<8x512xf32>
    %112 = arith.addf %108, %111 : vector<8x512xf32>
    %c511_i32_78 = arith.constant 511 : i32
    %113 = tpu.dynamic_rotate %77 by %c511_i32_78 dim 1 : vector<8x512xf32>, i32 -> vector<8x512xf32>
    %114 = vector.broadcast %3 : vector<1x512xf32> to vector<8x512xf32>
    %115 = arith.mulf %113, %114 : vector<8x512xf32>
    %c1_79 = arith.constant 1 : index
    %c5_80 = arith.constant 5 : index
    %c0_81 = arith.constant 0 : index
    %c0_82 = arith.constant 0 : index
    %116 = vector.load %arg3[%c1_79, %c5_80, %c0_81, %c0_82] : memref<3x9x8x8xf32, #tpu.memory_space<vmem>>, vector<1x1x8x8xf32>
    %117 = vector.shape_cast %116 : vector<1x1x8x8xf32> to vector<8x8xf32>
    %cst_83 = arith.constant dense<0.000000e+00> : vector<8x512xf32>
    %118 = tpu.matmul %117, %115, %cst_83 {dimension_numbers = #tpu.dot_dimension_numbers<[1], [0], [0], [1], [0, 0, 1, 1], [], []>} : vector<8x8xf32>, vector<8x512xf32>, vector<8x512xf32> -> vector<8x512xf32>
    %119 = arith.addf %112, %118 : vector<8x512xf32>
    %c497_i32_84 = arith.constant 497 : i32
    %120 = tpu.dynamic_rotate %77 by %c497_i32_84 dim 1 : vector<8x512xf32>, i32 -> vector<8x512xf32>
    %121 = vector.broadcast %1 : vector<1x512xf32> to vector<8x512xf32>
    %122 = arith.mulf %120, %121 : vector<8x512xf32>
    %123 = vector.broadcast %2 : vector<1x512xf32> to vector<8x512xf32>
    %124 = arith.mulf %122, %123 : vector<8x512xf32>
    %c1_85 = arith.constant 1 : index
    %c6_86 = arith.constant 6 : index
    %c0_87 = arith.constant 0 : index
    %c0_88 = arith.constant 0 : index
    %125 = vector.load %arg3[%c1_85, %c6_86, %c0_87, %c0_88] : memref<3x9x8x8xf32, #tpu.memory_space<vmem>>, vector<1x1x8x8xf32>
    %126 = vector.shape_cast %125 : vector<1x1x8x8xf32> to vector<8x8xf32>
    %cst_89 = arith.constant dense<0.000000e+00> : vector<8x512xf32>
    %127 = tpu.matmul %126, %124, %cst_89 {dimension_numbers = #tpu.dot_dimension_numbers<[1], [0], [0], [1], [0, 0, 1, 1], [], []>} : vector<8x8xf32>, vector<8x512xf32>, vector<8x512xf32> -> vector<8x512xf32>
    %128 = arith.addf %119, %127 : vector<8x512xf32>
    %c496_i32_90 = arith.constant 496 : i32
    %129 = tpu.dynamic_rotate %77 by %c496_i32_90 dim 1 : vector<8x512xf32>, i32 -> vector<8x512xf32>
    %130 = vector.broadcast %1 : vector<1x512xf32> to vector<8x512xf32>
    %131 = arith.mulf %129, %130 : vector<8x512xf32>
    %c1_91 = arith.constant 1 : index
    %c7_92 = arith.constant 7 : index
    %c0_93 = arith.constant 0 : index
    %c0_94 = arith.constant 0 : index
    %132 = vector.load %arg3[%c1_91, %c7_92, %c0_93, %c0_94] : memref<3x9x8x8xf32, #tpu.memory_space<vmem>>, vector<1x1x8x8xf32>
    %133 = vector.shape_cast %132 : vector<1x1x8x8xf32> to vector<8x8xf32>
    %cst_95 = arith.constant dense<0.000000e+00> : vector<8x512xf32>
    %134 = tpu.matmul %133, %131, %cst_95 {dimension_numbers = #tpu.dot_dimension_numbers<[1], [0], [0], [1], [0, 0, 1, 1], [], []>} : vector<8x8xf32>, vector<8x512xf32>, vector<8x512xf32> -> vector<8x512xf32>
    %135 = arith.addf %128, %134 : vector<8x512xf32>
    %c495_i32_96 = arith.constant 495 : i32
    %136 = tpu.dynamic_rotate %77 by %c495_i32_96 dim 1 : vector<8x512xf32>, i32 -> vector<8x512xf32>
    %137 = vector.broadcast %1 : vector<1x512xf32> to vector<8x512xf32>
    %138 = arith.mulf %136, %137 : vector<8x512xf32>
    %139 = vector.broadcast %3 : vector<1x512xf32> to vector<8x512xf32>
    %140 = arith.mulf %138, %139 : vector<8x512xf32>
    %c1_97 = arith.constant 1 : index
    %c8_98 = arith.constant 8 : index
    %c0_99 = arith.constant 0 : index
    %c0_100 = arith.constant 0 : index
    %141 = vector.load %arg3[%c1_97, %c8_98, %c0_99, %c0_100] : memref<3x9x8x8xf32, #tpu.memory_space<vmem>>, vector<1x1x8x8xf32>
    %142 = vector.shape_cast %141 : vector<1x1x8x8xf32> to vector<8x8xf32>
    %cst_101 = arith.constant dense<0.000000e+00> : vector<8x512xf32>
    %143 = tpu.matmul %142, %140, %cst_101 {dimension_numbers = #tpu.dot_dimension_numbers<[1], [0], [0], [1], [0, 0, 1, 1], [], []>} : vector<8x8xf32>, vector<8x512xf32>, vector<8x512xf32> -> vector<8x512xf32>
    %144 = arith.addf %135, %143 : vector<8x512xf32>
    %c1_102 = arith.constant 1 : index
    %c0_103 = arith.constant 0 : index
    %c0_104 = arith.constant 0 : index
    %145 = vector.load %arg4[%c1_102, %c0_103, %c0_104] : memref<3x8x1xf32, #tpu.memory_space<vmem>>, vector<1x8x1xf32>
    %146 = vector.shape_cast %145 : vector<1x8x1xf32> to vector<8x1xf32>
    %147 = vector.broadcast %146 : vector<8x1xf32> to vector<8x512xf32>
    %148 = arith.addf %144, %147 : vector<8x512xf32>
    %cst_105 = arith.constant 0.000000e+00 : f32
    %149 = vector.broadcast %cst_105 : f32 to vector<8x512xf32>
    %150 = arith.maximumf %148, %149 : vector<8x512xf32>
    %c17_i32_106 = arith.constant 17 : i32
    %151 = tpu.dynamic_rotate %150 by %c17_i32_106 dim 1 : vector<8x512xf32>, i32 -> vector<8x512xf32>
    %152 = vector.broadcast %0 : vector<1x512xf32> to vector<8x512xf32>
    %153 = arith.mulf %151, %152 : vector<8x512xf32>
    %154 = vector.broadcast %2 : vector<1x512xf32> to vector<8x512xf32>
    %155 = arith.mulf %153, %154 : vector<8x512xf32>
    %c2_107 = arith.constant 2 : index
    %c0_108 = arith.constant 0 : index
    %c0_109 = arith.constant 0 : index
    %c0_110 = arith.constant 0 : index
    %156 = vector.load %arg3[%c2_107, %c0_108, %c0_109, %c0_110] : memref<3x9x8x8xf32, #tpu.memory_space<vmem>>, vector<1x1x8x8xf32>
    %157 = vector.shape_cast %156 : vector<1x1x8x8xf32> to vector<8x8xf32>
    %cst_111 = arith.constant dense<0.000000e+00> : vector<8x512xf32>
    %158 = tpu.matmul %157, %155, %cst_111 {dimension_numbers = #tpu.dot_dimension_numbers<[1], [0], [0], [1], [0, 0, 1, 1], [], []>} : vector<8x8xf32>, vector<8x512xf32>, vector<8x512xf32> -> vector<8x512xf32>
    %c16_i32_112 = arith.constant 16 : i32
    %159 = tpu.dynamic_rotate %150 by %c16_i32_112 dim 1 : vector<8x512xf32>, i32 -> vector<8x512xf32>
    %160 = vector.broadcast %0 : vector<1x512xf32> to vector<8x512xf32>
    %161 = arith.mulf %159, %160 : vector<8x512xf32>
    %c2_113 = arith.constant 2 : index
    %c1_114 = arith.constant 1 : index
    %c0_115 = arith.constant 0 : index
    %c0_116 = arith.constant 0 : index
    %162 = vector.load %arg3[%c2_113, %c1_114, %c0_115, %c0_116] : memref<3x9x8x8xf32, #tpu.memory_space<vmem>>, vector<1x1x8x8xf32>
    %163 = vector.shape_cast %162 : vector<1x1x8x8xf32> to vector<8x8xf32>
    %cst_117 = arith.constant dense<0.000000e+00> : vector<8x512xf32>
    %164 = tpu.matmul %163, %161, %cst_117 {dimension_numbers = #tpu.dot_dimension_numbers<[1], [0], [0], [1], [0, 0, 1, 1], [], []>} : vector<8x8xf32>, vector<8x512xf32>, vector<8x512xf32> -> vector<8x512xf32>
    %165 = arith.addf %158, %164 : vector<8x512xf32>
    %c15_i32_118 = arith.constant 15 : i32
    %166 = tpu.dynamic_rotate %150 by %c15_i32_118 dim 1 : vector<8x512xf32>, i32 -> vector<8x512xf32>
    %167 = vector.broadcast %0 : vector<1x512xf32> to vector<8x512xf32>
    %168 = arith.mulf %166, %167 : vector<8x512xf32>
    %169 = vector.broadcast %3 : vector<1x512xf32> to vector<8x512xf32>
    %170 = arith.mulf %168, %169 : vector<8x512xf32>
    %c2_119 = arith.constant 2 : index
    %c2_120 = arith.constant 2 : index
    %c0_121 = arith.constant 0 : index
    %c0_122 = arith.constant 0 : index
    %171 = vector.load %arg3[%c2_119, %c2_120, %c0_121, %c0_122] : memref<3x9x8x8xf32, #tpu.memory_space<vmem>>, vector<1x1x8x8xf32>
    %172 = vector.shape_cast %171 : vector<1x1x8x8xf32> to vector<8x8xf32>
    %cst_123 = arith.constant dense<0.000000e+00> : vector<8x512xf32>
    %173 = tpu.matmul %172, %170, %cst_123 {dimension_numbers = #tpu.dot_dimension_numbers<[1], [0], [0], [1], [0, 0, 1, 1], [], []>} : vector<8x8xf32>, vector<8x512xf32>, vector<8x512xf32> -> vector<8x512xf32>
    %174 = arith.addf %165, %173 : vector<8x512xf32>
    %c1_i32_124 = arith.constant 1 : i32
    %175 = tpu.dynamic_rotate %150 by %c1_i32_124 dim 1 : vector<8x512xf32>, i32 -> vector<8x512xf32>
    %176 = vector.broadcast %2 : vector<1x512xf32> to vector<8x512xf32>
    %177 = arith.mulf %175, %176 : vector<8x512xf32>
    %c2_125 = arith.constant 2 : index
    %c3_126 = arith.constant 3 : index
    %c0_127 = arith.constant 0 : index
    %c0_128 = arith.constant 0 : index
    %178 = vector.load %arg3[%c2_125, %c3_126, %c0_127, %c0_128] : memref<3x9x8x8xf32, #tpu.memory_space<vmem>>, vector<1x1x8x8xf32>
    %179 = vector.shape_cast %178 : vector<1x1x8x8xf32> to vector<8x8xf32>
    %cst_129 = arith.constant dense<0.000000e+00> : vector<8x512xf32>
    %180 = tpu.matmul %179, %177, %cst_129 {dimension_numbers = #tpu.dot_dimension_numbers<[1], [0], [0], [1], [0, 0, 1, 1], [], []>} : vector<8x8xf32>, vector<8x512xf32>, vector<8x512xf32> -> vector<8x512xf32>
    %181 = arith.addf %174, %180 : vector<8x512xf32>
    %c2_130 = arith.constant 2 : index
    %c4_131 = arith.constant 4 : index
    %c0_132 = arith.constant 0 : index
    %c0_133 = arith.constant 0 : index
    %182 = vector.load %arg3[%c2_130, %c4_131, %c0_132, %c0_133] : memref<3x9x8x8xf32, #tpu.memory_space<vmem>>, vector<1x1x8x8xf32>
    %183 = vector.shape_cast %182 : vector<1x1x8x8xf32> to vector<8x8xf32>
    %cst_134 = arith.constant dense<0.000000e+00> : vector<8x512xf32>
    %184 = tpu.matmul %183, %150, %cst_134 {dimension_numbers = #tpu.dot_dimension_numbers<[1], [0], [0], [1], [0, 0, 1, 1], [], []>} : vector<8x8xf32>, vector<8x512xf32>, vector<8x512xf32> -> vector<8x512xf32>
    %185 = arith.addf %181, %184 : vector<8x512xf32>
    %c511_i32_135 = arith.constant 511 : i32
    %186 = tpu.dynamic_rotate %150 by %c511_i32_135 dim 1 : vector<8x512xf32>, i32 -> vector<8x512xf32>
    %187 = vector.broadcast %3 : vector<1x512xf32> to vector<8x512xf32>
    %188 = arith.mulf %186, %187 : vector<8x512xf32>
    %c2_136 = arith.constant 2 : index
    %c5_137 = arith.constant 5 : index
    %c0_138 = arith.constant 0 : index
    %c0_139 = arith.constant 0 : index
    %189 = vector.load %arg3[%c2_136, %c5_137, %c0_138, %c0_139] : memref<3x9x8x8xf32, #tpu.memory_space<vmem>>, vector<1x1x8x8xf32>
    %190 = vector.shape_cast %189 : vector<1x1x8x8xf32> to vector<8x8xf32>
    %cst_140 = arith.constant dense<0.000000e+00> : vector<8x512xf32>
    %191 = tpu.matmul %190, %188, %cst_140 {dimension_numbers = #tpu.dot_dimension_numbers<[1], [0], [0], [1], [0, 0, 1, 1], [], []>} : vector<8x8xf32>, vector<8x512xf32>, vector<8x512xf32> -> vector<8x512xf32>
    %192 = arith.addf %185, %191 : vector<8x512xf32>
    %c497_i32_141 = arith.constant 497 : i32
    %193 = tpu.dynamic_rotate %150 by %c497_i32_141 dim 1 : vector<8x512xf32>, i32 -> vector<8x512xf32>
    %194 = vector.broadcast %1 : vector<1x512xf32> to vector<8x512xf32>
    %195 = arith.mulf %193, %194 : vector<8x512xf32>
    %196 = vector.broadcast %2 : vector<1x512xf32> to vector<8x512xf32>
    %197 = arith.mulf %195, %196 : vector<8x512xf32>
    %c2_142 = arith.constant 2 : index
    %c6_143 = arith.constant 6 : index
    %c0_144 = arith.constant 0 : index
    %c0_145 = arith.constant 0 : index
    %198 = vector.load %arg3[%c2_142, %c6_143, %c0_144, %c0_145] : memref<3x9x8x8xf32, #tpu.memory_space<vmem>>, vector<1x1x8x8xf32>
    %199 = vector.shape_cast %198 : vector<1x1x8x8xf32> to vector<8x8xf32>
    %cst_146 = arith.constant dense<0.000000e+00> : vector<8x512xf32>
    %200 = tpu.matmul %199, %197, %cst_146 {dimension_numbers = #tpu.dot_dimension_numbers<[1], [0], [0], [1], [0, 0, 1, 1], [], []>} : vector<8x8xf32>, vector<8x512xf32>, vector<8x512xf32> -> vector<8x512xf32>
    %201 = arith.addf %192, %200 : vector<8x512xf32>
    %c496_i32_147 = arith.constant 496 : i32
    %202 = tpu.dynamic_rotate %150 by %c496_i32_147 dim 1 : vector<8x512xf32>, i32 -> vector<8x512xf32>
    %203 = vector.broadcast %1 : vector<1x512xf32> to vector<8x512xf32>
    %204 = arith.mulf %202, %203 : vector<8x512xf32>
    %c2_148 = arith.constant 2 : index
    %c7_149 = arith.constant 7 : index
    %c0_150 = arith.constant 0 : index
    %c0_151 = arith.constant 0 : index
    %205 = vector.load %arg3[%c2_148, %c7_149, %c0_150, %c0_151] : memref<3x9x8x8xf32, #tpu.memory_space<vmem>>, vector<1x1x8x8xf32>
    %206 = vector.shape_cast %205 : vector<1x1x8x8xf32> to vector<8x8xf32>
    %cst_152 = arith.constant dense<0.000000e+00> : vector<8x512xf32>
    %207 = tpu.matmul %206, %204, %cst_152 {dimension_numbers = #tpu.dot_dimension_numbers<[1], [0], [0], [1], [0, 0, 1, 1], [], []>} : vector<8x8xf32>, vector<8x512xf32>, vector<8x512xf32> -> vector<8x512xf32>
    %208 = arith.addf %201, %207 : vector<8x512xf32>
    %c495_i32_153 = arith.constant 495 : i32
    %209 = tpu.dynamic_rotate %150 by %c495_i32_153 dim 1 : vector<8x512xf32>, i32 -> vector<8x512xf32>
    %210 = vector.broadcast %1 : vector<1x512xf32> to vector<8x512xf32>
    %211 = arith.mulf %209, %210 : vector<8x512xf32>
    %212 = vector.broadcast %3 : vector<1x512xf32> to vector<8x512xf32>
    %213 = arith.mulf %211, %212 : vector<8x512xf32>
    %c2_154 = arith.constant 2 : index
    %c8_155 = arith.constant 8 : index
    %c0_156 = arith.constant 0 : index
    %c0_157 = arith.constant 0 : index
    %214 = vector.load %arg3[%c2_154, %c8_155, %c0_156, %c0_157] : memref<3x9x8x8xf32, #tpu.memory_space<vmem>>, vector<1x1x8x8xf32>
    %215 = vector.shape_cast %214 : vector<1x1x8x8xf32> to vector<8x8xf32>
    %cst_158 = arith.constant dense<0.000000e+00> : vector<8x512xf32>
    %216 = tpu.matmul %215, %213, %cst_158 {dimension_numbers = #tpu.dot_dimension_numbers<[1], [0], [0], [1], [0, 0, 1, 1], [], []>} : vector<8x8xf32>, vector<8x512xf32>, vector<8x512xf32> -> vector<8x512xf32>
    %217 = arith.addf %208, %216 : vector<8x512xf32>
    %c2_159 = arith.constant 2 : index
    %c0_160 = arith.constant 0 : index
    %c0_161 = arith.constant 0 : index
    %218 = vector.load %arg4[%c2_159, %c0_160, %c0_161] : memref<3x8x1xf32, #tpu.memory_space<vmem>>, vector<1x8x1xf32>
    %219 = vector.shape_cast %218 : vector<1x8x1xf32> to vector<8x1xf32>
    %220 = vector.broadcast %219 : vector<8x1xf32> to vector<8x512xf32>
    %221 = arith.addf %217, %220 : vector<8x512xf32>
    %222 = arith.addf %221, %77 : vector<8x512xf32>
    %cst_162 = arith.constant 0.000000e+00 : f32
    %223 = vector.broadcast %cst_162 : f32 to vector<8x512xf32>
    %224 = arith.maximumf %222, %223 : vector<8x512xf32>
    %c0_163 = arith.constant 0 : index
    %c0_164 = arith.constant 0 : index
    %225 = vector.load %arg5[%c0_163, %c0_164] : memref<8x128xf32, #tpu.memory_space<vmem>>, vector<8x128xf32>
    %c0_165 = arith.constant 0 : index
    %c0_166 = arith.constant 0 : index
    %226 = vector.load %arg6[%c0_165, %c0_166] : memref<1x128xf32, #tpu.memory_space<vmem>>, vector<1x128xf32>
    %227 = vector.extract_strided_slice %224 {offsets = [0, 0], sizes = [8, 256], strides = [1, 1]} : vector<8x512xf32> to vector<8x256xf32>
    %cst_167 = arith.constant dense<0.000000e+00> : vector<8xf32>
    %228 = vector.multi_reduction <add>, %227, %cst_167 [1] : vector<8x256xf32> to vector<8xf32>
    %229 = vector.shape_cast %228 : vector<8xf32> to vector<8x1xf32>
    %cst_168 = arith.constant 3.906250e-03 : f32
    %230 = vector.broadcast %cst_168 : f32 to vector<8x1xf32>
    %231 = arith.mulf %229, %230 : vector<8x1xf32>
    %232 = vector.broadcast %231 : vector<8x1xf32> to vector<8x128xf32>
    %233 = arith.mulf %225, %232 : vector<8x128xf32>
    %cst_169 = arith.constant dense<0.000000e+00> : vector<128xf32>
    %234 = vector.multi_reduction <add>, %233, %cst_169 [0] : vector<8x128xf32> to vector<128xf32>
    %235 = vector.shape_cast %234 : vector<128xf32> to vector<1x128xf32>
    %236 = arith.addf %235, %226 : vector<1x128xf32>
    %237 = vector.extract_strided_slice %224 {offsets = [0, 256], sizes = [8, 256], strides = [1, 1]} : vector<8x512xf32> to vector<8x256xf32>
    %cst_170 = arith.constant dense<0.000000e+00> : vector<8xf32>
    %238 = vector.multi_reduction <add>, %237, %cst_170 [1] : vector<8x256xf32> to vector<8xf32>
    %239 = vector.shape_cast %238 : vector<8xf32> to vector<8x1xf32>
    %cst_171 = arith.constant 3.906250e-03 : f32
    %240 = vector.broadcast %cst_171 : f32 to vector<8x1xf32>
    %241 = arith.mulf %239, %240 : vector<8x1xf32>
    %242 = vector.broadcast %241 : vector<8x1xf32> to vector<8x128xf32>
    %243 = arith.mulf %225, %242 : vector<8x128xf32>
    %cst_172 = arith.constant dense<0.000000e+00> : vector<128xf32>
    %244 = vector.multi_reduction <add>, %243, %cst_172 [0] : vector<8x128xf32> to vector<128xf32>
    %245 = vector.shape_cast %244 : vector<128xf32> to vector<1x128xf32>
    %246 = arith.addf %245, %226 : vector<1x128xf32>
    %247 = tpu.concatenate %236, %246 in 0 : vector<1x128xf32>, vector<1x128xf32> -> vector<2x128xf32>
    %c0_173 = arith.constant 0 : index
    %c0_174 = arith.constant 0 : index
    %c0_175 = arith.constant 0 : index
    %248 = vector.load %arg7[%c0_173, %c0_174, %c0_175] : memref<1x2x128xf32, #tpu.memory_space<vmem>>, vector<1x2x128xf32>
    %249 = vector.shape_cast %248 : vector<1x2x128xf32> to vector<2x128xf32>
    %250 = vector.shape_cast %247 : vector<2x128xf32> to vector<1x2x128xf32>
    tpu.vector_store %arg7[%c0_173, %c0_174, %c0_175], %250 {strides = array<i32>} : memref<1x2x128xf32, #tpu.memory_space<vmem>>, vector<1x2x128xf32>,
    return
  }
  func.func @transform_0(%arg0: i32) -> (i32, i32) {
    %c0_i32 = arith.constant 0 : i32
    %c0_i32_0 = arith.constant 0 : i32
    return %c0_i32, %arg0 : i32, i32
  }
  func.func @transform_1(%arg0: i32) -> (i32, i32) {
    %c0_i32 = arith.constant 0 : i32
    %c0_i32_0 = arith.constant 0 : i32
    %c0_i32_1 = arith.constant 0 : i32
    return %c0_i32, %c0_i32_0 : i32, i32
  }
  func.func @transform_2(%arg0: i32) -> (i32, i32, i32, i32) {
    %c0_i32 = arith.constant 0 : i32
    %c0_i32_0 = arith.constant 0 : i32
    %c0_i32_1 = arith.constant 0 : i32
    %c0_i32_2 = arith.constant 0 : i32
    %c0_i32_3 = arith.constant 0 : i32
    return %c0_i32, %c0_i32_0, %c0_i32_1, %c0_i32_2 : i32, i32, i32, i32
  }
  func.func @transform_3(%arg0: i32) -> (i32, i32, i32) {
    %c0_i32 = arith.constant 0 : i32
    %c0_i32_0 = arith.constant 0 : i32
    %c0_i32_1 = arith.constant 0 : i32
    %c0_i32_2 = arith.constant 0 : i32
    return %c0_i32, %c0_i32_0, %c0_i32_1 : i32, i32, i32
  }
  func.func @transform_4(%arg0: i32) -> (i32, i32) {
    %c0_i32 = arith.constant 0 : i32
    %c0_i32_0 = arith.constant 0 : i32
    %c0_i32_1 = arith.constant 0 : i32
    return %c0_i32, %c0_i32_0 : i32, i32
  }
  func.func @transform_5(%arg0: i32) -> (i32, i32) {
    %c0_i32 = arith.constant 0 : i32
    %c0_i32_0 = arith.constant 0 : i32
    %c0_i32_1 = arith.constant 0 : i32
    return %c0_i32, %c0_i32_0 : i32, i32
  }
  func.func @transform_6(%arg0: i32) -> (i32, i32, i32) {
    %c0_i32 = arith.constant 0 : i32
    %c0_i32_0 = arith.constant 0 : i32
    %c0_i32_1 = arith.constant 0 : i32
    return %arg0, %c0_i32, %c0_i32_0 : i32, i32, i32
  }
}

</mosaic_0001>

<llo_original>
// kernel: siamese_forward.1
$region0: #{siamese_forward.1}
  #allocation0 [shape = 'u32[]', space=smem, size = 0x4, offset = 0x4, fixed_abs, tag = 'smem constant byte address 0x4 - core index']
  #allocation1 [shape = 'u32[144,128]{1,0:T(1,128)}', space=vmem, size = 0x12000, scoped, tag = 'internal scratch']
  %s0 = inlined_call_operand.vmem [shape: f32[8,1024], index: 0, kind: input, shape index: {}]
  %s1 = inlined_call_operand.vmem [shape: f32[4,512], index: 1, kind: input, shape index: {}]
  %s2 = inlined_call_operand.vmem [shape: f32[3,9,8,8], index: 2, kind: input, shape index: {}]
  %s3 = inlined_call_operand.vmem [shape: f32[3,8,1], index: 3, kind: input, shape index: {}]
  %s4 = inlined_call_operand.vmem [shape: f32[8,128], index: 4, kind: input, shape index: {}]
  %s5 = inlined_call_operand.vmem [shape: f32[1,128], index: 5, kind: input, shape index: {}]
  %s6 = inlined_call_operand.vmem [shape: f32[2,2,128], index: 6, kind: output, shape index: {}]
  %s7 = sld [smem:[#allocation0]]
  $region57: #{siamese_forward.1} parent=0
    _
  %s9 = ssub.s32 1, %s7
  %s10 = scalar_select 0, %s9, %s7
  loop: start=0, step=1, limit=4
  $region2: #{siamese_forward.1} parent=0 // loop_pre_header
    _
  $region3: #{siamese_forward.1} parent=0 // loop_header
    %s12 = sphi 0, %s16
    %p13 = scmp.ge.s32.totalorder %s12, 4
    %s22 = sphi 0, %s24
    %s25 = sphi 0, %s22
    %s26 = sphi 0, %s25
    %s42 = sphi 0, %s26
    %s46 = sphi 0, %s46
    %s48 = sphi 0, %s46
    %s49 = sphi 0, %s48
    %s63 = sphi 0, %s49
    %s67 = sphi 0, %s67
    %s69 = sphi 0, %s67
    %s70 = sphi 0, %s69
    %s84 = sphi 0, %s70
    %s88 = sphi 0, %s88
    %s90 = sphi 0, %s88
    %s91 = sphi 0, %s90
    %s105 = sphi 0, %s91
    %s109 = sphi 0, %s109
    %s111 = sphi 0, %s109
    %s112 = sphi 0, %s111
    %s126 = sphi 0, %s112
    %s130 = sphi 0, %s130
    %s132 = sphi 0, %s130
    %s133 = sphi 0, %s132
    %s147 = sphi 0, %s133
    %s153 = sphi 0, %s155
    %s156 = sphi 0, %s153
    %s157 = sphi 0, %s156
    %s173 = sphi 0, %s157
  $region4: #{siamese_forward.1} parent=0 // loop_header_branch
    %15 = sbr.rel (%p13) target = $region8
  $region5: #{siamese_forward.1} parent=0 // loop_body
    %s17 = ssub.s32 %s12, 1
    %s18 = ssub.s32 %s12, 2
    %s19 = sadd.s32 %s12, 1
    %s20 = ssub.s32 %s12, %s19
    %p21 = scmp.eq.s32.totalorder %s20, 0
    %s23 = sadd.s32 %s22, 1
    %s24 = scalar_select %p21, %s22, %s23
    %p27 = pneg %p21
    %p28 = scmp.eq.s32.totalorder %s12, 1
    %p29 = por %p27, %p28
    %p30 = scmp.ne.s32.totalorder %s22, %s25
    %p31 = scmp.eq.s32.totalorder %s12, 0
    %p32 = por %p30, %p31
    %p33 = scmp.ne.s32.totalorder %s22, %s25
    %p34 = scmp.eq.s32.totalorder %s17, 1
    %p35 = por %p33, %p34
    %p36 = scmp.ne.s32.totalorder %s25, %s26
    %p37 = scmp.eq.s32.totalorder %s17, 0
    %p38 = por %p36, %p37
    %p39 = scmp.ne.s32.totalorder %s25, %s26
    %p40 = scmp.eq.s32.totalorder %s18, 1
    %p41 = por %p39, %p40
    %p43 = scmp.ne.s32.totalorder %s26, %s42
    %p44 = scmp.eq.s32.totalorder %s18, 0
    %p45 = por %p43, %p44
    %s47 = sadd.s32 %s46, 1
    %p50 = scmp.eq.s32.totalorder %s12, 1
    %p51 = scmp.ne.s32.totalorder %s46, %s48
    %p52 = scmp.eq.s32.totalorder %s12, 0
    %p53 = por %p51, %p52
    %p54 = scmp.ne.s32.totalorder %s46, %s48
    %p55 = scmp.eq.s32.totalorder %s17, 1
    %p56 = por %p54, %p55
    %p57 = scmp.ne.s32.totalorder %s48, %s49
    %p58 = scmp.eq.s32.totalorder %s17, 0
    %p59 = por %p57, %p58
    %p60 = scmp.ne.s32.totalorder %s48, %s49
    %p61 = scmp.eq.s32.totalorder %s18, 1
    %p62 = por %p60, %p61
    %p64 = scmp.ne.s32.totalorder %s49, %s63
    %p65 = scmp.eq.s32.totalorder %s18, 0
    %p66 = por %p64, %p65
    %s68 = sadd.s32 %s67, 1
    %p71 = scmp.eq.s32.totalorder %s12, 1
    %p72 = scmp.ne.s32.totalorder %s67, %s69
    %p73 = scmp.eq.s32.totalorder %s12, 0
    %p74 = por %p72, %p73
    %p75 = scmp.ne.s32.totalorder %s67, %s69
    %p76 = scmp.eq.s32.totalorder %s17, 1
    %p77 = por %p75, %p76
    %p78 = scmp.ne.s32.totalorder %s69, %s70
    %p79 = scmp.eq.s32.totalorder %s17, 0
    %p80 = por %p78, %p79
    %p81 = scmp.ne.s32.totalorder %s69, %s70
    %p82 = scmp.eq.s32.totalorder %s18, 1
    %p83 = por %p81, %p82
    %p85 = scmp.ne.s32.totalorder %s70, %s84
    %p86 = scmp.eq.s32.totalorder %s18, 0
    %p87 = por %p85, %p86
    %s89 = sadd.s32 %s88, 1
    %p92 = scmp.eq.s32.totalorder %s12, 1
    %p93 = scmp.ne.s32.totalorder %s88, %s90
    %p94 = scmp.eq.s32.totalorder %s12, 0
    %p95 = por %p93, %p94
    %p96 = scmp.ne.s32.totalorder %s88, %s90
    %p97 = scmp.eq.s32.totalorder %s17, 1
    %p98 = por %p96, %p97
    %p99 = scmp.ne.s32.totalorder %s90, %s91
    %p100 = scmp.eq.s32.totalorder %s17, 0
    %p101 = por %p99, %p100
    %p102 = scmp.ne.s32.totalorder %s90, %s91
    %p103 = scmp.eq.s32.totalorder %s18, 1
    %p104 = por %p102, %p103
    %p106 = scmp.ne.s32.totalorder %s91, %s105
    %p107 = scmp.eq.s32.totalorder %s18, 0
    %p108 = por %p106, %p107
    %s110 = sadd.s32 %s109, 1
    %p113 = scmp.eq.s32.totalorder %s12, 1
    %p114 = scmp.ne.s32.totalorder %s109, %s111
    %p115 = scmp.eq.s32.totalorder %s12, 0
    %p116 = por %p114, %p115
    %p117 = scmp.ne.s32.totalorder %s109, %s111
    %p118 = scmp.eq.s32.totalorder %s17, 1
    %p119 = por %p117, %p118
    %p120 = scmp.ne.s32.totalorder %s111, %s112
    %p121 = scmp.eq.s32.totalorder %s17, 0
    %p122 = por %p120, %p121
    %p123 = scmp.ne.s32.totalorder %s111, %s112
    %p124 = scmp.eq.s32.totalorder %s18, 1
    %p125 = por %p123, %p124
    %p127 = scmp.ne.s32.totalorder %s112, %s126
    %p128 = scmp.eq.s32.totalorder %s18, 0
    %p129 = por %p127, %p128
    %s131 = sadd.s32 %s130, 1
    %p134 = scmp.eq.s32.totalorder %s12, 1
    %p135 = scmp.ne.s32.totalorder %s130, %s132
    %p136 = scmp.eq.s32.totalorder %s12, 0
    %p137 = por %p135, %p136
    %p138 = scmp.ne.s32.totalorder %s130, %s132
    %p139 = scmp.eq.s32.totalorder %s17, 1
    %p140 = por %p138, %p139
    %p141 = scmp.ne.s32.totalorder %s132, %s133
    %p142 = scmp.eq.s32.totalorder %s17, 0
    %p143 = por %p141, %p142
    %p144 = scmp.ne.s32.totalorder %s132, %s133
    %p145 = scmp.eq.s32.totalorder %s18, 1
    %p146 = por %p144, %p145
    %p148 = scmp.ne.s32.totalorder %s133, %s147
    %p149 = scmp.eq.s32.totalorder %s18, 0
    %p150 = por %p148, %p149
    %s151 = ssub.s32 %s12, %s19
    %p152 = scmp.eq.s32.totalorder %s151, 0
    %s154 = sadd.s32 %s153, 1
    %s155 = scalar_select %p152, %s153, %s154
    %p158 = pneg %p152
    %p159 = scmp.eq.s32.totalorder %s12, 1
    %p160 = por %p158, %p159
    %p161 = scmp.ne.s32.totalorder %s153, %s156
    %p162 = scmp.eq.s32.totalorder %s12, 0
    %p163 = por %p161, %p162
    %p164 = scmp.ne.s32.totalorder %s153, %s156
    %p165 = scmp.eq.s32.totalorder %s17, 1
    %p166 = por %p164, %p165
    %p167 = scmp.ne.s32.totalorder %s156, %s157
    %p168 = scmp.eq.s32.totalorder %s17, 0
    %p169 = por %p167, %p168
    %p170 = scmp.ne.s32.totalorder %s156, %s157
    %p171 = scmp.eq.s32.totalorder %s18, 1
    %p172 = por %p170, %p171
    %p174 = scmp.ne.s32.totalorder %s157, %s173
    %p175 = scmp.eq.s32.totalorder %s18, 0
    %p176 = por %p174, %p175
    %p177 = scmp.le.s32.totalorder 1, %s12
    %p178 = scmp.lt.s32.totalorder %s12, 3
    %p179 = pnand %p177, %p178
    %p180 = pneg %p179
    // Predicated region
    $region9: #{siamese_forward.1} parent=5 // pred_check
      _
    $region10: #{siamese_forward.1} parent=5 // pred_check_branch
      %182 = sbr.rel (%p179) target = $region12
    $region11: #{siamese_forward.1} parent=5 // pred_region
      %s183 = ssub.s32 %s12, 1
      // Predicated region
      $region13: #{siamese_forward.1} parent=11 // pred_check
        %p184 = pneg %p59
      $region14: #{siamese_forward.1} parent=11 // pred_check_branch
        %186 = sbr.rel (%p184) target = $region16
      $region15: #{siamese_forward.1} parent=11 // pred_region
        _
      $region16: #{siamese_forward.1} parent=11 // pred_fallthru
        _
      // Predicated region
      $region17: #{siamese_forward.1} parent=11 // pred_check
        %p187 = pneg %p80
      $region18: #{siamese_forward.1} parent=11 // pred_check_branch
        %189 = sbr.rel (%p187) target = $region20
      $region19: #{siamese_forward.1} parent=11 // pred_region
        _
      $region20: #{siamese_forward.1} parent=11 // pred_fallthru
        _
      // Predicated region
      $region21: #{siamese_forward.1} parent=11 // pred_check
        %p190 = pneg %p101
      $region22: #{siamese_forward.1} parent=11 // pred_check_branch
        %192 = sbr.rel (%p190) target = $region24
      $region23: #{siamese_forward.1} parent=11 // pred_region
        _
      $region24: #{siamese_forward.1} parent=11 // pred_fallthru
        _
      // Predicated region
      $region25: #{siamese_forward.1} parent=11 // pred_check
        %p193 = pneg %p122
      $region26: #{siamese_forward.1} parent=11 // pred_check_branch
        %195 = sbr.rel (%p193) target = $region28
      $region27: #{siamese_forward.1} parent=11 // pred_region
        _
      $region28: #{siamese_forward.1} parent=11 // pred_fallthru
        _
      // Predicated region
      $region29: #{siamese_forward.1} parent=11 // pred_check
        %p196 = pneg %p143
      $region30: #{siamese_forward.1} parent=11 // pred_check_branch
        %198 = sbr.rel (%p196) target = $region32
      $region31: #{siamese_forward.1} parent=11 // pred_region
        _
      $region32: #{siamese_forward.1} parent=11 // pred_fallthru
        _
    $region12: #{siamese_forward.1} parent=5 // pred_fallthru
      _
    %p199 = scmp.lt.s32.totalorder %s12, 2
    // Predicated region
    $region33: #{siamese_forward.1} parent=5 // pred_check
      %p200 = pneg %p199
    $region34: #{siamese_forward.1} parent=5 // pred_check_branch
      %202 = sbr.rel (%p200) target = $region36
    $region35: #{siamese_forward.1} parent=5 // pred_region
      // Predicated region
      $region37: #{siamese_forward.1} parent=35 // pred_check
        %p203 = pneg %p32
      $region38: #{siamese_forward.1} parent=35 // pred_check_branch
        %205 = sbr.rel (%p203) target = $region40
      $region39: #{siamese_forward.1} parent=35 // pred_region
        %s206 = smul.u32 4, %s12
        %p207 = scmp.lt.s32.totalorder %s206, 7
        %s208 = scalar_select %p207, %s206, 7
        %s209 = smul.addr %s208, 8
        %s210 = scalar_lea.vmem %s0, %s209
        %s211 = smul.u32 4, %s12
      $region40: #{siamese_forward.1} parent=35 // pred_fallthru
        _
    $region36: #{siamese_forward.1} parent=5 // pred_fallthru
      _
    %p212 = scmp.le.s32.totalorder 1, %s12
    %p213 = scmp.lt.s32.totalorder %s12, 3
    %p214 = pnand %p212, %p213
    %p215 = pneg %p214
    // Predicated region
    $region41: #{siamese_forward.1} parent=5 // pred_check
      _
    $region42: #{siamese_forward.1} parent=5 // pred_check_branch
      %217 = sbr.rel (%p214) target = $region44
    $region43: #{siamese_forward.1} parent=5 // pred_region
      %s218 = ssub.s32 %s12, 1
      %s219 = smul.u32 4, %s17
      %p220 = scmp.lt.s32.totalorder %s219, 7
      %s221 = scalar_select %p220, %s219, 7
      %s222 = smul.addr %s221, 8
      %s223 = scalar_lea.vmem %s0, %s222
      %p224 = pneg %p38
      %p225 = pneg %p35
      %p226 = pneg %p59
      %p227 = pneg %p56
      %p228 = pneg %p80
      %p229 = pneg %p77
      %p230 = pneg %p101
      %p231 = pneg %p98
      %p232 = pneg %p122
      %p233 = pneg %p119
      %p234 = pneg %p143
      %p235 = pneg %p140
      %p236 = pneg %p169
      %p237 = pneg %p166
      %p238 = scmp.lt.s32.totalorder %s17, 1
      %s239 = scalar_select %p238, %s17, 1
      %s240 = smul.addr %s239, 2
      %s241 = scalar_lea.vmem %s6, %s240
      %s242 = smul.u32 4, %s17
      %p243 = scmp.lt.s32.totalorder %s242, 7
      %s244 = scalar_select %p243, %s242, 7
      %s245 = smul.addr %s244, 8
      %s246 = scalar_lea.vmem %s0, %s245
      %s247 = smul.u32 4, %s17
      %p248 = scmp.lt.s32.totalorder %s17, 1
      %s249 = scalar_select %p248, %s17, 1
      %s250 = smul.addr %s249, 2
      %s251 = scalar_lea.vmem %s6, %s250
      %v252 = vld [vmem:[%s1] ss:$4 sm:$0xf]
      %s253 = scalar_lea.vmem %s1, 1
      %v254 = vld [vmem:[%s253] ss:$4 sm:$0xf]
      %s255 = scalar_lea.vmem %s1, 2
      %v256 = vld [vmem:[%s255] ss:$4 sm:$0xf]
      %s257 = scalar_lea.vmem %s1, 3
      %v258 = vld [vmem:[%s257] ss:$4 sm:$0xf]
      %v259 = vld [vmem:[%s246] sm:$0xff]
      %v260 = vld [vmem:[%s246 + $0x8] sm:$0xff]
      %v261 = vld [vmem:[%s246 + $0x10] sm:$0xff]
      %v262 = vld [vmem:[%s246 + $0x18] sm:$0xff]
      %263 = vrot.lane.b32.xlu0 %v259, 17
      %v264 = vpop.permute.xlu0 %263
      %265 = vrot.lane.b32.xlu0 %v260, 17
      %v266 = vpop.permute.xlu0 %265
      %267 = vrot.lane.b32.xlu0 %v261, 17
      %v268 = vpop.permute.xlu0 %267
      %269 = vrot.lane.b32.xlu0 %v262, 17
      %v270 = vpop.permute.xlu0 %269
      %v271 = vlaneseq
      %v272 = vand.u32 %v271, 127
      %vm273 = vcmp.lt.s32.totalorder %v272, 17
      %v274 = vsel %vm273, %v268, %v270
      %v275 = vsel %vm273, %v266, %v268
      %v276 = vsel %vm273, %v264, %v266
      %v277 = vsel %vm273, %v270, %v264
      %v279 = vlaneseq
      %v280 = vshrl.u32 %v279, 7
      %v281 = vsub.s32 0, %v280
      %v282 = vrot.slane %v252, %v281
      %v283 = vlaneseq
      %v284 = vshrl.u32 %v283, 7
      %v285 = vsub.s32 1, %v284
      %v286 = vrot.slane %v252, %v285
      %v287 = vlaneseq
      %v288 = vshrl.u32 %v287, 7
      %v289 = vsub.s32 2, %v288
      %v290 = vrot.slane %v252, %v289
      %v291 = vlaneseq
      %v292 = vshrl.u32 %v291, 7
      %v293 = vsub.s32 3, %v292
      %v294 = vrot.slane %v252, %v293
      %v299 = vmul.f32 %v277, %v282
      %v300 = vmul.f32 %v276, %v286
      %v301 = vmul.f32 %v275, %v290
      %v302 = vmul.f32 %v274, %v294
      %v304 = vlaneseq
      %v305 = vshrl.u32 %v304, 7
      %v306 = vsub.s32 0, %v305
      %v307 = vrot.slane %v256, %v306
      %v308 = vlaneseq
      %v309 = vshrl.u32 %v308, 7
      %v310 = vsub.s32 1, %v309
      %v311 = vrot.slane %v256, %v310
      %v312 = vlaneseq
      %v313 = vshrl.u32 %v312, 7
      %v314 = vsub.s32 2, %v313
      %v315 = vrot.slane %v256, %v314
      %v316 = vlaneseq
      %v317 = vshrl.u32 %v316, 7
      %v318 = vsub.s32 3, %v317
      %v319 = vrot.slane %v256, %v318
      %v324 = vmul.f32 %v299, %v307
      %v325 = vmul.f32 %v300, %v311
      %v326 = vmul.f32 %v301, %v315
      %v327 = vmul.f32 %v302, %v319
      %v328 = vld [vmem:[%s2] sm:$0xff]
      %329 = vrot.lane.b32.xlu0 %v259, 16
      %v330 = vpop.permute.xlu0 %329
      %331 = vrot.lane.b32.xlu0 %v260, 16
      %v332 = vpop.permute.xlu0 %331
      %333 = vrot.lane.b32.xlu0 %v261, 16
      %v334 = vpop.permute.xlu0 %333
      %335 = vrot.lane.b32.xlu0 %v262, 16
      %v336 = vpop.permute.xlu0 %335
      %vm337 = vcmp.lt.s32.totalorder %v272, 16
      %v338 = vsel %vm337, %v334, %v336
      %v339 = vsel %vm337, %v332, %v334
      %v340 = vsel %vm337, %v330, %v332
      %v341 = vsel %vm337, %v336, %v330
      %v342 = vmul.f32 %v341, %v282
      %v343 = vmul.f32 %v340, %v286
      %v344 = vmul.f32 %v339, %v290
      %v345 = vmul.f32 %v338, %v294
      %s346 = scalar_lea.vmem %s2, 8
      %v347 = vld [vmem:[%s346] sm:$0xff]
      %vm348 = vcmask 64512
      %v350 = vsel %vm348, %v347, 0
      %352 = vmatprep.subr.mxu0 %v343
      %353 = vmatpush1.msra.mxu0 %v342
      %354 = vmatprep.subr.mxu0 0.0
      %355 = vmatpush1.msra.mxu0 0.0
      %356 = vmatprep.subr.mxu0 0.0
      %357 = vmatpush1.msra.mxu0 0.0
      %358 = vmatprep.subr.mxu0 0.0
      %359 = vmatpush1.msra.mxu0 0.0
      %360 = vmatprep.subr.mxu0 0.0
      %361 = vmatpush1.msra.mxu0 0.0
      %362 = vmatprep.subr.mxu0 0.0
      %363 = vmatpush1.msra.mxu0 0.0
      %364 = vmatprep.subr.mxu0 0.0
      %365 = vmatpush1.msra.mxu0 0.0
      %366 = vmatprep.subr.mxu0 0.0
      %367 = vmatpush1.msra.mxu0 0.0
      %368 = vmatprep.subr.mxu0 0.0
      %369 = vmatpush1.msra.mxu0 0.0
      %370 = vmatprep.subr.mxu0 0.0
      %371 = vmatpush1.msra.mxu0 0.0
      %372 = vmatprep.subr.mxu0 0.0
      %373 = vmatpush1.msra.mxu0 0.0
      %374 = vmatprep.subr.mxu0 0.0
      %375 = vmatpush1.msra.mxu0 0.0
      %376 = vmatprep.subr.mxu0 0.0
      %377 = vmatpush1.msra.mxu0 0.0
      %378 = vmatprep.subr.mxu0 0.0
      %379 = vmatpush1.msra.mxu0 0.0
      %380 = vmatprep.subr.mxu0 0.0
      %381 = vmatpush1.msra.mxu0 0.0
      %382 = vmatprep.subr.mxu0 0.0
      %383 = vmatpush1.msra.mxu0 0.0
      %384 = vmatprep.subr.mxu0 0.0
      %385 = vmatpush1.msra.mxu0 0.0
      %386 = vmatprep.subr.mxu0 0.0
      %387 = vmatpush1.msra.mxu0 0.0
      %388 = vmatprep.subr.mxu0 0.0
      %389 = vmatpush1.msra.mxu0 0.0
      %390 = vmatprep.subr.mxu0 0.0
      %391 = vmatpush1.msra.mxu0 0.0
      %392 = vmatprep.subr.mxu0 0.0
      %393 = vmatpush1.msra.mxu0 0.0
      %394 = vmatprep.subr.mxu0 0.0
      %395 = vmatpush1.msra.mxu0 0.0
      %396 = vmatprep.subr.mxu0 0.0
      %397 = vmatpush1.msra.mxu0 0.0
      %398 = vmatprep.subr.mxu0 0.0
      %399 = vmatpush1.msra.mxu0 0.0
      %400 = vmatprep.subr.mxu0 0.0
      %401 = vmatpush1.msra.mxu0 0.0
      %402 = vmatprep.subr.mxu0 0.0
      %403 = vmatpush1.msra.mxu0 0.0
      %404 = vmatprep.subr.mxu0 0.0
      %405 = vmatpush1.msra.mxu0 0.0
      %406 = vmatprep.subr.mxu0 0.0
      %407 = vmatpush1.msra.mxu0 0.0
      %408 = vmatprep.subr.mxu0 0.0
      %409 = vmatpush1.msra.mxu0 0.0
      %410 = vmatprep.subr.mxu0 0.0
      %411 = vmatpush1.msra.mxu0 0.0
      %412 = vmatprep.subr.mxu0 0.0
      %413 = vmatpush1.msra.mxu0 0.0
      %414 = vmatprep.subr.mxu0 0.0
      %415 = vmatpush1.msra.mxu0 0.0
      %416 = vmatprep.mubr.f32.mxu0 0.0
      %417 = vmatmul.mubr.f32.gmra.mrb[0].mxu0 %v350
      %v418 = vpop.f32.mrb[0].mxu0
      %v419 = vadd.f32 0.0, %v418
      %v420 = vpop.f32.mrb[0].mxu0
      %v421 = vadd.f32 0.0, %v420
      %422 = vdwg.mxu0
      %423 = vmatprep.subr.mxu0 %v345
      %424 = vmatpush1.msra.mxu0 %v344
      %425 = vmatprep.subr.mxu0 0.0
      %426 = vmatpush1.msra.mxu0 0.0
      %427 = vmatprep.subr.mxu0 0.0
      %428 = vmatpush1.msra.mxu0 0.0
      %429 = vmatprep.subr.mxu0 0.0
      %430 = vmatpush1.msra.mxu0 0.0
      %431 = vmatprep.subr.mxu0 0.0
      %432 = vmatpush1.msra.mxu0 0.0
      %433 = vmatprep.subr.mxu0 0.0
      %434 = vmatpush1.msra.mxu0 0.0
      %435 = vmatprep.subr.mxu0 0.0
      %436 = vmatpush1.msra.mxu0 0.0
      %437 = vmatprep.subr.mxu0 0.0
      %438 = vmatpush1.msra.mxu0 0.0
      %439 = vmatprep.subr.mxu0 0.0
      %440 = vmatpush1.msra.mxu0 0.0
      %441 = vmatprep.subr.mxu0 0.0
      %442 = vmatpush1.msra.mxu0 0.0
      %443 = vmatprep.subr.mxu0 0.0
      %444 = vmatpush1.msra.mxu0 0.0
      %445 = vmatprep.subr.mxu0 0.0
      %446 = vmatpush1.msra.mxu0 0.0
      %447 = vmatprep.subr.mxu0 0.0
      %448 = vmatpush1.msra.mxu0 0.0
      %449 = vmatprep.subr.mxu0 0.0
      %450 = vmatpush1.msra.mxu0 0.0
      %451 = vmatprep.subr.mxu0 0.0
      %452 = vmatpush1.msra.mxu0 0.0
      %453 = vmatprep.subr.mxu0 0.0
      %454 = vmatpush1.msra.mxu0 0.0
      %455 = vmatprep.subr.mxu0 0.0
      %456 = vmatpush1.msra.mxu0 0.0
      %457 = vmatprep.subr.mxu0 0.0
      %458 = vmatpush1.msra.mxu0 0.0
      %459 = vmatprep.subr.mxu0 0.0
      %460 = vmatpush1.msra.mxu0 0.0
      %461 = vmatprep.subr.mxu0 0.0
      %462 = vmatpush1.msra.mxu0 0.0
      %463 = vmatprep.subr.mxu0 0.0
      %464 = vmatpush1.msra.mxu0 0.0
      %465 = vmatprep.subr.mxu0 0.0
      %466 = vmatpush1.msra.mxu0 0.0
      %467 = vmatprep.subr.mxu0 0.0
      %468 = vmatpush1.msra.mxu0 0.0
      %469 = vmatprep.subr.mxu0 0.0
      %470 = vmatpush1.msra.mxu0 0.0
      %471 = vmatprep.subr.mxu0 0.0
      %472 = vmatpush1.msra.mxu0 0.0
      %473 = vmatprep.subr.mxu0 0.0
      %474 = vmatpush1.msra.mxu0 0.0
      %475 = vmatprep.subr.mxu0 0.0
      %476 = vmatpush1.msra.mxu0 0.0
      %477 = vmatprep.subr.mxu0 0.0
      %478 = vmatpush1.msra.mxu0 0.0
      %479 = vmatprep.subr.mxu0 0.0
      %480 = vmatpush1.msra.mxu0 0.0
      %481 = vmatprep.subr.mxu0 0.0
      %482 = vmatpush1.msra.mxu0 0.0
      %483 = vmatprep.subr.mxu0 0.0
      %484 = vmatpush1.msra.mxu0 0.0
      %485 = vmatprep.subr.mxu0 0.0
      %486 = vmatpush1.msra.mxu0 0.0
      %487 = vmatprep.mubr.f32.mxu0 0.0
      %488 = vmatmul.mubr.f32.gmra.mrb[0].mxu0 %v350
      %v489 = vpop.f32.mrb[0].mxu0
      %v490 = vadd.f32 0.0, %v489
      %v491 = vpop.f32.mrb[0].mxu0
      %v492 = vadd.f32 0.0, %v491
      %493 = vdwg.mxu0
      %v495 = vsel %vm348, %v328, 0
      %497 = vmatprep.subr.mxu0 %v325
      %498 = vmatpush1.msra.mxu0 %v324
      %499 = vmatprep.subr.mxu0 0.0
      %500 = vmatpush1.msra.mxu0 0.0
      %501 = vmatprep.subr.mxu0 0.0
      %502 = vmatpush1.msra.mxu0 0.0
      %503 = vmatprep.subr.mxu0 0.0
      %504 = vmatpush1.msra.mxu0 0.0
      %505 = vmatprep.subr.mxu0 0.0
      %506 = vmatpush1.msra.mxu0 0.0
      %507 = vmatprep.subr.mxu0 0.0
      %508 = vmatpush1.msra.mxu0 0.0
      %509 = vmatprep.subr.mxu0 0.0
      %510 = vmatpush1.msra.mxu0 0.0
      %511 = vmatprep.subr.mxu0 0.0
      %512 = vmatpush1.msra.mxu0 0.0
      %513 = vmatprep.subr.mxu0 0.0
      %514 = vmatpush1.msra.mxu0 0.0
      %515 = vmatprep.subr.mxu0 0.0
      %516 = vmatpush1.msra.mxu0 0.0
      %517 = vmatprep.subr.mxu0 0.0
      %518 = vmatpush1.msra.mxu0 0.0
      %519 = vmatprep.subr.mxu0 0.0
      %520 = vmatpush1.msra.mxu0 0.0
      %521 = vmatprep.subr.mxu0 0.0
      %522 = vmatpush1.msra.mxu0 0.0
      %523 = vmatprep.subr.mxu0 0.0
      %524 = vmatpush1.msra.mxu0 0.0
      %525 = vmatprep.subr.mxu0 0.0
      %526 = vmatpush1.msra.mxu0 0.0
      %527 = vmatprep.subr.mxu0 0.0
      %528 = vmatpush1.msra.mxu0 0.0
      %529 = vmatprep.subr.mxu0 0.0
      %530 = vmatpush1.msra.mxu0 0.0
      %531 = vmatprep.subr.mxu0 0.0
      %532 = vmatpush1.msra.mxu0 0.0
      %533 = vmatprep.subr.mxu0 0.0
      %534 = vmatpush1.msra.mxu0 0.0
      %535 = vmatprep.subr.mxu0 0.0
      %536 = vmatpush1.msra.mxu0 0.0
      %537 = vmatprep.subr.mxu0 0.0
      %538 = vmatpush1.msra.mxu0 0.0
      %539 = vmatprep.subr.mxu0 0.0
      %540 = vmatpush1.msra.mxu0 0.0
      %541 = vmatprep.subr.mxu0 0.0
      %542 = vmatpush1.msra.mxu0 0.0
      %543 = vmatprep.subr.mxu0 0.0
      %544 = vmatpush1.msra.mxu0 0.0
      %545 = vmatprep.subr.mxu0 0.0
      %546 = vmatpush1.msra.mxu0 0.0
      %547 = vmatprep.subr.mxu0 0.0
      %548 = vmatpush1.msra.mxu0 0.0
      %549 = vmatprep.subr.mxu0 0.0
      %550 = vmatpush1.msra.mxu0 0.0
      %551 = vmatprep.subr.mxu0 0.0
      %552 = vmatpush1.msra.mxu0 0.0
      %553 = vmatprep.subr.mxu0 0.0
      %554 = vmatpush1.msra.mxu0 0.0
      %555 = vmatprep.subr.mxu0 0.0
      %556 = vmatpush1.msra.mxu0 0.0
      %557 = vmatprep.subr.mxu0 0.0
      %558 = vmatpush1.msra.mxu0 0.0
      %559 = vmatprep.subr.mxu0 0.0
      %560 = vmatpush1.msra.mxu0 0.0
      %561 = vmatprep.mubr.f32.mxu0 0.0
      %562 = vmatmul.mubr.f32.gmra.mrb[0].mxu0 %v495
      %v563 = vpop.f32.mrb[0].mxu0
      %v564 = vadd.f32 %v419, %v563
      %v565 = vpop.f32.mrb[0].mxu0
      %v566 = vadd.f32 %v421, %v565
      %567 = vdwg.mxu0
      %568 = vmatprep.subr.mxu0 %v327
      %569 = vmatpush1.msra.mxu0 %v326
      %570 = vmatprep.subr.mxu0 0.0
      %571 = vmatpush1.msra.mxu0 0.0
      %572 = vmatprep.subr.mxu0 0.0
      %573 = vmatpush1.msra.mxu0 0.0
      %574 = vmatprep.subr.mxu0 0.0
      %575 = vmatpush1.msra.mxu0 0.0
      %576 = vmatprep.subr.mxu0 0.0
      %577 = vmatpush1.msra.mxu0 0.0
      %578 = vmatprep.subr.mxu0 0.0
      %579 = vmatpush1.msra.mxu0 0.0
      %580 = vmatprep.subr.mxu0 0.0
      %581 = vmatpush1.msra.mxu0 0.0
      %582 = vmatprep.subr.mxu0 0.0
      %583 = vmatpush1.msra.mxu0 0.0
      %584 = vmatprep.subr.mxu0 0.0
      %585 = vmatpush1.msra.mxu0 0.0
      %586 = vmatprep.subr.mxu0 0.0
      %587 = vmatpush1.msra.mxu0 0.0
      %588 = vmatprep.subr.mxu0 0.0
      %589 = vmatpush1.msra.mxu0 0.0
      %590 = vmatprep.subr.mxu0 0.0
      %591 = vmatpush1.msra.mxu0 0.0
      %592 = vmatprep.subr.mxu0 0.0
      %593 = vmatpush1.msra.mxu0 0.0
      %594 = vmatprep.subr.mxu0 0.0
      %595 = vmatpush1.msra.mxu0 0.0
      %596 = vmatprep.subr.mxu0 0.0
      %597 = vmatpush1.msra.mxu0 0.0
      %598 = vmatprep.subr.mxu0 0.0
      %599 = vmatpush1.msra.mxu0 0.0
      %600 = vmatprep.subr.mxu0 0.0
      %601 = vmatpush1.msra.mxu0 0.0
      %602 = vmatprep.subr.mxu0 0.0
      %603 = vmatpush1.msra.mxu0 0.0
      %604 = vmatprep.subr.mxu0 0.0
      %605 = vmatpush1.msra.mxu0 0.0
      %606 = vmatprep.subr.mxu0 0.0
      %607 = vmatpush1.msra.mxu0 0.0
      %608 = vmatprep.subr.mxu0 0.0
      %609 = vmatpush1.msra.mxu0 0.0
      %610 = vmatprep.subr.mxu0 0.0
      %611 = vmatpush1.msra.mxu0 0.0
      %612 = vmatprep.subr.mxu0 0.0
      %613 = vmatpush1.msra.mxu0 0.0
      %614 = vmatprep.subr.mxu0 0.0
      %615 = vmatpush1.msra.mxu0 0.0
      %616 = vmatprep.subr.mxu0 0.0
      %617 = vmatpush1.msra.mxu0 0.0
      %618 = vmatprep.subr.mxu0 0.0
      %619 = vmatpush1.msra.mxu0 0.0
      %620 = vmatprep.subr.mxu0 0.0
      %621 = vmatpush1.msra.mxu0 0.0
      %622 = vmatprep.subr.mxu0 0.0
      %623 = vmatpush1.msra.mxu0 0.0
      %624 = vmatprep.subr.mxu0 0.0
      %625 = vmatpush1.msra.mxu0 0.0
      %626 = vmatprep.subr.mxu0 0.0
      %627 = vmatpush1.msra.mxu0 0.0
      %628 = vmatprep.subr.mxu0 0.0
      %629 = vmatpush1.msra.mxu0 0.0
      %630 = vmatprep.subr.mxu0 0.0
      %631 = vmatpush1.msra.mxu0 0.0
      %632 = vmatprep.mubr.f32.mxu0 0.0
      %633 = vmatmul.mubr.f32.gmra.mrb[0].mxu0 %v495
      %v634 = vpop.f32.mrb[0].mxu0
      %v635 = vadd.f32 %v490, %v634
      %v636 = vpop.f32.mrb[0].mxu0
      %v637 = vadd.f32 %v492, %v636
      %638 = vdwg.mxu0
      %639 = vrot.lane.b32.xlu0 %v259, 15
      %v640 = vpop.permute.xlu0 %639
      %641 = vrot.lane.b32.xlu0 %v260, 15
      %v642 = vpop.permute.xlu0 %641
      %643 = vrot.lane.b32.xlu0 %v261, 15
      %v644 = vpop.permute.xlu0 %643
      %645 = vrot.lane.b32.xlu0 %v262, 15
      %v646 = vpop.permute.xlu0 %645
      %vm647 = vcmp.lt.s32.totalorder %v272, 15
      %v648 = vsel %vm647, %v644, %v646
      %v649 = vsel %vm647, %v642, %v644
      %v650 = vsel %vm647, %v640, %v642
      %v651 = vsel %vm647, %v646, %v640
      %v652 = vmul.f32 %v651, %v282
      %v653 = vmul.f32 %v650, %v286
      %v654 = vmul.f32 %v649, %v290
      %v655 = vmul.f32 %v648, %v294
      %v657 = vlaneseq
      %v658 = vshrl.u32 %v657, 7
      %v659 = vsub.s32 0, %v658
      %v660 = vrot.slane %v258, %v659
      %v661 = vlaneseq
      %v662 = vshrl.u32 %v661, 7
      %v663 = vsub.s32 1, %v662
      %v664 = vrot.slane %v258, %v663
      %v665 = vlaneseq
      %v666 = vshrl.u32 %v665, 7
      %v667 = vsub.s32 2, %v666
      %v668 = vrot.slane %v258, %v667
      %v669 = vlaneseq
      %v670 = vshrl.u32 %v669, 7
      %v671 = vsub.s32 3, %v670
      %v672 = vrot.slane %v258, %v671
      %v677 = vmul.f32 %v652, %v660
      %v678 = vmul.f32 %v653, %v664
      %v679 = vmul.f32 %v654, %v668
      %v680 = vmul.f32 %v655, %v672
      %s681 = scalar_lea.vmem %s2, 16
      %v682 = vld [vmem:[%s681] sm:$0xff]
      %v684 = vsel %vm348, %v682, 0
      %686 = vmatprep.subr.mxu0 %v678
      %687 = vmatpush1.msra.mxu0 %v677
      %688 = vmatprep.subr.mxu0 0.0
      %689 = vmatpush1.msra.mxu0 0.0
      %690 = vmatprep.subr.mxu0 0.0
      %691 = vmatpush1.msra.mxu0 0.0
      %692 = vmatprep.subr.mxu0 0.0
      %693 = vmatpush1.msra.mxu0 0.0
      %694 = vmatprep.subr.mxu0 0.0
      %695 = vmatpush1.msra.mxu0 0.0
      %696 = vmatprep.subr.mxu0 0.0
      %697 = vmatpush1.msra.mxu0 0.0
      %698 = vmatprep.subr.mxu0 0.0
      %699 = vmatpush1.msra.mxu0 0.0
      %700 = vmatprep.subr.mxu0 0.0
      %701 = vmatpush1.msra.mxu0 0.0
      %702 = vmatprep.subr.mxu0 0.0
      %703 = vmatpush1.msra.mxu0 0.0
      %704 = vmatprep.subr.mxu0 0.0
      %705 = vmatpush1.msra.mxu0 0.0
      %706 = vmatprep.subr.mxu0 0.0
      %707 = vmatpush1.msra.mxu0 0.0
      %708 = vmatprep.subr.mxu0 0.0
      %709 = vmatpush1.msra.mxu0 0.0
      %710 = vmatprep.subr.mxu0 0.0
      %711 = vmatpush1.msra.mxu0 0.0
      %712 = vmatprep.subr.mxu0 0.0
      %713 = vmatpush1.msra.mxu0 0.0
      %714 = vmatprep.subr.mxu0 0.0
      %715 = vmatpush1.msra.mxu0 0.0
      %716 = vmatprep.subr.mxu0 0.0
      %717 = vmatpush1.msra.mxu0 0.0
      %718 = vmatprep.subr.mxu0 0.0
      %719 = vmatpush1.msra.mxu0 0.0
      %720 = vmatprep.subr.mxu0 0.0
      %721 = vmatpush1.msra.mxu0 0.0
      %722 = vmatprep.subr.mxu0 0.0
      %723 = vmatpush1.msra.mxu0 0.0
      %724 = vmatprep.subr.mxu0 0.0
      %725 = vmatpush1.msra.mxu0 0.0
      %726 = vmatprep.subr.mxu0 0.0
      %727 = vmatpush1.msra.mxu0 0.0
      %728 = vmatprep.subr.mxu0 0.0
      %729 = vmatpush1.msra.mxu0 0.0
      %730 = vmatprep.subr.mxu0 0.0
      %731 = vmatpush1.msra.mxu0 0.0
      %732 = vmatprep.subr.mxu0 0.0
      %733 = vmatpush1.msra.mxu0 0.0
      %734 = vmatprep.subr.mxu0 0.0
      %735 = vmatpush1.msra.mxu0 0.0
      %736 = vmatprep.subr.mxu0 0.0
      %737 = vmatpush1.msra.mxu0 0.0
      %738 = vmatprep.subr.mxu0 0.0
      %739 = vmatpush1.msra.mxu0 0.0
      %740 = vmatprep.subr.mxu0 0.0
      %741 = vmatpush1.msra.mxu0 0.0
      %742 = vmatprep.subr.mxu0 0.0
      %743 = vmatpush1.msra.mxu0 0.0
      %744 = vmatprep.subr.mxu0 0.0
      %745 = vmatpush1.msra.mxu0 0.0
      %746 = vmatprep.subr.mxu0 0.0
      %747 = vmatpush1.msra.mxu0 0.0
      %748 = vmatprep.subr.mxu0 0.0
      %749 = vmatpush1.msra.mxu0 0.0
      %750 = vmatprep.mubr.f32.mxu0 0.0
      %751 = vmatmul.mubr.f32.gmra.mrb[0].mxu0 %v684
      %v752 = vpop.f32.mrb[0].mxu0
      %v753 = vadd.f32 0.0, %v752
      %v754 = vpop.f32.mrb[0].mxu0
      %v755 = vadd.f32 0.0, %v754
      %756 = vdwg.mxu0
      %757 = vmatprep.subr.mxu0 %v680
      %758 = vmatpush1.msra.mxu0 %v679
      %759 = vmatprep.subr.mxu0 0.0
      %760 = vmatpush1.msra.mxu0 0.0
      %761 = vmatprep.subr.mxu0 0.0
      %762 = vmatpush1.msra.mxu0 0.0
      %763 = vmatprep.subr.mxu0 0.0
      %764 = vmatpush1.msra.mxu0 0.0
      %765 = vmatprep.subr.mxu0 0.0
      %766 = vmatpush1.msra.mxu0 0.0
      %767 = vmatprep.subr.mxu0 0.0
      %768 = vmatpush1.msra.mxu0 0.0
      %769 = vmatprep.subr.mxu0 0.0
      %770 = vmatpush1.msra.mxu0 0.0
      %771 = vmatprep.subr.mxu0 0.0
      %772 = vmatpush1.msra.mxu0 0.0
      %773 = vmatprep.subr.mxu0 0.0
      %774 = vmatpush1.msra.mxu0 0.0
      %775 = vmatprep.subr.mxu0 0.0
      %776 = vmatpush1.msra.mxu0 0.0
      %777 = vmatprep.subr.mxu0 0.0
      %778 = vmatpush1.msra.mxu0 0.0
      %779 = vmatprep.subr.mxu0 0.0
      %780 = vmatpush1.msra.mxu0 0.0
      %781 = vmatprep.subr.mxu0 0.0
      %782 = vmatpush1.msra.mxu0 0.0
      %783 = vmatprep.subr.mxu0 0.0
      %784 = vmatpush1.msra.mxu0 0.0
      %785 = vmatprep.subr.mxu0 0.0
      %786 = vmatpush1.msra.mxu0 0.0
      %787 = vmatprep.subr.mxu0 0.0
      %788 = vmatpush1.msra.mxu0 0.0
      %789 = vmatprep.subr.mxu0 0.0
      %790 = vmatpush1.msra.mxu0 0.0
      %791 = vmatprep.subr.mxu0 0.0
      %792 = vmatpush1.msra.mxu0 0.0
      %793 = vmatprep.subr.mxu0 0.0
      %794 = vmatpush1.msra.mxu0 0.0
      %795 = vmatprep.subr.mxu0 0.0
      %796 = vmatpush1.msra.mxu0 0.0
      %797 = vmatprep.subr.mxu0 0.0
      %798 = vmatpush1.msra.mxu0 0.0
      %799 = vmatprep.subr.mxu0 0.0
      %800 = vmatpush1.msra.mxu0 0.0
      %801 = vmatprep.subr.mxu0 0.0
      %802 = vmatpush1.msra.mxu0 0.0
      %803 = vmatprep.subr.mxu0 0.0
      %804 = vmatpush1.msra.mxu0 0.0
      %805 = vmatprep.subr.mxu0 0.0
      %806 = vmatpush1.msra.mxu0 0.0
      %807 = vmatprep.subr.mxu0 0.0
      %808 = vmatpush1.msra.mxu0 0.0
      %809 = vmatprep.subr.mxu0 0.0
      %810 = vmatpush1.msra.mxu0 0.0
      %811 = vmatprep.subr.mxu0 0.0
      %812 = vmatpush1.msra.mxu0 0.0
      %813 = vmatprep.subr.mxu0 0.0
      %814 = vmatpush1.msra.mxu0 0.0
      %815 = vmatprep.subr.mxu0 0.0
      %816 = vmatpush1.msra.mxu0 0.0
      %817 = vmatprep.subr.mxu0 0.0
      %818 = vmatpush1.msra.mxu0 0.0
      %819 = vmatprep.subr.mxu0 0.0
      %820 = vmatpush1.msra.mxu0 0.0
      %821 = vmatprep.mubr.f32.mxu0 0.0
      %822 = vmatmul.mubr.f32.gmra.mrb[0].mxu0 %v684
      %v823 = vpop.f32.mrb[0].mxu0
      %v824 = vadd.f32 0.0, %v823
      %v825 = vpop.f32.mrb[0].mxu0
      %v826 = vadd.f32 0.0, %v825
      %827 = vdwg.mxu0
      %v828 = vadd.f32 %v564, %v753
      %v829 = vadd.f32 %v566, %v755
      %v830 = vadd.f32 %v635, %v824
      %v831 = vadd.f32 %v637, %v826
      %832 = vrot.lane.b32.xlu0 %v259, 1
      %v833 = vpop.permute.xlu0 %832
      %834 = vrot.lane.b32.xlu0 %v260, 1
      %v835 = vpop.permute.xlu0 %834
      %836 = vrot.lane.b32.xlu0 %v261, 1
      %v837 = vpop.permute.xlu0 %836
      %838 = vrot.lane.b32.xlu0 %v262, 1
      %v839 = vpop.permute.xlu0 %838
      %vm840 = vcmp.lt.s32.totalorder %v272, 1
      %v841 = vsel %vm840, %v837, %v839
      %v842 = vsel %vm840, %v835, %v837
      %v843 = vsel %vm840, %v833, %v835
      %v844 = vsel %vm840, %v839, %v833
      %v845 = vmul.f32 %v844, %v307
      %v846 = vmul.f32 %v843, %v311
      %v847 = vmul.f32 %v842, %v315
      %v848 = vmul.f32 %v841, %v319
      %s849 = scalar_lea.vmem %s2, 24
      %v850 = vld [vmem:[%s849] sm:$0xff]
      %v852 = vsel %vm348, %v850, 0
      %854 = vmatprep.subr.mxu0 %v846
      %855 = vmatpush1.msra.mxu0 %v845
      %856 = vmatprep.subr.mxu0 0.0
      %857 = vmatpush1.msra.mxu0 0.0
      %858 = vmatprep.subr.mxu0 0.0
      %859 = vmatpush1.msra.mxu0 0.0
      %860 = vmatprep.subr.mxu0 0.0
      %861 = vmatpush1.msra.mxu0 0.0
      %862 = vmatprep.subr.mxu0 0.0
      %863 = vmatpush1.msra.mxu0 0.0
      %864 = vmatprep.subr.mxu0 0.0
      %865 = vmatpush1.msra.mxu0 0.0
      %866 = vmatprep.subr.mxu0 0.0
      %867 = vmatpush1.msra.mxu0 0.0
      %868 = vmatprep.subr.mxu0 0.0
      %869 = vmatpush1.msra.mxu0 0.0
      %870 = vmatprep.subr.mxu0 0.0
      %871 = vmatpush1.msra.mxu0 0.0
      %872 = vmatprep.subr.mxu0 0.0
      %873 = vmatpush1.msra.mxu0 0.0
      %874 = vmatprep.subr.mxu0 0.0
      %875 = vmatpush1.msra.mxu0 0.0
      %876 = vmatprep.subr.mxu0 0.0
      %877 = vmatpush1.msra.mxu0 0.0
      %878 = vmatprep.subr.mxu0 0.0
      %879 = vmatpush1.msra.mxu0 0.0
      %880 = vmatprep.subr.mxu0 0.0
      %881 = vmatpush1.msra.mxu0 0.0
      %882 = vmatprep.subr.mxu0 0.0
      %883 = vmatpush1.msra.mxu0 0.0
      %884 = vmatprep.subr.mxu0 0.0
      %885 = vmatpush1.msra.mxu0 0.0
      %886 = vmatprep.subr.mxu0 0.0
      %887 = vmatpush1.msra.mxu0 0.0
      %888 = vmatprep.subr.mxu0 0.0
      %889 = vmatpush1.msra.mxu0 0.0
      %890 = vmatprep.subr.mxu0 0.0
      %891 = vmatpush1.msra.mxu0 0.0
      %892 = vmatprep.subr.mxu0 0.0
      %893 = vmatpush1.msra.mxu0 0.0
      %894 = vmatprep.subr.mxu0 0.0
      %895 = vmatpush1.msra.mxu0 0.0
      %896 = vmatprep.subr.mxu0 0.0
      %897 = vmatpush1.msra.mxu0 0.0
      %898 = vmatprep.subr.mxu0 0.0
      %899 = vmatpush1.msra.mxu0 0.0
      %900 = vmatprep.subr.mxu0 0.0
      %901 = vmatpush1.msra.mxu0 0.0
      %902 = vmatprep.subr.mxu0 0.0
      %903 = vmatpush1.msra.mxu0 0.0
      %904 = vmatprep.subr.mxu0 0.0
      %905 = vmatpush1.msra.mxu0 0.0
      %906 = vmatprep.subr.mxu0 0.0
      %907 = vmatpush1.msra.mxu0 0.0
      %908 = vmatprep.subr.mxu0 0.0
      %909 = vmatpush1.msra.mxu0 0.0
      %910 = vmatprep.subr.mxu0 0.0
      %911 = vmatpush1.msra.mxu0 0.0
      %912 = vmatprep.subr.mxu0 0.0
      %913 = vmatpush1.msra.mxu0 0.0
      %914 = vmatprep.subr.mxu0 0.0
      %915 = vmatpush1.msra.mxu0 0.0
      %916 = vmatprep.subr.mxu0 0.0
      %917 = vmatpush1.msra.mxu0 0.0
      %918 = vmatprep.mubr.f32.mxu0 0.0
      %919 = vmatmul.mubr.f32.gmra.mrb[0].mxu0 %v852
      %v920 = vpop.f32.mrb[0].mxu0
      %v921 = vadd.f32 0.0, %v920
      %v922 = vpop.f32.mrb[0].mxu0
      %v923 = vadd.f32 0.0, %v922
      %924 = vdwg.mxu0
      %925 = vmatprep.subr.mxu0 %v848
      %926 = vmatpush1.msra.mxu0 %v847
      %927 = vmatprep.subr.mxu0 0.0
      %928 = vmatpush1.msra.mxu0 0.0
      %929 = vmatprep.subr.mxu0 0.0
      %930 = vmatpush1.msra.mxu0 0.0
      %931 = vmatprep.subr.mxu0 0.0
      %932 = vmatpush1.msra.mxu0 0.0
      %933 = vmatprep.subr.mxu0 0.0
      %934 = vmatpush1.msra.mxu0 0.0
      %935 = vmatprep.subr.mxu0 0.0
      %936 = vmatpush1.msra.mxu0 0.0
      %937 = vmatprep.subr.mxu0 0.0
      %938 = vmatpush1.msra.mxu0 0.0
      %939 = vmatprep.subr.mxu0 0.0
      %940 = vmatpush1.msra.mxu0 0.0
      %941 = vmatprep.subr.mxu0 0.0
      %942 = vmatpush1.msra.mxu0 0.0
      %943 = vmatprep.subr.mxu0 0.0
      %944 = vmatpush1.msra.mxu0 0.0
      %945 = vmatprep.subr.mxu0 0.0
      %946 = vmatpush1.msra.mxu0 0.0
      %947 = vmatprep.subr.mxu0 0.0
      %948 = vmatpush1.msra.mxu0 0.0
      %949 = vmatprep.subr.mxu0 0.0
      %950 = vmatpush1.msra.mxu0 0.0
      %951 = vmatprep.subr.mxu0 0.0
      %952 = vmatpush1.msra.mxu0 0.0
      %953 = vmatprep.subr.mxu0 0.0
      %954 = vmatpush1.msra.mxu0 0.0
      %955 = vmatprep.subr.mxu0 0.0
      %956 = vmatpush1.msra.mxu0 0.0
      %957 = vmatprep.subr.mxu0 0.0
      %958 = vmatpush1.msra.mxu0 0.0
      %959 = vmatprep.subr.mxu0 0.0
      %960 = vmatpush1.msra.mxu0 0.0
      %961 = vmatprep.subr.mxu0 0.0
      %962 = vmatpush1.msra.mxu0 0.0
      %963 = vmatprep.subr.mxu0 0.0
      %964 = vmatpush1.msra.mxu0 0.0
      %965 = vmatprep.subr.mxu0 0.0
      %966 = vmatpush1.msra.mxu0 0.0
      %967 = vmatprep.subr.mxu0 0.0
      %968 = vmatpush1.msra.mxu0 0.0
      %969 = vmatprep.subr.mxu0 0.0
      %970 = vmatpush1.msra.mxu0 0.0
      %971 = vmatprep.subr.mxu0 0.0
      %972 = vmatpush1.msra.mxu0 0.0
      %973 = vmatprep.subr.mxu0 0.0
      %974 = vmatpush1.msra.mxu0 0.0
      %975 = vmatprep.subr.mxu0 0.0
      %976 = vmatpush1.msra.mxu0 0.0
      %977 = vmatprep.subr.mxu0 0.0
      %978 = vmatpush1.msra.mxu0 0.0
      %979 = vmatprep.subr.mxu0 0.0
      %980 = vmatpush1.msra.mxu0 0.0
      %981 = vmatprep.subr.mxu0 0.0
      %982 = vmatpush1.msra.mxu0 0.0
      %983 = vmatprep.subr.mxu0 0.0
      %984 = vmatpush1.msra.mxu0 0.0
      %985 = vmatprep.subr.mxu0 0.0
      %986 = vmatpush1.msra.mxu0 0.0
      %987 = vmatprep.subr.mxu0 0.0
      %988 = vmatpush1.msra.mxu0 0.0
      %989 = vmatprep.mubr.f32.mxu0 0.0
      %990 = vmatmul.mubr.f32.gmra.mrb[0].mxu0 %v852
      %v991 = vpop.f32.mrb[0].mxu0
      %v992 = vadd.f32 0.0, %v991
      %v993 = vpop.f32.mrb[0].mxu0
      %v994 = vadd.f32 0.0, %v993
      %995 = vdwg.mxu0
      %v996 = vadd.f32 %v828, %v921
      %v997 = vadd.f32 %v829, %v923
      %v998 = vadd.f32 %v830, %v992
      %v999 = vadd.f32 %v831, %v994
      %s1000 = scalar_lea.vmem %s2, 32
      %v1001 = vld [vmem:[%s1000] sm:$0xff]
      %v1003 = vsel %vm348, %v1001, 0
      %1005 = vmatprep.subr.mxu0 %v260
      %1006 = vmatpush1.msra.mxu0 %v259
      %1007 = vmatprep.subr.mxu0 0.0
      %1008 = vmatpush1.msra.mxu0 0.0
      %1009 = vmatprep.subr.mxu0 0.0
      %1010 = vmatpush1.msra.mxu0 0.0
      %1011 = vmatprep.subr.mxu0 0.0
      %1012 = vmatpush1.msra.mxu0 0.0
      %1013 = vmatprep.subr.mxu0 0.0
      %1014 = vmatpush1.msra.mxu0 0.0
      %1015 = vmatprep.subr.mxu0 0.0
      %1016 = vmatpush1.msra.mxu0 0.0
      %1017 = vmatprep.subr.mxu0 0.0
      %1018 = vmatpush1.msra.mxu0 0.0
      %1019 = vmatprep.subr.mxu0 0.0
      %1020 = vmatpush1.msra.mxu0 0.0
      %1021 = vmatprep.subr.mxu0 0.0
      %1022 = vmatpush1.msra.mxu0 0.0
      %1023 = vmatprep.subr.mxu0 0.0
      %1024 = vmatpush1.msra.mxu0 0.0
      %1025 = vmatprep.subr.mxu0 0.0
      %1026 = vmatpush1.msra.mxu0 0.0
      %1027 = vmatprep.subr.mxu0 0.0
      %1028 = vmatpush1.msra.mxu0 0.0
      %1029 = vmatprep.subr.mxu0 0.0
      %1030 = vmatpush1.msra.mxu0 0.0
      %1031 = vmatprep.subr.mxu0 0.0
      %1032 = vmatpush1.msra.mxu0 0.0
      %1033 = vmatprep.subr.mxu0 0.0
      %1034 = vmatpush1.msra.mxu0 0.0
      %1035 = vmatprep.subr.mxu0 0.0
      %1036 = vmatpush1.msra.mxu0 0.0
      %1037 = vmatprep.subr.mxu0 0.0
      %1038 = vmatpush1.msra.mxu0 0.0
      %1039 = vmatprep.subr.mxu0 0.0
      %1040 = vmatpush1.msra.mxu0 0.0
      %1041 = vmatprep.subr.mxu0 0.0
      %1042 = vmatpush1.msra.mxu0 0.0
      %1043 = vmatprep.subr.mxu0 0.0
      %1044 = vmatpush1.msra.mxu0 0.0
      %1045 = vmatprep.subr.mxu0 0.0
      %1046 = vmatpush1.msra.mxu0 0.0
      %1047 = vmatprep.subr.mxu0 0.0
      %1048 = vmatpush1.msra.mxu0 0.0
      %1049 = vmatprep.subr.mxu0 0.0
      %1050 = vmatpush1.msra.mxu0 0.0
      %1051 = vmatprep.subr.mxu0 0.0
      %1052 = vmatpush1.msra.mxu0 0.0
      %1053 = vmatprep.subr.mxu0 0.0
      %1054 = vmatpush1.msra.mxu0 0.0
      %1055 = vmatprep.subr.mxu0 0.0
      %1056 = vmatpush1.msra.mxu0 0.0
      %1057 = vmatprep.subr.mxu0 0.0
      %1058 = vmatpush1.msra.mxu0 0.0
      %1059 = vmatprep.subr.mxu0 0.0
      %1060 = vmatpush1.msra.mxu0 0.0
      %1061 = vmatprep.subr.mxu0 0.0
      %1062 = vmatpush1.msra.mxu0 0.0
      %1063 = vmatprep.subr.mxu0 0.0
      %1064 = vmatpush1.msra.mxu0 0.0
      %1065 = vmatprep.subr.mxu0 0.0
      %1066 = vmatpush1.msra.mxu0 0.0
      %1067 = vmatprep.subr.mxu0 0.0
      %1068 = vmatpush1.msra.mxu0 0.0
      %1069 = vmatprep.mubr.f32.mxu0 0.0
      %1070 = vmatmul.mubr.f32.gmra.mrb[0].mxu0 %v1003
      %v1071 = vpop.f32.mrb[0].mxu0
      %v1072 = vadd.f32 0.0, %v1071
      %v1073 = vpop.f32.mrb[0].mxu0
      %v1074 = vadd.f32 0.0, %v1073
      %1075 = vdwg.mxu0
      %1076 = vmatprep.subr.mxu0 %v262
      %1077 = vmatpush1.msra.mxu0 %v261
      %1078 = vmatprep.subr.mxu0 0.0
      %1079 = vmatpush1.msra.mxu0 0.0
      %1080 = vmatprep.subr.mxu0 0.0
      %1081 = vmatpush1.msra.mxu0 0.0
      %1082 = vmatprep.subr.mxu0 0.0
      %1083 = vmatpush1.msra.mxu0 0.0
      %1084 = vmatprep.subr.mxu0 0.0
      %1085 = vmatpush1.msra.mxu0 0.0
      %1086 = vmatprep.subr.mxu0 0.0
      %1087 = vmatpush1.msra.mxu0 0.0
      %1088 = vmatprep.subr.mxu0 0.0
      %1089 = vmatpush1.msra.mxu0 0.0
      %1090 = vmatprep.subr.mxu0 0.0
      %1091 = vmatpush1.msra.mxu0 0.0
      %1092 = vmatprep.subr.mxu0 0.0
      %1093 = vmatpush1.msra.mxu0 0.0
      %1094 = vmatprep.subr.mxu0 0.0
      %1095 = vmatpush1.msra.mxu0 0.0
      %1096 = vmatprep.subr.mxu0 0.0
      %1097 = vmatpush1.msra.mxu0 0.0
      %1098 = vmatprep.subr.mxu0 0.0
      %1099 = vmatpush1.msra.mxu0 0.0
      %1100 = vmatprep.subr.mxu0 0.0
      %1101 = vmatpush1.msra.mxu0 0.0
      %1102 = vmatprep.subr.mxu0 0.0
      %1103 = vmatpush1.msra.mxu0 0.0
      %1104 = vmatprep.subr.mxu0 0.0
      %1105 = vmatpush1.msra.mxu0 0.0
      %1106 = vmatprep.subr.mxu0 0.0
      %1107 = vmatpush1.msra.mxu0 0.0
      %1108 = vmatprep.subr.mxu0 0.0
      %1109 = vmatpush1.msra.mxu0 0.0
      %1110 = vmatprep.subr.mxu0 0.0
      %1111 = vmatpush1.msra.mxu0 0.0
      %1112 = vmatprep.subr.mxu0 0.0
      %1113 = vmatpush1.msra.mxu0 0.0
      %1114 = vmatprep.subr.mxu0 0.0
      %1115 = vmatpush1.msra.mxu0 0.0
      %1116 = vmatprep.subr.mxu0 0.0
      %1117 = vmatpush1.msra.mxu0 0.0
      %1118 = vmatprep.subr.mxu0 0.0
      %1119 = vmatpush1.msra.mxu0 0.0
      %1120 = vmatprep.subr.mxu0 0.0
      %1121 = vmatpush1.msra.mxu0 0.0
      %1122 = vmatprep.subr.mxu0 0.0
      %1123 = vmatpush1.msra.mxu0 0.0
      %1124 = vmatprep.subr.mxu0 0.0
      %1125 = vmatpush1.msra.mxu0 0.0
      %1126 = vmatprep.subr.mxu0 0.0
      %1127 = vmatpush1.msra.mxu0 0.0
      %1128 = vmatprep.subr.mxu0 0.0
      %1129 = vmatpush1.msra.mxu0 0.0
      %1130 = vmatprep.subr.mxu0 0.0
      %1131 = vmatpush1.msra.mxu0 0.0
      %1132 = vmatprep.subr.mxu0 0.0
      %1133 = vmatpush1.msra.mxu0 0.0
      %1134 = vmatprep.subr.mxu0 0.0
      %1135 = vmatpush1.msra.mxu0 0.0
      %1136 = vmatprep.subr.mxu0 0.0
      %1137 = vmatpush1.msra.mxu0 0.0
      %1138 = vmatprep.subr.mxu0 0.0
      %1139 = vmatpush1.msra.mxu0 0.0
      %1140 = vmatprep.mubr.f32.mxu0 0.0
      %1141 = vmatmul.mubr.f32.gmra.mrb[0].mxu0 %v1003
      %v1142 = vpop.f32.mrb[0].mxu0
      %v1143 = vadd.f32 0.0, %v1142
      %v1144 = vpop.f32.mrb[0].mxu0
      %v1145 = vadd.f32 0.0, %v1144
      %1146 = vdwg.mxu0
      %v1147 = vadd.f32 %v996, %v1072
      %v1148 = vadd.f32 %v997, %v1074
      %v1149 = vadd.f32 %v998, %v1143
      %v1150 = vadd.f32 %v999, %v1145
      %1151 = vrot.lane.b32.xlu0 %v259, 127
      %v1152 = vpop.permute.xlu0 %1151
      %1153 = vrot.lane.b32.xlu0 %v260, 127
      %v1154 = vpop.permute.xlu0 %1153
      %1155 = vrot.lane.b32.xlu0 %v261, 127
      %v1156 = vpop.permute.xlu0 %1155
      %1157 = vrot.lane.b32.xlu0 %v262, 127
      %v1158 = vpop.permute.xlu0 %1157
      %vm1159 = vcmp.lt.s32.totalorder %v272, 127
      %v1160 = vsel %vm1159, %v1156, %v1158
      %v1161 = vsel %vm1159, %v1154, %v1156
      %v1162 = vsel %vm1159, %v1152, %v1154
      %v1163 = vsel %vm1159, %v1158, %v1152
      %v1164 = vmul.f32 %v1162, %v660
      %v1165 = vmul.f32 %v1161, %v664
      %v1166 = vmul.f32 %v1160, %v668
      %v1167 = vmul.f32 %v1163, %v672
      %s1168 = scalar_lea.vmem %s2, 40
      %v1169 = vld [vmem:[%s1168] sm:$0xff]
      %v1171 = vsel %vm348, %v1169, 0
      %1173 = vmatprep.subr.mxu0 %v1165
      %1174 = vmatpush1.msra.mxu0 %v1164
      %1175 = vmatprep.subr.mxu0 0.0
      %1176 = vmatpush1.msra.mxu0 0.0
      %1177 = vmatprep.subr.mxu0 0.0
      %1178 = vmatpush1.msra.mxu0 0.0
      %1179 = vmatprep.subr.mxu0 0.0
      %1180 = vmatpush1.msra.mxu0 0.0
      %1181 = vmatprep.subr.mxu0 0.0
      %1182 = vmatpush1.msra.mxu0 0.0
      %1183 = vmatprep.subr.mxu0 0.0
      %1184 = vmatpush1.msra.mxu0 0.0
      %1185 = vmatprep.subr.mxu0 0.0
      %1186 = vmatpush1.msra.mxu0 0.0
      %1187 = vmatprep.subr.mxu0 0.0
      %1188 = vmatpush1.msra.mxu0 0.0
      %1189 = vmatprep.subr.mxu0 0.0
      %1190 = vmatpush1.msra.mxu0 0.0
      %1191 = vmatprep.subr.mxu0 0.0
      %1192 = vmatpush1.msra.mxu0 0.0
      %1193 = vmatprep.subr.mxu0 0.0
      %1194 = vmatpush1.msra.mxu0 0.0
      %1195 = vmatprep.subr.mxu0 0.0
      %1196 = vmatpush1.msra.mxu0 0.0
      %1197 = vmatprep.subr.mxu0 0.0
      %1198 = vmatpush1.msra.mxu0 0.0
      %1199 = vmatprep.subr.mxu0 0.0
      %1200 = vmatpush1.msra.mxu0 0.0
      %1201 = vmatprep.subr.mxu0 0.0
      %1202 = vmatpush1.msra.mxu0 0.0
      %1203 = vmatprep.subr.mxu0 0.0
      %1204 = vmatpush1.msra.mxu0 0.0
      %1205 = vmatprep.subr.mxu0 0.0
      %1206 = vmatpush1.msra.mxu0 0.0
      %1207 = vmatprep.subr.mxu0 0.0
      %1208 = vmatpush1.msra.mxu0 0.0
      %1209 = vmatprep.subr.mxu0 0.0
      %1210 = vmatpush1.msra.mxu0 0.0
      %1211 = vmatprep.subr.mxu0 0.0
      %1212 = vmatpush1.msra.mxu0 0.0
      %1213 = vmatprep.subr.mxu0 0.0
      %1214 = vmatpush1.msra.mxu0 0.0
      %1215 = vmatprep.subr.mxu0 0.0
      %1216 = vmatpush1.msra.mxu0 0.0
      %1217 = vmatprep.subr.mxu0 0.0
      %1218 = vmatpush1.msra.mxu0 0.0
      %1219 = vmatprep.subr.mxu0 0.0
      %1220 = vmatpush1.msra.mxu0 0.0
      %1221 = vmatprep.subr.mxu0 0.0
      %1222 = vmatpush1.msra.mxu0 0.0
      %1223 = vmatprep.subr.mxu0 0.0
      %1224 = vmatpush1.msra.mxu0 0.0
      %1225 = vmatprep.subr.mxu0 0.0
      %1226 = vmatpush1.msra.mxu0 0.0
      %1227 = vmatprep.subr.mxu0 0.0
      %1228 = vmatpush1.msra.mxu0 0.0
      %1229 = vmatprep.subr.mxu0 0.0
      %1230 = vmatpush1.msra.mxu0 0.0
      %1231 = vmatprep.subr.mxu0 0.0
      %1232 = vmatpush1.msra.mxu0 0.0
      %1233 = vmatprep.subr.mxu0 0.0
      %1234 = vmatpush1.msra.mxu0 0.0
      %1235 = vmatprep.subr.mxu0 0.0
      %1236 = vmatpush1.msra.mxu0 0.0
      %1237 = vmatprep.mubr.f32.mxu0 0.0
      %1238 = vmatmul.mubr.f32.gmra.mrb[0].mxu0 %v1171
      %v1239 = vpop.f32.mrb[0].mxu0
      %v1240 = vadd.f32 0.0, %v1239
      %v1241 = vpop.f32.mrb[0].mxu0
      %v1242 = vadd.f32 0.0, %v1241
      %1243 = vdwg.mxu0
      %1244 = vmatprep.subr.mxu0 %v1167
      %1245 = vmatpush1.msra.mxu0 %v1166
      %1246 = vmatprep.subr.mxu0 0.0
      %1247 = vmatpush1.msra.mxu0 0.0
      %1248 = vmatprep.subr.mxu0 0.0
      %1249 = vmatpush1.msra.mxu0 0.0
      %1250 = vmatprep.subr.mxu0 0.0
      %1251 = vmatpush1.msra.mxu0 0.0
      %1252 = vmatprep.subr.mxu0 0.0
      %1253 = vmatpush1.msra.mxu0 0.0
      %1254 = vmatprep.subr.mxu0 0.0
      %1255 = vmatpush1.msra.mxu0 0.0
      %1256 = vmatprep.subr.mxu0 0.0
      %1257 = vmatpush1.msra.mxu0 0.0
      %1258 = vmatprep.subr.mxu0 0.0
      %1259 = vmatpush1.msra.mxu0 0.0
      %1260 = vmatprep.subr.mxu0 0.0
      %1261 = vmatpush1.msra.mxu0 0.0
      %1262 = vmatprep.subr.mxu0 0.0
      %1263 = vmatpush1.msra.mxu0 0.0
      %1264 = vmatprep.subr.mxu0 0.0
      %1265 = vmatpush1.msra.mxu0 0.0
      %1266 = vmatprep.subr.mxu0 0.0
      %1267 = vmatpush1.msra.mxu0 0.0
      %1268 = vmatprep.subr.mxu0 0.0
      %1269 = vmatpush1.msra.mxu0 0.0
      %1270 = vmatprep.subr.mxu0 0.0
      %1271 = vmatpush1.msra.mxu0 0.0
      %1272 = vmatprep.subr.mxu0 0.0
      %1273 = vmatpush1.msra.mxu0 0.0
      %1274 = vmatprep.subr.mxu0 0.0
      %1275 = vmatpush1.msra.mxu0 0.0
      %1276 = vmatprep.subr.mxu0 0.0
      %1277 = vmatpush1.msra.mxu0 0.0
      %1278 = vmatprep.subr.mxu0 0.0
      %1279 = vmatpush1.msra.mxu0 0.0
      %1280 = vmatprep.subr.mxu0 0.0
      %1281 = vmatpush1.msra.mxu0 0.0
      %1282 = vmatprep.subr.mxu0 0.0
      %1283 = vmatpush1.msra.mxu0 0.0
      %1284 = vmatprep.subr.mxu0 0.0
      %1285 = vmatpush1.msra.mxu0 0.0
      %1286 = vmatprep.subr.mxu0 0.0
      %1287 = vmatpush1.msra.mxu0 0.0
      %1288 = vmatprep.subr.mxu0 0.0
      %1289 = vmatpush1.msra.mxu0 0.0
      %1290 = vmatprep.subr.mxu0 0.0
      %1291 = vmatpush1.msra.mxu0 0.0
      %1292 = vmatprep.subr.mxu0 0.0
      %1293 = vmatpush1.msra.mxu0 0.0
      %1294 = vmatprep.subr.mxu0 0.0
      %1295 = vmatpush1.msra.mxu0 0.0
      %1296 = vmatprep.subr.mxu0 0.0
      %1297 = vmatpush1.msra.mxu0 0.0
      %1298 = vmatprep.subr.mxu0 0.0
      %1299 = vmatpush1.msra.mxu0 0.0
      %1300 = vmatprep.subr.mxu0 0.0
      %1301 = vmatpush1.msra.mxu0 0.0
      %1302 = vmatprep.subr.mxu0 0.0
      %1303 = vmatpush1.msra.mxu0 0.0
      %1304 = vmatprep.subr.mxu0 0.0
      %1305 = vmatpush1.msra.mxu0 0.0
      %1306 = vmatprep.subr.mxu0 0.0
      %1307 = vmatpush1.msra.mxu0 0.0
      %1308 = vmatprep.mubr.f32.mxu0 0.0
      %1309 = vmatmul.mubr.f32.gmra.mrb[0].mxu0 %v1171
      %v1310 = vpop.f32.mrb[0].mxu0
      %v1311 = vadd.f32 0.0, %v1310
      %v1312 = vpop.f32.mrb[0].mxu0
      %v1313 = vadd.f32 0.0, %v1312
      %1314 = vdwg.mxu0
      %v1315 = vadd.f32 %v1147, %v1240
      %v1316 = vadd.f32 %v1148, %v1242
      %v1317 = vadd.f32 %v1149, %v1311
      %v1318 = vadd.f32 %v1150, %v1313
      %1319 = vrot.lane.b32.xlu0 %v259, 113
      %v1320 = vpop.permute.xlu0 %1319
      %1321 = vrot.lane.b32.xlu0 %v260, 113
      %v1322 = vpop.permute.xlu0 %1321
      %1323 = vrot.lane.b32.xlu0 %v261, 113
      %v1324 = vpop.permute.xlu0 %1323
      %1325 = vrot.lane.b32.xlu0 %v262, 113
      %v1326 = vpop.permute.xlu0 %1325
      %vm1327 = vcmp.lt.s32.totalorder %v272, 113
      %v1328 = vsel %vm1327, %v1324, %v1326
      %v1329 = vsel %vm1327, %v1322, %v1324
      %v1330 = vsel %vm1327, %v1320, %v1322
      %v1331 = vsel %vm1327, %v1326, %v1320
      %v1333 = vlaneseq
      %v1334 = vshrl.u32 %v1333, 7
      %v1335 = vsub.s32 0, %v1334
      %v1336 = vrot.slane %v254, %v1335
      %v1337 = vlaneseq
      %v1338 = vshrl.u32 %v1337, 7
      %v1339 = vsub.s32 1, %v1338
      %v1340 = vrot.slane %v254, %v1339
      %v1341 = vlaneseq
      %v1342 = vshrl.u32 %v1341, 7
      %v1343 = vsub.s32 2, %v1342
      %v1344 = vrot.slane %v254, %v1343
      %v1345 = vlaneseq
      %v1346 = vshrl.u32 %v1345, 7
      %v1347 = vsub.s32 3, %v1346
      %v1348 = vrot.slane %v254, %v1347
      %v1353 = vmul.f32 %v1330, %v1336
      %v1354 = vmul.f32 %v1329, %v1340
      %v1355 = vmul.f32 %v1328, %v1344
      %v1356 = vmul.f32 %v1331, %v1348
      %v1357 = vmul.f32 %v1353, %v307
      %v1358 = vmul.f32 %v1354, %v311
      %v1359 = vmul.f32 %v1355, %v315
      %v1360 = vmul.f32 %v1356, %v319
      %s1361 = scalar_lea.vmem %s2, 48
      %v1362 = vld [vmem:[%s1361] sm:$0xff]
      %v1364 = vsel %vm348, %v1362, 0
      %1366 = vmatprep.subr.mxu0 %v1358
      %1367 = vmatpush1.msra.mxu0 %v1357
      %1368 = vmatprep.subr.mxu0 0.0
      %1369 = vmatpush1.msra.mxu0 0.0
      %1370 = vmatprep.subr.mxu0 0.0
      %1371 = vmatpush1.msra.mxu0 0.0
      %1372 = vmatprep.subr.mxu0 0.0
      %1373 = vmatpush1.msra.mxu0 0.0
      %1374 = vmatprep.subr.mxu0 0.0
      %1375 = vmatpush1.msra.mxu0 0.0
      %1376 = vmatprep.subr.mxu0 0.0
      %1377 = vmatpush1.msra.mxu0 0.0
      %1378 = vmatprep.subr.mxu0 0.0
      %1379 = vmatpush1.msra.mxu0 0.0
      %1380 = vmatprep.subr.mxu0 0.0
      %1381 = vmatpush1.msra.mxu0 0.0
      %1382 = vmatprep.subr.mxu0 0.0
      %1383 = vmatpush1.msra.mxu0 0.0
      %1384 = vmatprep.subr.mxu0 0.0
      %1385 = vmatpush1.msra.mxu0 0.0
      %1386 = vmatprep.subr.mxu0 0.0
      %1387 = vmatpush1.msra.mxu0 0.0
      %1388 = vmatprep.subr.mxu0 0.0
      %1389 = vmatpush1.msra.mxu0 0.0
      %1390 = vmatprep.subr.mxu0 0.0
      %1391 = vmatpush1.msra.mxu0 0.0
      %1392 = vmatprep.subr.mxu0 0.0
      %1393 = vmatpush1.msra.mxu0 0.0
      %1394 = vmatprep.subr.mxu0 0.0
      %1395 = vmatpush1.msra.mxu0 0.0
      %1396 = vmatprep.subr.mxu0 0.0
      %1397 = vmatpush1.msra.mxu0 0.0
      %1398 = vmatprep.subr.mxu0 0.0
      %1399 = vmatpush1.msra.mxu0 0.0
      %1400 = vmatprep.subr.mxu0 0.0
      %1401 = vmatpush1.msra.mxu0 0.0
      %1402 = vmatprep.subr.mxu0 0.0
      %1403 = vmatpush1.msra.mxu0 0.0
      %1404 = vmatprep.subr.mxu0 0.0
      %1405 = vmatpush1.msra.mxu0 0.0
      %1406 = vmatprep.subr.mxu0 0.0
      %1407 = vmatpush1.msra.mxu0 0.0
      %1408 = vmatprep.subr.mxu0 0.0
      %1409 = vmatpush1.msra.mxu0 0.0
      %1410 = vmatprep.subr.mxu0 0.0
      %1411 = vmatpush1.msra.mxu0 0.0
      %1412 = vmatprep.subr.mxu0 0.0
      %1413 = vmatpush1.msra.mxu0 0.0
      %1414 = vmatprep.subr.mxu0 0.0
      %1415 = vmatpush1.msra.mxu0 0.0
      %1416 = vmatprep.subr.mxu0 0.0
      %1417 = vmatpush1.msra.mxu0 0.0
      %1418 = vmatprep.subr.mxu0 0.0
      %1419 = vmatpush1.msra.mxu0 0.0
      %1420 = vmatprep.subr.mxu0 0.0
      %1421 = vmatpush1.msra.mxu0 0.0
      %1422 = vmatprep.subr.mxu0 0.0
      %1423 = vmatpush1.msra.mxu0 0.0
      %1424 = vmatprep.subr.mxu0 0.0
      %1425 = vmatpush1.msra.mxu0 0.0
      %1426 = vmatprep.subr.mxu0 0.0
      %1427 = vmatpush1.msra.mxu0 0.0
      %1428 = vmatprep.subr.mxu0 0.0
      %1429 = vmatpush1.msra.mxu0 0.0
      %1430 = vmatprep.mubr.f32.mxu0 0.0
      %1431 = vmatmul.mubr.f32.gmra.mrb[0].mxu0 %v1364
      %v1432 = vpop.f32.mrb[0].mxu0
      %v1433 = vadd.f32 0.0, %v1432
      %v1434 = vpop.f32.mrb[0].mxu0
      %v1435 = vadd.f32 0.0, %v1434
      %1436 = vdwg.mxu0
      %1437 = vmatprep.subr.mxu0 %v1360
      %1438 = vmatpush1.msra.mxu0 %v1359
      %1439 = vmatprep.subr.mxu0 0.0
      %1440 = vmatpush1.msra.mxu0 0.0
      %1441 = vmatprep.subr.mxu0 0.0
      %1442 = vmatpush1.msra.mxu0 0.0
      %1443 = vmatprep.subr.mxu0 0.0
      %1444 = vmatpush1.msra.mxu0 0.0
      %1445 = vmatprep.subr.mxu0 0.0
      %1446 = vmatpush1.msra.mxu0 0.0
      %1447 = vmatprep.subr.mxu0 0.0
      %1448 = vmatpush1.msra.mxu0 0.0
      %1449 = vmatprep.subr.mxu0 0.0
      %1450 = vmatpush1.msra.mxu0 0.0
      %1451 = vmatprep.subr.mxu0 0.0
      %1452 = vmatpush1.msra.mxu0 0.0
      %1453 = vmatprep.subr.mxu0 0.0
      %1454 = vmatpush1.msra.mxu0 0.0
      %1455 = vmatprep.subr.mxu0 0.0
      %1456 = vmatpush1.msra.mxu0 0.0
      %1457 = vmatprep.subr.mxu0 0.0
      %1458 = vmatpush1.msra.mxu0 0.0
      %1459 = vmatprep.subr.mxu0 0.0
      %1460 = vmatpush1.msra.mxu0 0.0
      %1461 = vmatprep.subr.mxu0 0.0
      %1462 = vmatpush1.msra.mxu0 0.0
      %1463 = vmatprep.subr.mxu0 0.0
      %1464 = vmatpush1.msra.mxu0 0.0
      %1465 = vmatprep.subr.mxu0 0.0
      %1466 = vmatpush1.msra.mxu0 0.0
      %1467 = vmatprep.subr.mxu0 0.0
      %1468 = vmatpush1.msra.mxu0 0.0
      %1469 = vmatprep.subr.mxu0 0.0
      %1470 = vmatpush1.msra.mxu0 0.0
      %1471 = vmatprep.subr.mxu0 0.0
      %1472 = vmatpush1.msra.mxu0 0.0
      %1473 = vmatprep.subr.mxu0 0.0
      %1474 = vmatpush1.msra.mxu0 0.0
      %1475 = vmatprep.subr.mxu0 0.0
      %1476 = vmatpush1.msra.mxu0 0.0
      %1477 = vmatprep.subr.mxu0 0.0
      %1478 = vmatpush1.msra.mxu0 0.0
      %1479 = vmatprep.subr.mxu0 0.0
      %1480 = vmatpush1.msra.mxu0 0.0
      %1481 = vmatprep.subr.mxu0 0.0
      %1482 = vmatpush1.msra.mxu0 0.0
      %1483 = vmatprep.subr.mxu0 0.0
      %1484 = vmatpush1.msra.mxu0 0.0
      %1485 = vmatprep.subr.mxu0 0.0
      %1486 = vmatpush1.msra.mxu0 0.0
      %1487 = vmatprep.subr.mxu0 0.0
      %1488 = vmatpush1.msra.mxu0 0.0
      %1489 = vmatprep.subr.mxu0 0.0
      %1490 = vmatpush1.msra.mxu0 0.0
      %1491 = vmatprep.subr.mxu0 0.0
      %1492 = vmatpush1.msra.mxu0 0.0
      %1493 = vmatprep.subr.mxu0 0.0
      %1494 = vmatpush1.msra.mxu0 0.0
      %1495 = vmatprep.subr.mxu0 0.0
      %1496 = vmatpush1.msra.mxu0 0.0
      %1497 = vmatprep.subr.mxu0 0.0
      %1498 = vmatpush1.msra.mxu0 0.0
      %1499 = vmatprep.subr.mxu0 0.0
      %1500 = vmatpush1.msra.mxu0 0.0
      %1501 = vmatprep.mubr.f32.mxu0 0.0
      %1502 = vmatmul.mubr.f32.gmra.mrb[0].mxu0 %v1364
      %v1503 = vpop.f32.mrb[0].mxu0
      %v1504 = vadd.f32 0.0, %v1503
      %v1505 = vpop.f32.mrb[0].mxu0
      %v1506 = vadd.f32 0.0, %v1505
      %1507 = vdwg.mxu0
      %v1508 = vadd.f32 %v1315, %v1433
      %v1509 = vadd.f32 %v1316, %v1435
      %v1510 = vadd.f32 %v1317, %v1504
      %v1511 = vadd.f32 %v1318, %v1506
      %1512 = vrot.lane.b32.xlu0 %v259, 112
      %v1513 = vpop.permute.xlu0 %1512
      %1514 = vrot.lane.b32.xlu0 %v260, 112
      %v1515 = vpop.permute.xlu0 %1514
      %1516 = vrot.lane.b32.xlu0 %v261, 112
      %v1517 = vpop.permute.xlu0 %1516
      %1518 = vrot.lane.b32.xlu0 %v262, 112
      %v1519 = vpop.permute.xlu0 %1518
      %vm1520 = vcmp.lt.s32.totalorder %v272, 112
      %v1521 = vsel %vm1520, %v1517, %v1519
      %v1522 = vsel %vm1520, %v1515, %v1517
      %v1523 = vsel %vm1520, %v1513, %v1515
      %v1524 = vsel %vm1520, %v1519, %v1513
      %v1525 = vmul.f32 %v1523, %v1336
      %v1526 = vmul.f32 %v1522, %v1340
      %v1527 = vmul.f32 %v1521, %v1344
      %v1528 = vmul.f32 %v1524, %v1348
      %s1529 = scalar_lea.vmem %s2, 56
      %v1530 = vld [vmem:[%s1529] sm:$0xff]
      %v1532 = vsel %vm348, %v1530, 0
      %1534 = vmatprep.subr.mxu0 %v1526
      %1535 = vmatpush1.msra.mxu0 %v1525
      %1536 = vmatprep.subr.mxu0 0.0
      %1537 = vmatpush1.msra.mxu0 0.0
      %1538 = vmatprep.subr.mxu0 0.0
      %1539 = vmatpush1.msra.mxu0 0.0
      %1540 = vmatprep.subr.mxu0 0.0
      %1541 = vmatpush1.msra.mxu0 0.0
      %1542 = vmatprep.subr.mxu0 0.0
      %1543 = vmatpush1.msra.mxu0 0.0
      %1544 = vmatprep.subr.mxu0 0.0
      %1545 = vmatpush1.msra.mxu0 0.0
      %1546 = vmatprep.subr.mxu0 0.0
      %1547 = vmatpush1.msra.mxu0 0.0
      %1548 = vmatprep.subr.mxu0 0.0
      %1549 = vmatpush1.msra.mxu0 0.0
      %1550 = vmatprep.subr.mxu0 0.0
      %1551 = vmatpush1.msra.mxu0 0.0
      %1552 = vmatprep.subr.mxu0 0.0
      %1553 = vmatpush1.msra.mxu0 0.0
      %1554 = vmatprep.subr.mxu0 0.0
      %1555 = vmatpush1.msra.mxu0 0.0
      %1556 = vmatprep.subr.mxu0 0.0
      %1557 = vmatpush1.msra.mxu0 0.0
      %1558 = vmatprep.subr.mxu0 0.0
      %1559 = vmatpush1.msra.mxu0 0.0
      %1560 = vmatprep.subr.mxu0 0.0
      %1561 = vmatpush1.msra.mxu0 0.0
      %1562 = vmatprep.subr.mxu0 0.0
      %1563 = vmatpush1.msra.mxu0 0.0
      %1564 = vmatprep.subr.mxu0 0.0
      %1565 = vmatpush1.msra.mxu0 0.0
      %1566 = vmatprep.subr.mxu0 0.0
      %1567 = vmatpush1.msra.mxu0 0.0
      %1568 = vmatprep.subr.mxu0 0.0
      %1569 = vmatpush1.msra.mxu0 0.0
      %1570 = vmatprep.subr.mxu0 0.0
      %1571 = vmatpush1.msra.mxu0 0.0
      %1572 = vmatprep.subr.mxu0 0.0
      %1573 = vmatpush1.msra.mxu0 0.0
      %1574 = vmatprep.subr.mxu0 0.0
      %1575 = vmatpush1.msra.mxu0 0.0
      %1576 = vmatprep.subr.mxu0 0.0
      %1577 = vmatpush1.msra.mxu0 0.0
      %1578 = vmatprep.subr.mxu0 0.0
      %1579 = vmatpush1.msra.mxu0 0.0
      %1580 = vmatprep.subr.mxu0 0.0
      %1581 = vmatpush1.msra.mxu0 0.0
      %1582 = vmatprep.subr.mxu0 0.0
      %1583 = vmatpush1.msra.mxu0 0.0
      %1584 = vmatprep.subr.mxu0 0.0
      %1585 = vmatpush1.msra.mxu0 0.0
      %1586 = vmatprep.subr.mxu0 0.0
      %1587 = vmatpush1.msra.mxu0 0.0
      %1588 = vmatprep.subr.mxu0 0.0
      %1589 = vmatpush1.msra.mxu0 0.0
      %1590 = vmatprep.subr.mxu0 0.0
      %1591 = vmatpush1.msra.mxu0 0.0
      %1592 = vmatprep.subr.mxu0 0.0
      %1593 = vmatpush1.msra.mxu0 0.0
      %1594 = vmatprep.subr.mxu0 0.0
      %1595 = vmatpush1.msra.mxu0 0.0
      %1596 = vmatprep.subr.mxu0 0.0
      %1597 = vmatpush1.msra.mxu0 0.0
      %1598 = vmatprep.mubr.f32.mxu0 0.0
      %1599 = vmatmul.mubr.f32.gmra.mrb[0].mxu0 %v1532
      %v1600 = vpop.f32.mrb[0].mxu0
      %v1601 = vadd.f32 0.0, %v1600
      %v1602 = vpop.f32.mrb[0].mxu0
      %v1603 = vadd.f32 0.0, %v1602
      %1604 = vdwg.mxu0
      %1605 = vmatprep.subr.mxu0 %v1528
      %1606 = vmatpush1.msra.mxu0 %v1527
      %1607 = vmatprep.subr.mxu0 0.0
      %1608 = vmatpush1.msra.mxu0 0.0
      %1609 = vmatprep.subr.mxu0 0.0
      %1610 = vmatpush1.msra.mxu0 0.0
      %1611 = vmatprep.subr.mxu0 0.0
      %1612 = vmatpush1.msra.mxu0 0.0
      %1613 = vmatprep.subr.mxu0 0.0
      %1614 = vmatpush1.msra.mxu0 0.0
      %1615 = vmatprep.subr.mxu0 0.0
      %1616 = vmatpush1.msra.mxu0 0.0
      %1617 = vmatprep.subr.mxu0 0.0
      %1618 = vmatpush1.msra.mxu0 0.0
      %1619 = vmatprep.subr.mxu0 0.0
      %1620 = vmatpush1.msra.mxu0 0.0
      %1621 = vmatprep.subr.mxu0 0.0
      %1622 = vmatpush1.msra.mxu0 0.0
      %1623 = vmatprep.subr.mxu0 0.0
      %1624 = vmatpush1.msra.mxu0 0.0
      %1625 = vmatprep.subr.mxu0 0.0
      %1626 = vmatpush1.msra.mxu0 0.0
      %1627 = vmatprep.subr.mxu0 0.0
      %1628 = vmatpush1.msra.mxu0 0.0
      %1629 = vmatprep.subr.mxu0 0.0
      %1630 = vmatpush1.msra.mxu0 0.0
      %1631 = vmatprep.subr.mxu0 0.0
      %1632 = vmatpush1.msra.mxu0 0.0
      %1633 = vmatprep.subr.mxu0 0.0
      %1634 = vmatpush1.msra.mxu0 0.0
      %1635 = vmatprep.subr.mxu0 0.0
      %1636 = vmatpush1.msra.mxu0 0.0
      %1637 = vmatprep.subr.mxu0 0.0
      %1638 = vmatpush1.msra.mxu0 0.0
      %1639 = vmatprep.subr.mxu0 0.0
      %1640 = vmatpush1.msra.mxu0 0.0
      %1641 = vmatprep.subr.mxu0 0.0
      %1642 = vmatpush1.msra.mxu0 0.0
      %1643 = vmatprep.subr.mxu0 0.0
      %1644 = vmatpush1.msra.mxu0 0.0
      %1645 = vmatprep.subr.mxu0 0.0
      %1646 = vmatpush1.msra.mxu0 0.0
      %1647 = vmatprep.subr.mxu0 0.0
      %1648 = vmatpush1.msra.mxu0 0.0
      %1649 = vmatprep.subr.mxu0 0.0
      %1650 = vmatpush1.msra.mxu0 0.0
      %1651 = vmatprep.subr.mxu0 0.0
      %1652 = vmatpush1.msra.mxu0 0.0
      %1653 = vmatprep.subr.mxu0 0.0
      %1654 = vmatpush1.msra.mxu0 0.0
      %1655 = vmatprep.subr.mxu0 0.0
      %1656 = vmatpush1.msra.mxu0 0.0
      %1657 = vmatprep.subr.mxu0 0.0
      %1658 = vmatpush1.msra.mxu0 0.0
      %1659 = vmatprep.subr.mxu0 0.0
      %1660 = vmatpush1.msra.mxu0 0.0
      %1661 = vmatprep.subr.mxu0 0.0
      %1662 = vmatpush1.msra.mxu0 0.0
      %1663 = vmatprep.subr.mxu0 0.0
      %1664 = vmatpush1.msra.mxu0 0.0
      %1665 = vmatprep.subr.mxu0 0.0
      %1666 = vmatpush1.msra.mxu0 0.0
      %1667 = vmatprep.subr.mxu0 0.0
      %1668 = vmatpush1.msra.mxu0 0.0
      %1669 = vmatprep.mubr.f32.mxu0 0.0
      %1670 = vmatmul.mubr.f32.gmra.mrb[0].mxu0 %v1532
      %v1671 = vpop.f32.mrb[0].mxu0
      %v1672 = vadd.f32 0.0, %v1671
      %v1673 = vpop.f32.mrb[0].mxu0
      %v1674 = vadd.f32 0.0, %v1673
      %1675 = vdwg.mxu0
      %v1676 = vadd.f32 %v1508, %v1601
      %v1677 = vadd.f32 %v1509, %v1603
      %v1678 = vadd.f32 %v1510, %v1672
      %v1679 = vadd.f32 %v1511, %v1674
      %1680 = vrot.lane.b32.xlu0 %v259, 111
      %v1681 = vpop.permute.xlu0 %1680
      %1682 = vrot.lane.b32.xlu0 %v260, 111
      %v1683 = vpop.permute.xlu0 %1682
      %1684 = vrot.lane.b32.xlu0 %v261, 111
      %v1685 = vpop.permute.xlu0 %1684
      %1686 = vrot.lane.b32.xlu0 %v262, 111
      %v1687 = vpop.permute.xlu0 %1686
      %vm1688 = vcmp.lt.s32.totalorder %v272, 111
      %v1689 = vsel %vm1688, %v1685, %v1687
      %v1690 = vsel %vm1688, %v1683, %v1685
      %v1691 = vsel %vm1688, %v1681, %v1683
      %v1692 = vsel %vm1688, %v1687, %v1681
      %v1693 = vmul.f32 %v1691, %v1336
      %v1694 = vmul.f32 %v1690, %v1340
      %v1695 = vmul.f32 %v1689, %v1344
      %v1696 = vmul.f32 %v1692, %v1348
      %v1697 = vmul.f32 %v1693, %v660
      %v1698 = vmul.f32 %v1694, %v664
      %v1699 = vmul.f32 %v1695, %v668
      %v1700 = vmul.f32 %v1696, %v672
      %s1701 = scalar_lea.vmem %s2, 64
      %v1702 = vld [vmem:[%s1701] sm:$0xff]
      %v1704 = vsel %vm348, %v1702, 0
      %1706 = vmatprep.subr.mxu0 %v1698
      %1707 = vmatpush1.msra.mxu0 %v1697
      %1708 = vmatprep.subr.mxu0 0.0
      %1709 = vmatpush1.msra.mxu0 0.0
      %1710 = vmatprep.subr.mxu0 0.0
      %1711 = vmatpush1.msra.mxu0 0.0
      %1712 = vmatprep.subr.mxu0 0.0
      %1713 = vmatpush1.msra.mxu0 0.0
      %1714 = vmatprep.subr.mxu0 0.0
      %1715 = vmatpush1.msra.mxu0 0.0
      %1716 = vmatprep.subr.mxu0 0.0
      %1717 = vmatpush1.msra.mxu0 0.0
      %1718 = vmatprep.subr.mxu0 0.0
      %1719 = vmatpush1.msra.mxu0 0.0
      %1720 = vmatprep.subr.mxu0 0.0
      %1721 = vmatpush1.msra.mxu0 0.0
      %1722 = vmatprep.subr.mxu0 0.0
      %1723 = vmatpush1.msra.mxu0 0.0
      %1724 = vmatprep.subr.mxu0 0.0
      %1725 = vmatpush1.msra.mxu0 0.0
      %1726 = vmatprep.subr.mxu0 0.0
      %1727 = vmatpush1.msra.mxu0 0.0
      %1728 = vmatprep.subr.mxu0 0.0
      %1729 = vmatpush1.msra.mxu0 0.0
      %1730 = vmatprep.subr.mxu0 0.0
      %1731 = vmatpush1.msra.mxu0 0.0
      %1732 = vmatprep.subr.mxu0 0.0
      %1733 = vmatpush1.msra.mxu0 0.0
      %1734 = vmatprep.subr.mxu0 0.0
      %1735 = vmatpush1.msra.mxu0 0.0
      %1736 = vmatprep.subr.mxu0 0.0
      %1737 = vmatpush1.msra.mxu0 0.0
      %1738 = vmatprep.subr.mxu0 0.0
      %1739 = vmatpush1.msra.mxu0 0.0
      %1740 = vmatprep.subr.mxu0 0.0
      %1741 = vmatpush1.msra.mxu0 0.0
      %1742 = vmatprep.subr.mxu0 0.0
      %1743 = vmatpush1.msra.mxu0 0.0
      %1744 = vmatprep.subr.mxu0 0.0
      %1745 = vmatpush1.msra.mxu0 0.0
      %1746 = vmatprep.subr.mxu0 0.0
      %1747 = vmatpush1.msra.mxu0 0.0
      %1748 = vmatprep.subr.mxu0 0.0
      %1749 = vmatpush1.msra.mxu0 0.0
      %1750 = vmatprep.subr.mxu0 0.0
      %1751 = vmatpush1.msra.mxu0 0.0
      %1752 = vmatprep.subr.mxu0 0.0
      %1753 = vmatpush1.msra.mxu0 0.0
      %1754 = vmatprep.subr.mxu0 0.0
      %1755 = vmatpush1.msra.mxu0 0.0
      %1756 = vmatprep.subr.mxu0 0.0
      %1757 = vmatpush1.msra.mxu0 0.0
      %1758 = vmatprep.subr.mxu0 0.0
      %1759 = vmatpush1.msra.mxu0 0.0
      %1760 = vmatprep.subr.mxu0 0.0
      %1761 = vmatpush1.msra.mxu0 0.0
      %1762 = vmatprep.subr.mxu0 0.0
      %1763 = vmatpush1.msra.mxu0 0.0
      %1764 = vmatprep.subr.mxu0 0.0
      %1765 = vmatpush1.msra.mxu0 0.0
      %1766 = vmatprep.subr.mxu0 0.0
      %1767 = vmatpush1.msra.mxu0 0.0
      %1768 = vmatprep.subr.mxu0 0.0
      %1769 = vmatpush1.msra.mxu0 0.0
      %1770 = vmatprep.mubr.f32.mxu0 0.0
      %1771 = vmatmul.mubr.f32.gmra.mrb[0].mxu0 %v1704
      %v1772 = vpop.f32.mrb[0].mxu0
      %v1773 = vadd.f32 0.0, %v1772
      %v1774 = vpop.f32.mrb[0].mxu0
      %v1775 = vadd.f32 0.0, %v1774
      %1776 = vdwg.mxu0
      %1777 = vmatprep.subr.mxu0 %v1700
      %1778 = vmatpush1.msra.mxu0 %v1699
      %1779 = vmatprep.subr.mxu0 0.0
      %1780 = vmatpush1.msra.mxu0 0.0
      %1781 = vmatprep.subr.mxu0 0.0
      %1782 = vmatpush1.msra.mxu0 0.0
      %1783 = vmatprep.subr.mxu0 0.0
      %1784 = vmatpush1.msra.mxu0 0.0
      %1785 = vmatprep.subr.mxu0 0.0
      %1786 = vmatpush1.msra.mxu0 0.0
      %1787 = vmatprep.subr.mxu0 0.0
      %1788 = vmatpush1.msra.mxu0 0.0
      %1789 = vmatprep.subr.mxu0 0.0
      %1790 = vmatpush1.msra.mxu0 0.0
      %1791 = vmatprep.subr.mxu0 0.0
      %1792 = vmatpush1.msra.mxu0 0.0
      %1793 = vmatprep.subr.mxu0 0.0
      %1794 = vmatpush1.msra.mxu0 0.0
      %1795 = vmatprep.subr.mxu0 0.0
      %1796 = vmatpush1.msra.mxu0 0.0
      %1797 = vmatprep.subr.mxu0 0.0
      %1798 = vmatpush1.msra.mxu0 0.0
      %1799 = vmatprep.subr.mxu0 0.0
      %1800 = vmatpush1.msra.mxu0 0.0
      %1801 = vmatprep.subr.mxu0 0.0
      %1802 = vmatpush1.msra.mxu0 0.0
      %1803 = vmatprep.subr.mxu0 0.0
      %1804 = vmatpush1.msra.mxu0 0.0
      %1805 = vmatprep.subr.mxu0 0.0
      %1806 = vmatpush1.msra.mxu0 0.0
      %1807 = vmatprep.subr.mxu0 0.0
      %1808 = vmatpush1.msra.mxu0 0.0
      %1809 = vmatprep.subr.mxu0 0.0
      %1810 = vmatpush1.msra.mxu0 0.0
      %1811 = vmatprep.subr.mxu0 0.0
      %1812 = vmatpush1.msra.mxu0 0.0
      %1813 = vmatprep.subr.mxu0 0.0
      %1814 = vmatpush1.msra.mxu0 0.0
      %1815 = vmatprep.subr.mxu0 0.0
      %1816 = vmatpush1.msra.mxu0 0.0
      %1817 = vmatprep.subr.mxu0 0.0
      %1818 = vmatpush1.msra.mxu0 0.0
      %1819 = vmatprep.subr.mxu0 0.0
      %1820 = vmatpush1.msra.mxu0 0.0
      %1821 = vmatprep.subr.mxu0 0.0
      %1822 = vmatpush1.msra.mxu0 0.0
      %1823 = vmatprep.subr.mxu0 0.0
      %1824 = vmatpush1.msra.mxu0 0.0
      %1825 = vmatprep.subr.mxu0 0.0
      %1826 = vmatpush1.msra.mxu0 0.0
      %1827 = vmatprep.subr.mxu0 0.0
      %1828 = vmatpush1.msra.mxu0 0.0
      %1829 = vmatprep.subr.mxu0 0.0
      %1830 = vmatpush1.msra.mxu0 0.0
      %1831 = vmatprep.subr.mxu0 0.0
      %1832 = vmatpush1.msra.mxu0 0.0
      %1833 = vmatprep.subr.mxu0 0.0
      %1834 = vmatpush1.msra.mxu0 0.0
      %1835 = vmatprep.subr.mxu0 0.0
      %1836 = vmatpush1.msra.mxu0 0.0
      %1837 = vmatprep.subr.mxu0 0.0
      %1838 = vmatpush1.msra.mxu0 0.0
      %1839 = vmatprep.subr.mxu0 0.0
      %1840 = vmatpush1.msra.mxu0 0.0
      %1841 = vmatprep.mubr.f32.mxu0 0.0
      %1842 = vmatmul.mubr.f32.gmra.mrb[0].mxu0 %v1704
      %v1843 = vpop.f32.mrb[0].mxu0
      %v1844 = vadd.f32 0.0, %v1843
      %v1845 = vpop.f32.mrb[0].mxu0
      %v1846 = vadd.f32 0.0, %v1845
      %1847 = vdwg.mxu0
      %v1848 = vadd.f32 %v1676, %v1773
      %v1849 = vadd.f32 %v1677, %v1775
      %v1850 = vadd.f32 %v1678, %v1844
      %v1851 = vadd.f32 %v1679, %v1846
      %v1852 = vld [vmem:[%s3] sm:$0xff]
      %1854 = vset.pattern.permute.xlu0 0
      %1855 = vperm.xlu0 %1854, %v1852
      %v1856 = vpop.permute.xlu0 %1855
      %v1858 = vadd.f32 %v1848, %v1856
      %v1859 = vadd.f32 %v1849, %v1856
      %v1860 = vadd.f32 %v1850, %v1856
      %v1861 = vadd.f32 %v1851, %v1856
      %v1862 = vmax.f32 %v1858, 0.0
      %v1863 = vmax.f32 %v1859, 0.0
      %v1864 = vmax.f32 %v1860, 0.0
      %v1865 = vmax.f32 %v1861, 0.0
      %1866 = vrot.lane.b32.xlu0 %v1862, 17
      %v1867 = vpop.permute.xlu0 %1866
      %1868 = vrot.lane.b32.xlu0 %v1863, 17
      %v1869 = vpop.permute.xlu0 %1868
      %1870 = vrot.lane.b32.xlu0 %v1864, 17
      %v1871 = vpop.permute.xlu0 %1870
      %1872 = vrot.lane.b32.xlu0 %v1865, 17
      %v1873 = vpop.permute.xlu0 %1872
      %v1874 = vsel %vm273, %v1871, %v1873
      %v1875 = vsel %vm273, %v1869, %v1871
      %v1876 = vsel %vm273, %v1867, %v1869
      %v1877 = vsel %vm273, %v1873, %v1867
      %v1878 = vmul.f32 %v1877, %v282
      %v1879 = vmul.f32 %v1876, %v286
      %v1880 = vmul.f32 %v1875, %v290
      %v1881 = vmul.f32 %v1874, %v294
      %v1882 = vmul.f32 %v1878, %v307
      %v1883 = vmul.f32 %v1879, %v311
      %v1884 = vmul.f32 %v1880, %v315
      %v1885 = vmul.f32 %v1881, %v319
      %s1886 = scalar_lea.vmem %s2, 72
      %v1887 = vld [vmem:[%s1886] sm:$0xff]
      %1888 = vrot.lane.b32.xlu0 %v1862, 16
      %v1889 = vpop.permute.xlu0 %1888
      %1890 = vrot.lane.b32.xlu0 %v1863, 16
      %v1891 = vpop.permute.xlu0 %1890
      %1892 = vrot.lane.b32.xlu0 %v1864, 16
      %v1893 = vpop.permute.xlu0 %1892
      %1894 = vrot.lane.b32.xlu0 %v1865, 16
      %v1895 = vpop.permute.xlu0 %1894
      %v1896 = vsel %vm337, %v1893, %v1895
      %v1897 = vsel %vm337, %v1891, %v1893
      %v1898 = vsel %vm337, %v1889, %v1891
      %v1899 = vsel %vm337, %v1895, %v1889
      %v1900 = vmul.f32 %v1899, %v282
      %v1901 = vmul.f32 %v1898, %v286
      %v1902 = vmul.f32 %v1897, %v290
      %v1903 = vmul.f32 %v1896, %v294
      %s1904 = scalar_lea.vmem %s2, 80
      %v1905 = vld [vmem:[%s1904] sm:$0xff]
      %v1907 = vsel %vm348, %v1905, 0
      %1909 = vmatprep.subr.mxu0 %v1901
      %1910 = vmatpush1.msra.mxu0 %v1900
      %1911 = vmatprep.subr.mxu0 0.0
      %1912 = vmatpush1.msra.mxu0 0.0
      %1913 = vmatprep.subr.mxu0 0.0
      %1914 = vmatpush1.msra.mxu0 0.0
      %1915 = vmatprep.subr.mxu0 0.0
      %1916 = vmatpush1.msra.mxu0 0.0
      %1917 = vmatprep.subr.mxu0 0.0
      %1918 = vmatpush1.msra.mxu0 0.0
      %1919 = vmatprep.subr.mxu0 0.0
      %1920 = vmatpush1.msra.mxu0 0.0
      %1921 = vmatprep.subr.mxu0 0.0
      %1922 = vmatpush1.msra.mxu0 0.0
      %1923 = vmatprep.subr.mxu0 0.0
      %1924 = vmatpush1.msra.mxu0 0.0
      %1925 = vmatprep.subr.mxu0 0.0
      %1926 = vmatpush1.msra.mxu0 0.0
      %1927 = vmatprep.subr.mxu0 0.0
      %1928 = vmatpush1.msra.mxu0 0.0
      %1929 = vmatprep.subr.mxu0 0.0
      %1930 = vmatpush1.msra.mxu0 0.0
      %1931 = vmatprep.subr.mxu0 0.0
      %1932 = vmatpush1.msra.mxu0 0.0
      %1933 = vmatprep.subr.mxu0 0.0
      %1934 = vmatpush1.msra.mxu0 0.0
      %1935 = vmatprep.subr.mxu0 0.0
      %1936 = vmatpush1.msra.mxu0 0.0
      %1937 = vmatprep.subr.mxu0 0.0
      %1938 = vmatpush1.msra.mxu0 0.0
      %1939 = vmatprep.subr.mxu0 0.0
      %1940 = vmatpush1.msra.mxu0 0.0
      %1941 = vmatprep.subr.mxu0 0.0
      %1942 = vmatpush1.msra.mxu0 0.0
      %1943 = vmatprep.subr.mxu0 0.0
      %1944 = vmatpush1.msra.mxu0 0.0
      %1945 = vmatprep.subr.mxu0 0.0
      %1946 = vmatpush1.msra.mxu0 0.0
      %1947 = vmatprep.subr.mxu0 0.0
      %1948 = vmatpush1.msra.mxu0 0.0
      %1949 = vmatprep.subr.mxu0 0.0
      %1950 = vmatpush1.msra.mxu0 0.0
      %1951 = vmatprep.subr.mxu0 0.0
      %1952 = vmatpush1.msra.mxu0 0.0
      %1953 = vmatprep.subr.mxu0 0.0
      %1954 = vmatpush1.msra.mxu0 0.0
      %1955 = vmatprep.subr.mxu0 0.0
      %1956 = vmatpush1.msra.mxu0 0.0
      %1957 = vmatprep.subr.mxu0 0.0
      %1958 = vmatpush1.msra.mxu0 0.0
      %1959 = vmatprep.subr.mxu0 0.0
      %1960 = vmatpush1.msra.mxu0 0.0
      %1961 = vmatprep.subr.mxu0 0.0
      %1962 = vmatpush1.msra.mxu0 0.0
      %1963 = vmatprep.subr.mxu0 0.0
      %1964 = vmatpush1.msra.mxu0 0.0
      %1965 = vmatprep.subr.mxu0 0.0
      %1966 = vmatpush1.msra.mxu0 0.0
      %1967 = vmatprep.subr.mxu0 0.0
      %1968 = vmatpush1.msra.mxu0 0.0
      %1969 = vmatprep.subr.mxu0 0.0
      %1970 = vmatpush1.msra.mxu0 0.0
      %1971 = vmatprep.subr.mxu0 0.0
      %1972 = vmatpush1.msra.mxu0 0.0
      %1973 = vmatprep.mubr.f32.mxu0 0.0
      %1974 = vmatmul.mubr.f32.gmra.mrb[0].mxu0 %v1907
      %v1975 = vpop.f32.mrb[0].mxu0
      %v1976 = vadd.f32 0.0, %v1975
      %v1977 = vpop.f32.mrb[0].mxu0
      %v1978 = vadd.f32 0.0, %v1977
      %1979 = vdwg.mxu0
      %1980 = vmatprep.subr.mxu0 %v1903
      %1981 = vmatpush1.msra.mxu0 %v1902
      %1982 = vmatprep.subr.mxu0 0.0
      %1983 = vmatpush1.msra.mxu0 0.0
      %1984 = vmatprep.subr.mxu0 0.0
      %1985 = vmatpush1.msra.mxu0 0.0
      %1986 = vmatprep.subr.mxu0 0.0
      %1987 = vmatpush1.msra.mxu0 0.0
      %1988 = vmatprep.subr.mxu0 0.0
      %1989 = vmatpush1.msra.mxu0 0.0
      %1990 = vmatprep.subr.mxu0 0.0
      %1991 = vmatpush1.msra.mxu0 0.0
      %1992 = vmatprep.subr.mxu0 0.0
      %1993 = vmatpush1.msra.mxu0 0.0
      %1994 = vmatprep.subr.mxu0 0.0
      %1995 = vmatpush1.msra.mxu0 0.0
      %1996 = vmatprep.subr.mxu0 0.0
      %1997 = vmatpush1.msra.mxu0 0.0
      %1998 = vmatprep.subr.mxu0 0.0
      %1999 = vmatpush1.msra.mxu0 0.0
      %2000 = vmatprep.subr.mxu0 0.0
      %2001 = vmatpush1.msra.mxu0 0.0
      %2002 = vmatprep.subr.mxu0 0.0
      %2003 = vmatpush1.msra.mxu0 0.0
      %2004 = vmatprep.subr.mxu0 0.0
      %2005 = vmatpush1.msra.mxu0 0.0
      %2006 = vmatprep.subr.mxu0 0.0
      %2007 = vmatpush1.msra.mxu0 0.0
      %2008 = vmatprep.subr.mxu0 0.0
      %2009 = vmatpush1.msra.mxu0 0.0
      %2010 = vmatprep.subr.mxu0 0.0
      %2011 = vmatpush1.msra.mxu0 0.0
      %2012 = vmatprep.subr.mxu0 0.0
      %2013 = vmatpush1.msra.mxu0 0.0
      %2014 = vmatprep.subr.mxu0 0.0
      %2015 = vmatpush1.msra.mxu0 0.0
      %2016 = vmatprep.subr.mxu0 0.0
      %2017 = vmatpush1.msra.mxu0 0.0
      %2018 = vmatprep.subr.mxu0 0.0
      %2019 = vmatpush1.msra.mxu0 0.0
      %2020 = vmatprep.subr.mxu0 0.0
      %2021 = vmatpush1.msra.mxu0 0.0
      %2022 = vmatprep.subr.mxu0 0.0
      %2023 = vmatpush1.msra.mxu0 0.0
      %2024 = vmatprep.subr.mxu0 0.0
      %2025 = vmatpush1.msra.mxu0 0.0
      %2026 = vmatprep.subr.mxu0 0.0
      %2027 = vmatpush1.msra.mxu0 0.0
      %2028 = vmatprep.subr.mxu0 0.0
      %2029 = vmatpush1.msra.mxu0 0.0
      %2030 = vmatprep.subr.mxu0 0.0
      %2031 = vmatpush1.msra.mxu0 0.0
      %2032 = vmatprep.subr.mxu0 0.0
      %2033 = vmatpush1.msra.mxu0 0.0
      %2034 = vmatprep.subr.mxu0 0.0
      %2035 = vmatpush1.msra.mxu0 0.0
      %2036 = vmatprep.subr.mxu0 0.0
      %2037 = vmatpush1.msra.mxu0 0.0
      %2038 = vmatprep.subr.mxu0 0.0
      %2039 = vmatpush1.msra.mxu0 0.0
      %2040 = vmatprep.subr.mxu0 0.0
      %2041 = vmatpush1.msra.mxu0 0.0
      %2042 = vmatprep.subr.mxu0 0.0
      %2043 = vmatpush1.msra.mxu0 0.0
      %2044 = vmatprep.mubr.f32.mxu0 0.0
      %2045 = vmatmul.mubr.f32.gmra.mrb[0].mxu0 %v1907
      %v2046 = vpop.f32.mrb[0].mxu0
      %v2047 = vadd.f32 0.0, %v2046
      %v2048 = vpop.f32.mrb[0].mxu0
      %v2049 = vadd.f32 0.0, %v2048
      %2050 = vdwg.mxu0
      %v2052 = vsel %vm348, %v1887, 0
      %2054 = vmatprep.subr.mxu0 %v1883
      %2055 = vmatpush1.msra.mxu0 %v1882
      %2056 = vmatprep.subr.mxu0 0.0
      %2057 = vmatpush1.msra.mxu0 0.0
      %2058 = vmatprep.subr.mxu0 0.0
      %2059 = vmatpush1.msra.mxu0 0.0
      %2060 = vmatprep.subr.mxu0 0.0
      %2061 = vmatpush1.msra.mxu0 0.0
      %2062 = vmatprep.subr.mxu0 0.0
      %2063 = vmatpush1.msra.mxu0 0.0
      %2064 = vmatprep.subr.mxu0 0.0
      %2065 = vmatpush1.msra.mxu0 0.0
      %2066 = vmatprep.subr.mxu0 0.0
      %2067 = vmatpush1.msra.mxu0 0.0
      %2068 = vmatprep.subr.mxu0 0.0
      %2069 = vmatpush1.msra.mxu0 0.0
      %2070 = vmatprep.subr.mxu0 0.0
      %2071 = vmatpush1.msra.mxu0 0.0
      %2072 = vmatprep.subr.mxu0 0.0
      %2073 = vmatpush1.msra.mxu0 0.0
      %2074 = vmatprep.subr.mxu0 0.0
      %2075 = vmatpush1.msra.mxu0 0.0
      %2076 = vmatprep.subr.mxu0 0.0
      %2077 = vmatpush1.msra.mxu0 0.0
      %2078 = vmatprep.subr.mxu0 0.0
      %2079 = vmatpush1.msra.mxu0 0.0
      %2080 = vmatprep.subr.mxu0 0.0
      %2081 = vmatpush1.msra.mxu0 0.0
      %2082 = vmatprep.subr.mxu0 0.0
      %2083 = vmatpush1.msra.mxu0 0.0
      %2084 = vmatprep.subr.mxu0 0.0
      %2085 = vmatpush1.msra.mxu0 0.0
      %2086 = vmatprep.subr.mxu0 0.0
      %2087 = vmatpush1.msra.mxu0 0.0
      %2088 = vmatprep.subr.mxu0 0.0
      %2089 = vmatpush1.msra.mxu0 0.0
      %2090 = vmatprep.subr.mxu0 0.0
      %2091 = vmatpush1.msra.mxu0 0.0
      %2092 = vmatprep.subr.mxu0 0.0
      %2093 = vmatpush1.msra.mxu0 0.0
      %2094 = vmatprep.subr.mxu0 0.0
      %2095 = vmatpush1.msra.mxu0 0.0
      %2096 = vmatprep.subr.mxu0 0.0
      %2097 = vmatpush1.msra.mxu0 0.0
      %2098 = vmatprep.subr.mxu0 0.0
      %2099 = vmatpush1.msra.mxu0 0.0
      %2100 = vmatprep.subr.mxu0 0.0
      %2101 = vmatpush1.msra.mxu0 0.0
      %2102 = vmatprep.subr.mxu0 0.0
      %2103 = vmatpush1.msra.mxu0 0.0
      %2104 = vmatprep.subr.mxu0 0.0
      %2105 = vmatpush1.msra.mxu0 0.0
      %2106 = vmatprep.subr.mxu0 0.0
      %2107 = vmatpush1.msra.mxu0 0.0
      %2108 = vmatprep.subr.mxu0 0.0
      %2109 = vmatpush1.msra.mxu0 0.0
      %2110 = vmatprep.subr.mxu0 0.0
      %2111 = vmatpush1.msra.mxu0 0.0
      %2112 = vmatprep.subr.mxu0 0.0
      %2113 = vmatpush1.msra.mxu0 0.0
      %2114 = vmatprep.subr.mxu0 0.0
      %2115 = vmatpush1.msra.mxu0 0.0
      %2116 = vmatprep.subr.mxu0 0.0
      %2117 = vmatpush1.msra.mxu0 0.0
      %2118 = vmatprep.mubr.f32.mxu0 0.0
      %2119 = vmatmul.mubr.f32.gmra.mrb[0].mxu0 %v2052
      %v2120 = vpop.f32.mrb[0].mxu0
      %v2121 = vadd.f32 %v1976, %v2120
      %v2122 = vpop.f32.mrb[0].mxu0
      %v2123 = vadd.f32 %v1978, %v2122
      %2124 = vdwg.mxu0
      %2125 = vmatprep.subr.mxu0 %v1885
      %2126 = vmatpush1.msra.mxu0 %v1884
      %2127 = vmatprep.subr.mxu0 0.0
      %2128 = vmatpush1.msra.mxu0 0.0
      %2129 = vmatprep.subr.mxu0 0.0
      %2130 = vmatpush1.msra.mxu0 0.0
      %2131 = vmatprep.subr.mxu0 0.0
      %2132 = vmatpush1.msra.mxu0 0.0
      %2133 = vmatprep.subr.mxu0 0.0
      %2134 = vmatpush1.msra.mxu0 0.0
      %2135 = vmatprep.subr.mxu0 0.0
      %2136 = vmatpush1.msra.mxu0 0.0
      %2137 = vmatprep.subr.mxu0 0.0
      %2138 = vmatpush1.msra.mxu0 0.0
      %2139 = vmatprep.subr.mxu0 0.0
      %2140 = vmatpush1.msra.mxu0 0.0
      %2141 = vmatprep.subr.mxu0 0.0
      %2142 = vmatpush1.msra.mxu0 0.0
      %2143 = vmatprep.subr.mxu0 0.0
      %2144 = vmatpush1.msra.mxu0 0.0
      %2145 = vmatprep.subr.mxu0 0.0
      %2146 = vmatpush1.msra.mxu0 0.0
      %2147 = vmatprep.subr.mxu0 0.0
      %2148 = vmatpush1.msra.mxu0 0.0
      %2149 = vmatprep.subr.mxu0 0.0
      %2150 = vmatpush1.msra.mxu0 0.0
      %2151 = vmatprep.subr.mxu0 0.0
      %2152 = vmatpush1.msra.mxu0 0.0
      %2153 = vmatprep.subr.mxu0 0.0
      %2154 = vmatpush1.msra.mxu0 0.0
      %2155 = vmatprep.subr.mxu0 0.0
      %2156 = vmatpush1.msra.mxu0 0.0
      %2157 = vmatprep.subr.mxu0 0.0
      %2158 = vmatpush1.msra.mxu0 0.0
      %2159 = vmatprep.subr.mxu0 0.0
      %2160 = vmatpush1.msra.mxu0 0.0
      %2161 = vmatprep.subr.mxu0 0.0
      %2162 = vmatpush1.msra.mxu0 0.0
      %2163 = vmatprep.subr.mxu0 0.0
      %2164 = vmatpush1.msra.mxu0 0.0
      %2165 = vmatprep.subr.mxu0 0.0
      %2166 = vmatpush1.msra.mxu0 0.0
      %2167 = vmatprep.subr.mxu0 0.0
      %2168 = vmatpush1.msra.mxu0 0.0
      %2169 = vmatprep.subr.mxu0 0.0
      %2170 = vmatpush1.msra.mxu0 0.0
      %2171 = vmatprep.subr.mxu0 0.0
      %2172 = vmatpush1.msra.mxu0 0.0
      %2173 = vmatprep.subr.mxu0 0.0
      %2174 = vmatpush1.msra.mxu0 0.0
      %2175 = vmatprep.subr.mxu0 0.0
      %2176 = vmatpush1.msra.mxu0 0.0
      %2177 = vmatprep.subr.mxu0 0.0
      %2178 = vmatpush1.msra.mxu0 0.0
      %2179 = vmatprep.subr.mxu0 0.0
      %2180 = vmatpush1.msra.mxu0 0.0
      %2181 = vmatprep.subr.mxu0 0.0
      %2182 = vmatpush1.msra.mxu0 0.0
      %2183 = vmatprep.subr.mxu0 0.0
      %2184 = vmatpush1.msra.mxu0 0.0
      %2185 = vmatprep.subr.mxu0 0.0
      %2186 = vmatpush1.msra.mxu0 0.0
      %2187 = vmatprep.subr.mxu0 0.0
      %2188 = vmatpush1.msra.mxu0 0.0
      %2189 = vmatprep.mubr.f32.mxu0 0.0
      %2190 = vmatmul.mubr.f32.gmra.mrb[0].mxu0 %v2052
      %v2191 = vpop.f32.mrb[0].mxu0
      %v2192 = vadd.f32 %v2047, %v2191
      %v2193 = vpop.f32.mrb[0].mxu0
      %v2194 = vadd.f32 %v2049, %v2193
      %2195 = vdwg.mxu0
      %2196 = vrot.lane.b32.xlu0 %v1862, 15
      %v2197 = vpop.permute.xlu0 %2196
      %2198 = vrot.lane.b32.xlu0 %v1863, 15
      %v2199 = vpop.permute.xlu0 %2198
      %2200 = vrot.lane.b32.xlu0 %v1864, 15
      %v2201 = vpop.permute.xlu0 %2200
      %2202 = vrot.lane.b32.xlu0 %v1865, 15
      %v2203 = vpop.permute.xlu0 %2202
      %v2204 = vsel %vm647, %v2201, %v2203
      %v2205 = vsel %vm647, %v2199, %v2201
      %v2206 = vsel %vm647, %v2197, %v2199
      %v2207 = vsel %vm647, %v2203, %v2197
      %v2208 = vmul.f32 %v2207, %v282
      %v2209 = vmul.f32 %v2206, %v286
      %v2210 = vmul.f32 %v2205, %v290
      %v2211 = vmul.f32 %v2204, %v294
      %v2212 = vmul.f32 %v2208, %v660
      %v2213 = vmul.f32 %v2209, %v664
      %v2214 = vmul.f32 %v2210, %v668
      %v2215 = vmul.f32 %v2211, %v672
      %s2216 = scalar_lea.vmem %s2, 88
      %v2217 = vld [vmem:[%s2216] sm:$0xff]
      %v2219 = vsel %vm348, %v2217, 0
      %2221 = vmatprep.subr.mxu0 %v2213
      %2222 = vmatpush1.msra.mxu0 %v2212
      %2223 = vmatprep.subr.mxu0 0.0
      %2224 = vmatpush1.msra.mxu0 0.0
      %2225 = vmatprep.subr.mxu0 0.0
      %2226 = vmatpush1.msra.mxu0 0.0
      %2227 = vmatprep.subr.mxu0 0.0
      %2228 = vmatpush1.msra.mxu0 0.0
      %2229 = vmatprep.subr.mxu0 0.0
      %2230 = vmatpush1.msra.mxu0 0.0
      %2231 = vmatprep.subr.mxu0 0.0
      %2232 = vmatpush1.msra.mxu0 0.0
      %2233 = vmatprep.subr.mxu0 0.0
      %2234 = vmatpush1.msra.mxu0 0.0
      %2235 = vmatprep.subr.mxu0 0.0
      %2236 = vmatpush1.msra.mxu0 0.0
      %2237 = vmatprep.subr.mxu0 0.0
      %2238 = vmatpush1.msra.mxu0 0.0
      %2239 = vmatprep.subr.mxu0 0.0
      %2240 = vmatpush1.msra.mxu0 0.0
      %2241 = vmatprep.subr.mxu0 0.0
      %2242 = vmatpush1.msra.mxu0 0.0
      %2243 = vmatprep.subr.mxu0 0.0
      %2244 = vmatpush1.msra.mxu0 0.0
      %2245 = vmatprep.subr.mxu0 0.0
      %2246 = vmatpush1.msra.mxu0 0.0
      %2247 = vmatprep.subr.mxu0 0.0
      %2248 = vmatpush1.msra.mxu0 0.0
      %2249 = vmatprep.subr.mxu0 0.0
      %2250 = vmatpush1.msra.mxu0 0.0
      %2251 = vmatprep.subr.mxu0 0.0
      %2252 = vmatpush1.msra.mxu0 0.0
      %2253 = vmatprep.subr.mxu0 0.0
      %2254 = vmatpush1.msra.mxu0 0.0
      %2255 = vmatprep.subr.mxu0 0.0
      %2256 = vmatpush1.msra.mxu0 0.0
      %2257 = vmatprep.subr.mxu0 0.0
      %2258 = vmatpush1.msra.mxu0 0.0
      %2259 = vmatprep.subr.mxu0 0.0
      %2260 = vmatpush1.msra.mxu0 0.0
      %2261 = vmatprep.subr.mxu0 0.0
      %2262 = vmatpush1.msra.mxu0 0.0
      %2263 = vmatprep.subr.mxu0 0.0
      %2264 = vmatpush1.msra.mxu0 0.0
      %2265 = vmatprep.subr.mxu0 0.0
      %2266 = vmatpush1.msra.mxu0 0.0
      %2267 = vmatprep.subr.mxu0 0.0
      %2268 = vmatpush1.msra.mxu0 0.0
      %2269 = vmatprep.subr.mxu0 0.0
      %2270 = vmatpush1.msra.mxu0 0.0
      %2271 = vmatprep.subr.mxu0 0.0
      %2272 = vmatpush1.msra.mxu0 0.0
      %2273 = vmatprep.subr.mxu0 0.0
      %2274 = vmatpush1.msra.mxu0 0.0
      %2275 = vmatprep.subr.mxu0 0.0
      %2276 = vmatpush1.msra.mxu0 0.0
      %2277 = vmatprep.subr.mxu0 0.0
      %2278 = vmatpush1.msra.mxu0 0.0
      %2279 = vmatprep.subr.mxu0 0.0
      %2280 = vmatpush1.msra.mxu0 0.0
      %2281 = vmatprep.subr.mxu0 0.0
      %2282 = vmatpush1.msra.mxu0 0.0
      %2283 = vmatprep.subr.mxu0 0.0
      %2284 = vmatpush1.msra.mxu0 0.0
      %2285 = vmatprep.mubr.f32.mxu0 0.0
      %2286 = vmatmul.mubr.f32.gmra.mrb[0].mxu0 %v2219
      %v2287 = vpop.f32.mrb[0].mxu0
      %v2288 = vadd.f32 0.0, %v2287
      %v2289 = vpop.f32.mrb[0].mxu0
      %v2290 = vadd.f32 0.0, %v2289
      %2291 = vdwg.mxu0
      %2292 = vmatprep.subr.mxu0 %v2215
      %2293 = vmatpush1.msra.mxu0 %v2214
      %2294 = vmatprep.subr.mxu0 0.0
      %2295 = vmatpush1.msra.mxu0 0.0
      %2296 = vmatprep.subr.mxu0 0.0
      %2297 = vmatpush1.msra.mxu0 0.0
      %2298 = vmatprep.subr.mxu0 0.0
      %2299 = vmatpush1.msra.mxu0 0.0
      %2300 = vmatprep.subr.mxu0 0.0
      %2301 = vmatpush1.msra.mxu0 0.0
      %2302 = vmatprep.subr.mxu0 0.0
      %2303 = vmatpush1.msra.mxu0 0.0
      %2304 = vmatprep.subr.mxu0 0.0
      %2305 = vmatpush1.msra.mxu0 0.0
      %2306 = vmatprep.subr.mxu0 0.0
      %2307 = vmatpush1.msra.mxu0 0.0
      %2308 = vmatprep.subr.mxu0 0.0
      %2309 = vmatpush1.msra.mxu0 0.0
      %2310 = vmatprep.subr.mxu0 0.0
      %2311 = vmatpush1.msra.mxu0 0.0
      %2312 = vmatprep.subr.mxu0 0.0
      %2313 = vmatpush1.msra.mxu0 0.0
      %2314 = vmatprep.subr.mxu0 0.0
      %2315 = vmatpush1.msra.mxu0 0.0
      %2316 = vmatprep.subr.mxu0 0.0
      %2317 = vmatpush1.msra.mxu0 0.0
      %2318 = vmatprep.subr.mxu0 0.0
      %2319 = vmatpush1.msra.mxu0 0.0
      %2320 = vmatprep.subr.mxu0 0.0
      %2321 = vmatpush1.msra.mxu0 0.0
      %2322 = vmatprep.subr.mxu0 0.0
      %2323 = vmatpush1.msra.mxu0 0.0
      %2324 = vmatprep.subr.mxu0 0.0
      %2325 = vmatpush1.msra.mxu0 0.0
      %2326 = vmatprep.subr.mxu0 0.0
      %2327 = vmatpush1.msra.mxu0 0.0
      %2328 = vmatprep.subr.mxu0 0.0
      %2329 = vmatpush1.msra.mxu0 0.0
      %2330 = vmatprep.subr.mxu0 0.0
      %2331 = vmatpush1.msra.mxu0 0.0
      %2332 = vmatprep.subr.mxu0 0.0
      %2333 = vmatpush1.msra.mxu0 0.0
      %2334 = vmatprep.subr.mxu0 0.0
      %2335 = vmatpush1.msra.mxu0 0.0
      %2336 = vmatprep.subr.mxu0 0.0
      %2337 = vmatpush1.msra.mxu0 0.0
      %2338 = vmatprep.subr.mxu0 0.0
      %2339 = vmatpush1.msra.mxu0 0.0
      %2340 = vmatprep.subr.mxu0 0.0
      %2341 = vmatpush1.msra.mxu0 0.0
      %2342 = vmatprep.subr.mxu0 0.0
      %2343 = vmatpush1.msra.mxu0 0.0
      %2344 = vmatprep.subr.mxu0 0.0
      %2345 = vmatpush1.msra.mxu0 0.0
      %2346 = vmatprep.subr.mxu0 0.0
      %2347 = vmatpush1.msra.mxu0 0.0
      %2348 = vmatprep.subr.mxu0 0.0
      %2349 = vmatpush1.msra.mxu0 0.0
      %2350 = vmatprep.subr.mxu0 0.0
      %2351 = vmatpush1.msra.mxu0 0.0
      %2352 = vmatprep.subr.mxu0 0.0
      %2353 = vmatpush1.msra.mxu0 0.0
      %2354 = vmatprep.subr.mxu0 0.0
      %2355 = vmatpush1.msra.mxu0 0.0
      %2356 = vmatprep.mubr.f32.mxu0 0.0
      %2357 = vmatmul.mubr.f32.gmra.mrb[0].mxu0 %v2219
      %v2358 = vpop.f32.mrb[0].mxu0
      %v2359 = vadd.f32 0.0, %v2358
      %v2360 = vpop.f32.mrb[0].mxu0
      %v2361 = vadd.f32 0.0, %v2360
      %2362 = vdwg.mxu0
      %v2363 = vadd.f32 %v2121, %v2288
      %v2364 = vadd.f32 %v2123, %v2290
      %v2365 = vadd.f32 %v2192, %v2359
      %v2366 = vadd.f32 %v2194, %v2361
      %2367 = vrot.lane.b32.xlu0 %v1862, 1
      %v2368 = vpop.permute.xlu0 %2367
      %2369 = vrot.lane.b32.xlu0 %v1863, 1
      %v2370 = vpop.permute.xlu0 %2369
      %2371 = vrot.lane.b32.xlu0 %v1864, 1
      %v2372 = vpop.permute.xlu0 %2371
      %2373 = vrot.lane.b32.xlu0 %v1865, 1
      %v2374 = vpop.permute.xlu0 %2373
      %v2375 = vsel %vm840, %v2372, %v2374
      %v2376 = vsel %vm840, %v2370, %v2372
      %v2377 = vsel %vm840, %v2368, %v2370
      %v2378 = vsel %vm840, %v2374, %v2368
      %v2379 = vmul.f32 %v2378, %v307
      %v2380 = vmul.f32 %v2377, %v311
      %v2381 = vmul.f32 %v2376, %v315
      %v2382 = vmul.f32 %v2375, %v319
      %s2383 = scalar_lea.vmem %s2, 96
      %v2384 = vld [vmem:[%s2383] sm:$0xff]
      %v2386 = vsel %vm348, %v2384, 0
      %2388 = vmatprep.subr.mxu0 %v2380
      %2389 = vmatpush1.msra.mxu0 %v2379
      %2390 = vmatprep.subr.mxu0 0.0
      %2391 = vmatpush1.msra.mxu0 0.0
      %2392 = vmatprep.subr.mxu0 0.0
      %2393 = vmatpush1.msra.mxu0 0.0
      %2394 = vmatprep.subr.mxu0 0.0
      %2395 = vmatpush1.msra.mxu0 0.0
      %2396 = vmatprep.subr.mxu0 0.0
      %2397 = vmatpush1.msra.mxu0 0.0
      %2398 = vmatprep.subr.mxu0 0.0
      %2399 = vmatpush1.msra.mxu0 0.0
      %2400 = vmatprep.subr.mxu0 0.0
      %2401 = vmatpush1.msra.mxu0 0.0
      %2402 = vmatprep.subr.mxu0 0.0
      %2403 = vmatpush1.msra.mxu0 0.0
      %2404 = vmatprep.subr.mxu0 0.0
      %2405 = vmatpush1.msra.mxu0 0.0
      %2406 = vmatprep.subr.mxu0 0.0
      %2407 = vmatpush1.msra.mxu0 0.0
      %2408 = vmatprep.subr.mxu0 0.0
      %2409 = vmatpush1.msra.mxu0 0.0
      %2410 = vmatprep.subr.mxu0 0.0
      %2411 = vmatpush1.msra.mxu0 0.0
      %2412 = vmatprep.subr.mxu0 0.0
      %2413 = vmatpush1.msra.mxu0 0.0
      %2414 = vmatprep.subr.mxu0 0.0
      %2415 = vmatpush1.msra.mxu0 0.0
      %2416 = vmatprep.subr.mxu0 0.0
      %2417 = vmatpush1.msra.mxu0 0.0
      %2418 = vmatprep.subr.mxu0 0.0
      %2419 = vmatpush1.msra.mxu0 0.0
      %2420 = vmatprep.subr.mxu0 0.0
      %2421 = vmatpush1.msra.mxu0 0.0
      %2422 = vmatprep.subr.mxu0 0.0
      %2423 = vmatpush1.msra.mxu0 0.0
      %2424 = vmatprep.subr.mxu0 0.0
      %2425 = vmatpush1.msra.mxu0 0.0
      %2426 = vmatprep.subr.mxu0 0.0
      %2427 = vmatpush1.msra.mxu0 0.0
      %2428 = vmatprep.subr.mxu0 0.0
      %2429 = vmatpush1.msra.mxu0 0.0
      %2430 = vmatprep.subr.mxu0 0.0
      %2431 = vmatpush1.msra.mxu0 0.0
      %2432 = vmatprep.subr.mxu0 0.0
      %2433 = vmatpush1.msra.mxu0 0.0
      %2434 = vmatprep.subr.mxu0 0.0
      %2435 = vmatpush1.msra.mxu0 0.0
      %2436 = vmatprep.subr.mxu0 0.0
      %2437 = vmatpush1.msra.mxu0 0.0
      %2438 = vmatprep.subr.mxu0 0.0
      %2439 = vmatpush1.msra.mxu0 0.0
      %2440 = vmatprep.subr.mxu0 0.0
      %2441 = vmatpush1.msra.mxu0 0.0
      %2442 = vmatprep.subr.mxu0 0.0
      %2443 = vmatpush1.msra.mxu0 0.0
      %2444 = vmatprep.subr.mxu0 0.0
      %2445 = vmatpush1.msra.mxu0 0.0
      %2446 = vmatprep.subr.mxu0 0.0
      %2447 = vmatpush1.msra.mxu0 0.0
      %2448 = vmatprep.subr.mxu0 0.0
      %2449 = vmatpush1.msra.mxu0 0.0
      %2450 = vmatprep.subr.mxu0 0.0
      %2451 = vmatpush1.msra.mxu0 0.0
      %2452 = vmatprep.mubr.f32.mxu0 0.0
      %2453 = vmatmul.mubr.f32.gmra.mrb[0].mxu0 %v2386
      %v2454 = vpop.f32.mrb[0].mxu0
      %v2455 = vadd.f32 0.0, %v2454
      %v2456 = vpop.f32.mrb[0].mxu0
      %v2457 = vadd.f32 0.0, %v2456
      %2458 = vdwg.mxu0
      %2459 = vmatprep.subr.mxu0 %v2382
      %2460 = vmatpush1.msra.mxu0 %v2381
      %2461 = vmatprep.subr.mxu0 0.0
      %2462 = vmatpush1.msra.mxu0 0.0
      %2463 = vmatprep.subr.mxu0 0.0
      %2464 = vmatpush1.msra.mxu0 0.0
      %2465 = vmatprep.subr.mxu0 0.0
      %2466 = vmatpush1.msra.mxu0 0.0
      %2467 = vmatprep.subr.mxu0 0.0
      %2468 = vmatpush1.msra.mxu0 0.0
      %2469 = vmatprep.subr.mxu0 0.0
      %2470 = vmatpush1.msra.mxu0 0.0
      %2471 = vmatprep.subr.mxu0 0.0
      %2472 = vmatpush1.msra.mxu0 0.0
      %2473 = vmatprep.subr.mxu0 0.0
      %2474 = vmatpush1.msra.mxu0 0.0
      %2475 = vmatprep.subr.mxu0 0.0
      %2476 = vmatpush1.msra.mxu0 0.0
      %2477 = vmatprep.subr.mxu0 0.0
      %2478 = vmatpush1.msra.mxu0 0.0
      %2479 = vmatprep.subr.mxu0 0.0
      %2480 = vmatpush1.msra.mxu0 0.0
      %2481 = vmatprep.subr.mxu0 0.0
      %2482 = vmatpush1.msra.mxu0 0.0
      %2483 = vmatprep.subr.mxu0 0.0
      %2484 = vmatpush1.msra.mxu0 0.0
      %2485 = vmatprep.subr.mxu0 0.0
      %2486 = vmatpush1.msra.mxu0 0.0
      %2487 = vmatprep.subr.mxu0 0.0
      %2488 = vmatpush1.msra.mxu0 0.0
      %2489 = vmatprep.subr.mxu0 0.0
      %2490 = vmatpush1.msra.mxu0 0.0
      %2491 = vmatprep.subr.mxu0 0.0
      %2492 = vmatpush1.msra.mxu0 0.0
      %2493 = vmatprep.subr.mxu0 0.0
      %2494 = vmatpush1.msra.mxu0 0.0
      %2495 = vmatprep.subr.mxu0 0.0
      %2496 = vmatpush1.msra.mxu0 0.0
      %2497 = vmatprep.subr.mxu0 0.0
      %2498 = vmatpush1.msra.mxu0 0.0
      %2499 = vmatprep.subr.mxu0 0.0
      %2500 = vmatpush1.msra.mxu0 0.0
      %2501 = vmatprep.subr.mxu0 0.0
      %2502 = vmatpush1.msra.mxu0 0.0
      %2503 = vmatprep.subr.mxu0 0.0
      %2504 = vmatpush1.msra.mxu0 0.0
      %2505 = vmatprep.subr.mxu0 0.0
      %2506 = vmatpush1.msra.mxu0 0.0
      %2507 = vmatprep.subr.mxu0 0.0
      %2508 = vmatpush1.msra.mxu0 0.0
      %2509 = vmatprep.subr.mxu0 0.0
      %2510 = vmatpush1.msra.mxu0 0.0
      %2511 = vmatprep.subr.mxu0 0.0
      %2512 = vmatpush1.msra.mxu0 0.0
      %2513 = vmatprep.subr.mxu0 0.0
      %2514 = vmatpush1.msra.mxu0 0.0
      %2515 = vmatprep.subr.mxu0 0.0
      %2516 = vmatpush1.msra.mxu0 0.0
      %2517 = vmatprep.subr.mxu0 0.0
      %2518 = vmatpush1.msra.mxu0 0.0
      %2519 = vmatprep.subr.mxu0 0.0
      %2520 = vmatpush1.msra.mxu0 0.0
      %2521 = vmatprep.subr.mxu0 0.0
      %2522 = vmatpush1.msra.mxu0 0.0
      %2523 = vmatprep.mubr.f32.mxu0 0.0
      %2524 = vmatmul.mubr.f32.gmra.mrb[0].mxu0 %v2386
      %v2525 = vpop.f32.mrb[0].mxu0
      %v2526 = vadd.f32 0.0, %v2525
      %v2527 = vpop.f32.mrb[0].mxu0
      %v2528 = vadd.f32 0.0, %v2527
      %2529 = vdwg.mxu0
      %v2530 = vadd.f32 %v2363, %v2455
      %v2531 = vadd.f32 %v2364, %v2457
      %v2532 = vadd.f32 %v2365, %v2526
      %v2533 = vadd.f32 %v2366, %v2528
      %s2534 = scalar_lea.vmem %s2, 104
      %v2535 = vld [vmem:[%s2534] sm:$0xff]
      %v2537 = vsel %vm348, %v2535, 0
      %2539 = vmatprep.subr.mxu0 %v1863
      %2540 = vmatpush1.msra.mxu0 %v1862
      %2541 = vmatprep.subr.mxu0 0.0
      %2542 = vmatpush1.msra.mxu0 0.0
      %2543 = vmatprep.subr.mxu0 0.0
      %2544 = vmatpush1.msra.mxu0 0.0
      %2545 = vmatprep.subr.mxu0 0.0
      %2546 = vmatpush1.msra.mxu0 0.0
      %2547 = vmatprep.subr.mxu0 0.0
      %2548 = vmatpush1.msra.mxu0 0.0
      %2549 = vmatprep.subr.mxu0 0.0
      %2550 = vmatpush1.msra.mxu0 0.0
      %2551 = vmatprep.subr.mxu0 0.0
      %2552 = vmatpush1.msra.mxu0 0.0
      %2553 = vmatprep.subr.mxu0 0.0
      %2554 = vmatpush1.msra.mxu0 0.0
      %2555 = vmatprep.subr.mxu0 0.0
      %2556 = vmatpush1.msra.mxu0 0.0
      %2557 = vmatprep.subr.mxu0 0.0
      %2558 = vmatpush1.msra.mxu0 0.0
      %2559 = vmatprep.subr.mxu0 0.0
      %2560 = vmatpush1.msra.mxu0 0.0
      %2561 = vmatprep.subr.mxu0 0.0
      %2562 = vmatpush1.msra.mxu0 0.0
      %2563 = vmatprep.subr.mxu0 0.0
      %2564 = vmatpush1.msra.mxu0 0.0
      %2565 = vmatprep.subr.mxu0 0.0
      %2566 = vmatpush1.msra.mxu0 0.0
      %2567 = vmatprep.subr.mxu0 0.0
      %2568 = vmatpush1.msra.mxu0 0.0
      %2569 = vmatprep.subr.mxu0 0.0
      %2570 = vmatpush1.msra.mxu0 0.0
      %2571 = vmatprep.subr.mxu0 0.0
      %2572 = vmatpush1.msra.mxu0 0.0
      %2573 = vmatprep.subr.mxu0 0.0
      %2574 = vmatpush1.msra.mxu0 0.0
      %2575 = vmatprep.subr.mxu0 0.0
      %2576 = vmatpush1.msra.mxu0 0.0
      %2577 = vmatprep.subr.mxu0 0.0
      %2578 = vmatpush1.msra.mxu0 0.0
      %2579 = vmatprep.subr.mxu0 0.0
      %2580 = vmatpush1.msra.mxu0 0.0
      %2581 = vmatprep.subr.mxu0 0.0
      %2582 = vmatpush1.msra.mxu0 0.0
      %2583 = vmatprep.subr.mxu0 0.0
      %2584 = vmatpush1.msra.mxu0 0.0
      %2585 = vmatprep.subr.mxu0 0.0
      %2586 = vmatpush1.msra.mxu0 0.0
      %2587 = vmatprep.subr.mxu0 0.0
      %2588 = vmatpush1.msra.mxu0 0.0
      %2589 = vmatprep.subr.mxu0 0.0
      %2590 = vmatpush1.msra.mxu0 0.0
      %2591 = vmatprep.subr.mxu0 0.0
      %2592 = vmatpush1.msra.mxu0 0.0
      %2593 = vmatprep.subr.mxu0 0.0
      %2594 = vmatpush1.msra.mxu0 0.0
      %2595 = vmatprep.subr.mxu0 0.0
      %2596 = vmatpush1.msra.mxu0 0.0
      %2597 = vmatprep.subr.mxu0 0.0
      %2598 = vmatpush1.msra.mxu0 0.0
      %2599 = vmatprep.subr.mxu0 0.0
      %2600 = vmatpush1.msra.mxu0 0.0
      %2601 = vmatprep.subr.mxu0 0.0
      %2602 = vmatpush1.msra.mxu0 0.0
      %2603 = vmatprep.mubr.f32.mxu0 0.0
      %2604 = vmatmul.mubr.f32.gmra.mrb[0].mxu0 %v2537
      %v2605 = vpop.f32.mrb[0].mxu0
      %v2606 = vadd.f32 0.0, %v2605
      %v2607 = vpop.f32.mrb[0].mxu0
      %v2608 = vadd.f32 0.0, %v2607
      %2609 = vdwg.mxu0
      %2610 = vmatprep.subr.mxu0 %v1865
      %2611 = vmatpush1.msra.mxu0 %v1864
      %2612 = vmatprep.subr.mxu0 0.0
      %2613 = vmatpush1.msra.mxu0 0.0
      %2614 = vmatprep.subr.mxu0 0.0
      %2615 = vmatpush1.msra.mxu0 0.0
      %2616 = vmatprep.subr.mxu0 0.0
      %2617 = vmatpush1.msra.mxu0 0.0
      %2618 = vmatprep.subr.mxu0 0.0
      %2619 = vmatpush1.msra.mxu0 0.0
      %2620 = vmatprep.subr.mxu0 0.0
      %2621 = vmatpush1.msra.mxu0 0.0
      %2622 = vmatprep.subr.mxu0 0.0
      %2623 = vmatpush1.msra.mxu0 0.0
      %2624 = vmatprep.subr.mxu0 0.0
      %2625 = vmatpush1.msra.mxu0 0.0
      %2626 = vmatprep.subr.mxu0 0.0
      %2627 = vmatpush1.msra.mxu0 0.0
      %2628 = vmatprep.subr.mxu0 0.0
      %2629 = vmatpush1.msra.mxu0 0.0
      %2630 = vmatprep.subr.mxu0 0.0
      %2631 = vmatpush1.msra.mxu0 0.0
      %2632 = vmatprep.subr.mxu0 0.0
      %2633 = vmatpush1.msra.mxu0 0.0
      %2634 = vmatprep.subr.mxu0 0.0
      %2635 = vmatpush1.msra.mxu0 0.0
      %2636 = vmatprep.subr.mxu0 0.0
      %2637 = vmatpush1.msra.mxu0 0.0
      %2638 = vmatprep.subr.mxu0 0.0
      %2639 = vmatpush1.msra.mxu0 0.0
      %2640 = vmatprep.subr.mxu0 0.0
      %2641 = vmatpush1.msra.mxu0 0.0
      %2642 = vmatprep.subr.mxu0 0.0
      %2643 = vmatpush1.msra.mxu0 0.0
      %2644 = vmatprep.subr.mxu0 0.0
      %2645 = vmatpush1.msra.mxu0 0.0
      %2646 = vmatprep.subr.mxu0 0.0
      %2647 = vmatpush1.msra.mxu0 0.0
      %2648 = vmatprep.subr.mxu0 0.0
      %2649 = vmatpush1.msra.mxu0 0.0
      %2650 = vmatprep.subr.mxu0 0.0
      %2651 = vmatpush1.msra.mxu0 0.0
      %2652 = vmatprep.subr.mxu0 0.0
      %2653 = vmatpush1.msra.mxu0 0.0
      %2654 = vmatprep.subr.mxu0 0.0
      %2655 = vmatpush1.msra.mxu0 0.0
      %2656 = vmatprep.subr.mxu0 0.0
      %2657 = vmatpush1.msra.mxu0 0.0
      %2658 = vmatprep.subr.mxu0 0.0
      %2659 = vmatpush1.msra.mxu0 0.0
      %2660 = vmatprep.subr.mxu0 0.0
      %2661 = vmatpush1.msra.mxu0 0.0
      %2662 = vmatprep.subr.mxu0 0.0
      %2663 = vmatpush1.msra.mxu0 0.0
      %2664 = vmatprep.subr.mxu0 0.0
      %2665 = vmatpush1.msra.mxu0 0.0
      %2666 = vmatprep.subr.mxu0 0.0
      %2667 = vmatpush1.msra.mxu0 0.0
      %2668 = vmatprep.subr.mxu0 0.0
      %2669 = vmatpush1.msra.mxu0 0.0
      %2670 = vmatprep.subr.mxu0 0.0
      %2671 = vmatpush1.msra.mxu0 0.0
      %2672 = vmatprep.subr.mxu0 0.0
      %2673 = vmatpush1.msra.mxu0 0.0
      %2674 = vmatprep.mubr.f32.mxu0 0.0
      %2675 = vmatmul.mubr.f32.gmra.mrb[0].mxu0 %v2537
      %v2676 = vpop.f32.mrb[0].mxu0
      %v2677 = vadd.f32 0.0, %v2676
      %v2678 = vpop.f32.mrb[0].mxu0
      %v2679 = vadd.f32 0.0, %v2678
      %2680 = vdwg.mxu0
      %v2681 = vadd.f32 %v2530, %v2606
      %v2682 = vadd.f32 %v2531, %v2608
      %v2683 = vadd.f32 %v2532, %v2677
      %v2684 = vadd.f32 %v2533, %v2679
      %2685 = vrot.lane.b32.xlu0 %v1862, 127
      %v2686 = vpop.permute.xlu0 %2685
      %2687 = vrot.lane.b32.xlu0 %v1863, 127
      %v2688 = vpop.permute.xlu0 %2687
      %2689 = vrot.lane.b32.xlu0 %v1864, 127
      %v2690 = vpop.permute.xlu0 %2689
      %2691 = vrot.lane.b32.xlu0 %v1865, 127
      %v2692 = vpop.permute.xlu0 %2691
      %v2693 = vsel %vm1159, %v2690, %v2692
      %v2694 = vsel %vm1159, %v2688, %v2690
      %v2695 = vsel %vm1159, %v2686, %v2688
      %v2696 = vsel %vm1159, %v2692, %v2686
      %v2697 = vmul.f32 %v2695, %v660
      %v2698 = vmul.f32 %v2694, %v664
      %v2699 = vmul.f32 %v2693, %v668
      %v2700 = vmul.f32 %v2696, %v672
      %s2701 = scalar_lea.vmem %s2, 112
      %v2702 = vld [vmem:[%s2701] sm:$0xff]
      %v2704 = vsel %vm348, %v2702, 0
      %2706 = vmatprep.subr.mxu0 %v2698
      %2707 = vmatpush1.msra.mxu0 %v2697
      %2708 = vmatprep.subr.mxu0 0.0
      %2709 = vmatpush1.msra.mxu0 0.0
      %2710 = vmatprep.subr.mxu0 0.0
      %2711 = vmatpush1.msra.mxu0 0.0
      %2712 = vmatprep.subr.mxu0 0.0
      %2713 = vmatpush1.msra.mxu0 0.0
      %2714 = vmatprep.subr.mxu0 0.0
      %2715 = vmatpush1.msra.mxu0 0.0
      %2716 = vmatprep.subr.mxu0 0.0
      %2717 = vmatpush1.msra.mxu0 0.0
      %2718 = vmatprep.subr.mxu0 0.0
      %2719 = vmatpush1.msra.mxu0 0.0
      %2720 = vmatprep.subr.mxu0 0.0
      %2721 = vmatpush1.msra.mxu0 0.0
      %2722 = vmatprep.subr.mxu0 0.0
      %2723 = vmatpush1.msra.mxu0 0.0
      %2724 = vmatprep.subr.mxu0 0.0
      %2725 = vmatpush1.msra.mxu0 0.0
      %2726 = vmatprep.subr.mxu0 0.0
      %2727 = vmatpush1.msra.mxu0 0.0
      %2728 = vmatprep.subr.mxu0 0.0
      %2729 = vmatpush1.msra.mxu0 0.0
      %2730 = vmatprep.subr.mxu0 0.0
      %2731 = vmatpush1.msra.mxu0 0.0
      %2732 = vmatprep.subr.mxu0 0.0
      %2733 = vmatpush1.msra.mxu0 0.0
      %2734 = vmatprep.subr.mxu0 0.0
      %2735 = vmatpush1.msra.mxu0 0.0
      %2736 = vmatprep.subr.mxu0 0.0
      %2737 = vmatpush1.msra.mxu0 0.0
      %2738 = vmatprep.subr.mxu0 0.0
      %2739 = vmatpush1.msra.mxu0 0.0
      %2740 = vmatprep.subr.mxu0 0.0
      %2741 = vmatpush1.msra.mxu0 0.0
      %2742 = vmatprep.subr.mxu0 0.0
      %2743 = vmatpush1.msra.mxu0 0.0
      %2744 = vmatprep.subr.mxu0 0.0
      %2745 = vmatpush1.msra.mxu0 0.0
      %2746 = vmatprep.subr.mxu0 0.0
      %2747 = vmatpush1.msra.mxu0 0.0
      %2748 = vmatprep.subr.mxu0 0.0
      %2749 = vmatpush1.msra.mxu0 0.0
      %2750 = vmatprep.subr.mxu0 0.0
      %2751 = vmatpush1.msra.mxu0 0.0
      %2752 = vmatprep.subr.mxu0 0.0
      %2753 = vmatpush1.msra.mxu0 0.0
      %2754 = vmatprep.subr.mxu0 0.0
      %2755 = vmatpush1.msra.mxu0 0.0
      %2756 = vmatprep.subr.mxu0 0.0
      %2757 = vmatpush1.msra.mxu0 0.0
      %2758 = vmatprep.subr.mxu0 0.0
      %2759 = vmatpush1.msra.mxu0 0.0
      %2760 = vmatprep.subr.mxu0 0.0
      %2761 = vmatpush1.msra.mxu0 0.0
      %2762 = vmatprep.subr.mxu0 0.0
      %2763 = vmatpush1.msra.mxu0 0.0
      %2764 = vmatprep.subr.mxu0 0.0
      %2765 = vmatpush1.msra.mxu0 0.0
      %2766 = vmatprep.subr.mxu0 0.0
      %2767 = vmatpush1.msra.mxu0 0.0
      %2768 = vmatprep.subr.mxu0 0.0
      %2769 = vmatpush1.msra.mxu0 0.0
      %2770 = vmatprep.mubr.f32.mxu0 0.0
      %2771 = vmatmul.mubr.f32.gmra.mrb[0].mxu0 %v2704
      %v2772 = vpop.f32.mrb[0].mxu0
      %v2773 = vadd.f32 0.0, %v2772
      %v2774 = vpop.f32.mrb[0].mxu0
      %v2775 = vadd.f32 0.0, %v2774
      %2776 = vdwg.mxu0
      %2777 = vmatprep.subr.mxu0 %v2700
      %2778 = vmatpush1.msra.mxu0 %v2699
      %2779 = vmatprep.subr.mxu0 0.0
      %2780 = vmatpush1.msra.mxu0 0.0
      %2781 = vmatprep.subr.mxu0 0.0
      %2782 = vmatpush1.msra.mxu0 0.0
      %2783 = vmatprep.subr.mxu0 0.0
      %2784 = vmatpush1.msra.mxu0 0.0
      %2785 = vmatprep.subr.mxu0 0.0
      %2786 = vmatpush1.msra.mxu0 0.0
      %2787 = vmatprep.subr.mxu0 0.0
      %2788 = vmatpush1.msra.mxu0 0.0
      %2789 = vmatprep.subr.mxu0 0.0
      %2790 = vmatpush1.msra.mxu0 0.0
      %2791 = vmatprep.subr.mxu0 0.0
      %2792 = vmatpush1.msra.mxu0 0.0
      %2793 = vmatprep.subr.mxu0 0.0
      %2794 = vmatpush1.msra.mxu0 0.0
      %2795 = vmatprep.subr.mxu0 0.0
      %2796 = vmatpush1.msra.mxu0 0.0
      %2797 = vmatprep.subr.mxu0 0.0
      %2798 = vmatpush1.msra.mxu0 0.0
      %2799 = vmatprep.subr.mxu0 0.0
      %2800 = vmatpush1.msra.mxu0 0.0
      %2801 = vmatprep.subr.mxu0 0.0
      %2802 = vmatpush1.msra.mxu0 0.0
      %2803 = vmatprep.subr.mxu0 0.0
      %2804 = vmatpush1.msra.mxu0 0.0
      %2805 = vmatprep.subr.mxu0 0.0
      %2806 = vmatpush1.msra.mxu0 0.0
      %2807 = vmatprep.subr.mxu0 0.0
      %2808 = vmatpush1.msra.mxu0 0.0
      %2809 = vmatprep.subr.mxu0 0.0
      %2810 = vmatpush1.msra.mxu0 0.0
      %2811 = vmatprep.subr.mxu0 0.0
      %2812 = vmatpush1.msra.mxu0 0.0
      %2813 = vmatprep.subr.mxu0 0.0
      %2814 = vmatpush1.msra.mxu0 0.0
      %2815 = vmatprep.subr.mxu0 0.0
      %2816 = vmatpush1.msra.mxu0 0.0
      %2817 = vmatprep.subr.mxu0 0.0
      %2818 = vmatpush1.msra.mxu0 0.0
      %2819 = vmatprep.subr.mxu0 0.0
      %2820 = vmatpush1.msra.mxu0 0.0
      %2821 = vmatprep.subr.mxu0 0.0
      %2822 = vmatpush1.msra.mxu0 0.0
      %2823 = vmatprep.subr.mxu0 0.0
      %2824 = vmatpush1.msra.mxu0 0.0
      %2825 = vmatprep.subr.mxu0 0.0
      %2826 = vmatpush1.msra.mxu0 0.0
      %2827 = vmatprep.subr.mxu0 0.0
      %2828 = vmatpush1.msra.mxu0 0.0
      %2829 = vmatprep.subr.mxu0 0.0
      %2830 = vmatpush1.msra.mxu0 0.0
      %2831 = vmatprep.subr.mxu0 0.0
      %2832 = vmatpush1.msra.mxu0 0.0
      %2833 = vmatprep.subr.mxu0 0.0
      %2834 = vmatpush1.msra.mxu0 0.0
      %2835 = vmatprep.subr.mxu0 0.0
      %2836 = vmatpush1.msra.mxu0 0.0
      %2837 = vmatprep.subr.mxu0 0.0
      %2838 = vmatpush1.msra.mxu0 0.0
      %2839 = vmatprep.subr.mxu0 0.0
      %2840 = vmatpush1.msra.mxu0 0.0
      %2841 = vmatprep.mubr.f32.mxu0 0.0
      %2842 = vmatmul.mubr.f32.gmra.mrb[0].mxu0 %v2704
      %v2843 = vpop.f32.mrb[0].mxu0
      %v2844 = vadd.f32 0.0, %v2843
      %v2845 = vpop.f32.mrb[0].mxu0
      %v2846 = vadd.f32 0.0, %v2845
      %2847 = vdwg.mxu0
      %v2848 = vadd.f32 %v2681, %v2773
      %v2849 = vadd.f32 %v2682, %v2775
      %v2850 = vadd.f32 %v2683, %v2844
      %v2851 = vadd.f32 %v2684, %v2846
      %2852 = vrot.lane.b32.xlu0 %v1862, 113
      %v2853 = vpop.permute.xlu0 %2852
      %2854 = vrot.lane.b32.xlu0 %v1863, 113
      %v2855 = vpop.permute.xlu0 %2854
      %2856 = vrot.lane.b32.xlu0 %v1864, 113
      %v2857 = vpop.permute.xlu0 %2856
      %2858 = vrot.lane.b32.xlu0 %v1865, 113
      %v2859 = vpop.permute.xlu0 %2858
      %v2860 = vsel %vm1327, %v2857, %v2859
      %v2861 = vsel %vm1327, %v2855, %v2857
      %v2862 = vsel %vm1327, %v2853, %v2855
      %v2863 = vsel %vm1327, %v2859, %v2853
      %v2864 = vmul.f32 %v2862, %v1336
      %v2865 = vmul.f32 %v2861, %v1340
      %v2866 = vmul.f32 %v2860, %v1344
      %v2867 = vmul.f32 %v2863, %v1348
      %v2868 = vmul.f32 %v2864, %v307
      %v2869 = vmul.f32 %v2865, %v311
      %v2870 = vmul.f32 %v2866, %v315
      %v2871 = vmul.f32 %v2867, %v319
      %s2872 = scalar_lea.vmem %s2, 120
      %v2873 = vld [vmem:[%s2872] sm:$0xff]
      %v2875 = vsel %vm348, %v2873, 0
      %2877 = vmatprep.subr.mxu0 %v2869
      %2878 = vmatpush1.msra.mxu0 %v2868
      %2879 = vmatprep.subr.mxu0 0.0
      %2880 = vmatpush1.msra.mxu0 0.0
      %2881 = vmatprep.subr.mxu0 0.0
      %2882 = vmatpush1.msra.mxu0 0.0
      %2883 = vmatprep.subr.mxu0 0.0
      %2884 = vmatpush1.msra.mxu0 0.0
      %2885 = vmatprep.subr.mxu0 0.0
      %2886 = vmatpush1.msra.mxu0 0.0
      %2887 = vmatprep.subr.mxu0 0.0
      %2888 = vmatpush1.msra.mxu0 0.0
      %2889 = vmatprep.subr.mxu0 0.0
      %2890 = vmatpush1.msra.mxu0 0.0
      %2891 = vmatprep.subr.mxu0 0.0
      %2892 = vmatpush1.msra.mxu0 0.0
      %2893 = vmatprep.subr.mxu0 0.0
      %2894 = vmatpush1.msra.mxu0 0.0
      %2895 = vmatprep.subr.mxu0 0.0
      %2896 = vmatpush1.msra.mxu0 0.0
      %2897 = vmatprep.subr.mxu0 0.0
      %2898 = vmatpush1.msra.mxu0 0.0
      %2899 = vmatprep.subr.mxu0 0.0
      %2900 = vmatpush1.msra.mxu0 0.0
      %2901 = vmatprep.subr.mxu0 0.0
      %2902 = vmatpush1.msra.mxu0 0.0
      %2903 = vmatprep.subr.mxu0 0.0
      %2904 = vmatpush1.msra.mxu0 0.0
      %2905 = vmatprep.subr.mxu0 0.0
      %2906 = vmatpush1.msra.mxu0 0.0
      %2907 = vmatprep.subr.mxu0 0.0
      %2908 = vmatpush1.msra.mxu0 0.0
      %2909 = vmatprep.subr.mxu0 0.0
      %2910 = vmatpush1.msra.mxu0 0.0
      %2911 = vmatprep.subr.mxu0 0.0
      %2912 = vmatpush1.msra.mxu0 0.0
      %2913 = vmatprep.subr.mxu0 0.0
      %2914 = vmatpush1.msra.mxu0 0.0
      %2915 = vmatprep.subr.mxu0 0.0
      %2916 = vmatpush1.msra.mxu0 0.0
      %2917 = vmatprep.subr.mxu0 0.0
      %2918 = vmatpush1.msra.mxu0 0.0
      %2919 = vmatprep.subr.mxu0 0.0
      %2920 = vmatpush1.msra.mxu0 0.0
      %2921 = vmatprep.subr.mxu0 0.0
      %2922 = vmatpush1.msra.mxu0 0.0
      %2923 = vmatprep.subr.mxu0 0.0
      %2924 = vmatpush1.msra.mxu0 0.0
      %2925 = vmatprep.subr.mxu0 0.0
      %2926 = vmatpush1.msra.mxu0 0.0
      %2927 = vmatprep.subr.mxu0 0.0
      %2928 = vmatpush1.msra.mxu0 0.0
      %2929 = vmatprep.subr.mxu0 0.0
      %2930 = vmatpush1.msra.mxu0 0.0
      %2931 = vmatprep.subr.mxu0 0.0
      %2932 = vmatpush1.msra.mxu0 0.0
      %2933 = vmatprep.subr.mxu0 0.0
      %2934 = vmatpush1.msra.mxu0 0.0
      %2935 = vmatprep.subr.mxu0 0.0
      %2936 = vmatpush1.msra.mxu0 0.0
      %2937 = vmatprep.subr.mxu0 0.0
      %2938 = vmatpush1.msra.mxu0 0.0
      %2939 = vmatprep.subr.mxu0 0.0
      %2940 = vmatpush1.msra.mxu0 0.0
      %2941 = vmatprep.mubr.f32.mxu0 0.0
      %2942 = vmatmul.mubr.f32.gmra.mrb[0].mxu0 %v2875
      %v2943 = vpop.f32.mrb[0].mxu0
      %v2944 = vadd.f32 0.0, %v2943
      %v2945 = vpop.f32.mrb[0].mxu0
      %v2946 = vadd.f32 0.0, %v2945
      %2947 = vdwg.mxu0
      %2948 = vmatprep.subr.mxu0 %v2871
      %2949 = vmatpush1.msra.mxu0 %v2870
      %2950 = vmatprep.subr.mxu0 0.0
      %2951 = vmatpush1.msra.mxu0 0.0
      %2952 = vmatprep.subr.mxu0 0.0
      %2953 = vmatpush1.msra.mxu0 0.0
      %2954 = vmatprep.subr.mxu0 0.0
      %2955 = vmatpush1.msra.mxu0 0.0
      %2956 = vmatprep.subr.mxu0 0.0
      %2957 = vmatpush1.msra.mxu0 0.0
      %2958 = vmatprep.subr.mxu0 0.0
      %2959 = vmatpush1.msra.mxu0 0.0
      %2960 = vmatprep.subr.mxu0 0.0
      %2961 = vmatpush1.msra.mxu0 0.0
      %2962 = vmatprep.subr.mxu0 0.0
      %2963 = vmatpush1.msra.mxu0 0.0
      %2964 = vmatprep.subr.mxu0 0.0
      %2965 = vmatpush1.msra.mxu0 0.0
      %2966 = vmatprep.subr.mxu0 0.0
      %2967 = vmatpush1.msra.mxu0 0.0
      %2968 = vmatprep.subr.mxu0 0.0
      %2969 = vmatpush1.msra.mxu0 0.0
      %2970 = vmatprep.subr.mxu0 0.0
      %2971 = vmatpush1.msra.mxu0 0.0
      %2972 = vmatprep.subr.mxu0 0.0
      %2973 = vmatpush1.msra.mxu0 0.0
      %2974 = vmatprep.subr.mxu0 0.0
      %2975 = vmatpush1.msra.mxu0 0.0
      %2976 = vmatprep.subr.mxu0 0.0
      %2977 = vmatpush1.msra.mxu0 0.0
      %2978 = vmatprep.subr.mxu0 0.0
      %2979 = vmatpush1.msra.mxu0 0.0
      %2980 = vmatprep.subr.mxu0 0.0
      %2981 = vmatpush1.msra.mxu0 0.0
      %2982 = vmatprep.subr.mxu0 0.0
      %2983 = vmatpush1.msra.mxu0 0.0
      %2984 = vmatprep.subr.mxu0 0.0
      %2985 = vmatpush1.msra.mxu0 0.0
      %2986 = vmatprep.subr.mxu0 0.0
      %2987 = vmatpush1.msra.mxu0 0.0
      %2988 = vmatprep.subr.mxu0 0.0
      %2989 = vmatpush1.msra.mxu0 0.0
      %2990 = vmatprep.subr.mxu0 0.0
      %2991 = vmatpush1.msra.mxu0 0.0
      %2992 = vmatprep.subr.mxu0 0.0
      %2993 = vmatpush1.msra.mxu0 0.0
      %2994 = vmatprep.subr.mxu0 0.0
      %2995 = vmatpush1.msra.mxu0 0.0
      %2996 = vmatprep.subr.mxu0 0.0
      %2997 = vmatpush1.msra.mxu0 0.0
      %2998 = vmatprep.subr.mxu0 0.0
      %2999 = vmatpush1.msra.mxu0 0.0
      %3000 = vmatprep.subr.mxu0 0.0
      %3001 = vmatpush1.msra.mxu0 0.0
      %3002 = vmatprep.subr.mxu0 0.0
      %3003 = vmatpush1.msra.mxu0 0.0
      %3004 = vmatprep.subr.mxu0 0.0
      %3005 = vmatpush1.msra.mxu0 0.0
      %3006 = vmatprep.subr.mxu0 0.0
      %3007 = vmatpush1.msra.mxu0 0.0
      %3008 = vmatprep.subr.mxu0 0.0
      %3009 = vmatpush1.msra.mxu0 0.0
      %3010 = vmatprep.subr.mxu0 0.0
      %3011 = vmatpush1.msra.mxu0 0.0
      %3012 = vmatprep.mubr.f32.mxu0 0.0
      %3013 = vmatmul.mubr.f32.gmra.mrb[0].mxu0 %v2875
      %v3014 = vpop.f32.mrb[0].mxu0
      %v3015 = vadd.f32 0.0, %v3014
      %v3016 = vpop.f32.mrb[0].mxu0
      %v3017 = vadd.f32 0.0, %v3016
      %3018 = vdwg.mxu0
      %v3019 = vadd.f32 %v2848, %v2944
      %v3020 = vadd.f32 %v2849, %v2946
      %v3021 = vadd.f32 %v2850, %v3015
      %v3022 = vadd.f32 %v2851, %v3017
      %3023 = vrot.lane.b32.xlu0 %v1862, 112
      %v3024 = vpop.permute.xlu0 %3023
      %3025 = vrot.lane.b32.xlu0 %v1863, 112
      %v3026 = vpop.permute.xlu0 %3025
      %3027 = vrot.lane.b32.xlu0 %v1864, 112
      %v3028 = vpop.permute.xlu0 %3027
      %3029 = vrot.lane.b32.xlu0 %v1865, 112
      %v3030 = vpop.permute.xlu0 %3029
      %v3031 = vsel %vm1520, %v3028, %v3030
      %v3032 = vsel %vm1520, %v3026, %v3028
      %v3033 = vsel %vm1520, %v3024, %v3026
      %v3034 = vsel %vm1520, %v3030, %v3024
      %v3035 = vmul.f32 %v3033, %v1336
      %v3036 = vmul.f32 %v3032, %v1340
      %v3037 = vmul.f32 %v3031, %v1344
      %v3038 = vmul.f32 %v3034, %v1348
      %s3039 = scalar_lea.vmem %s2, 128
      %v3040 = vld [vmem:[%s3039] sm:$0xff]
      %v3042 = vsel %vm348, %v3040, 0
      %3044 = vmatprep.subr.mxu0 %v3036
      %3045 = vmatpush1.msra.mxu0 %v3035
      %3046 = vmatprep.subr.mxu0 0.0
      %3047 = vmatpush1.msra.mxu0 0.0
      %3048 = vmatprep.subr.mxu0 0.0
      %3049 = vmatpush1.msra.mxu0 0.0
      %3050 = vmatprep.subr.mxu0 0.0
      %3051 = vmatpush1.msra.mxu0 0.0
      %3052 = vmatprep.subr.mxu0 0.0
      %3053 = vmatpush1.msra.mxu0 0.0
      %3054 = vmatprep.subr.mxu0 0.0
      %3055 = vmatpush1.msra.mxu0 0.0
      %3056 = vmatprep.subr.mxu0 0.0
      %3057 = vmatpush1.msra.mxu0 0.0
      %3058 = vmatprep.subr.mxu0 0.0
      %3059 = vmatpush1.msra.mxu0 0.0
      %3060 = vmatprep.subr.mxu0 0.0
      %3061 = vmatpush1.msra.mxu0 0.0
      %3062 = vmatprep.subr.mxu0 0.0
      %3063 = vmatpush1.msra.mxu0 0.0
      %3064 = vmatprep.subr.mxu0 0.0
      %3065 = vmatpush1.msra.mxu0 0.0
      %3066 = vmatprep.subr.mxu0 0.0
      %3067 = vmatpush1.msra.mxu0 0.0
      %3068 = vmatprep.subr.mxu0 0.0
      %3069 = vmatpush1.msra.mxu0 0.0
      %3070 = vmatprep.subr.mxu0 0.0
      %3071 = vmatpush1.msra.mxu0 0.0
      %3072 = vmatprep.subr.mxu0 0.0
      %3073 = vmatpush1.msra.mxu0 0.0
      %3074 = vmatprep.subr.mxu0 0.0
      %3075 = vmatpush1.msra.mxu0 0.0
      %3076 = vmatprep.subr.mxu0 0.0
      %3077 = vmatpush1.msra.mxu0 0.0
      %3078 = vmatprep.subr.mxu0 0.0
      %3079 = vmatpush1.msra.mxu0 0.0
      %3080 = vmatprep.subr.mxu0 0.0
      %3081 = vmatpush1.msra.mxu0 0.0
      %3082 = vmatprep.subr.mxu0 0.0
      %3083 = vmatpush1.msra.mxu0 0.0
      %3084 = vmatprep.subr.mxu0 0.0
      %3085 = vmatpush1.msra.mxu0 0.0
      %3086 = vmatprep.subr.mxu0 0.0
      %3087 = vmatpush1.msra.mxu0 0.0
      %3088 = vmatprep.subr.mxu0 0.0
      %3089 = vmatpush1.msra.mxu0 0.0
      %3090 = vmatprep.subr.mxu0 0.0
      %3091 = vmatpush1.msra.mxu0 0.0
      %3092 = vmatprep.subr.mxu0 0.0
      %3093 = vmatpush1.msra.mxu0 0.0
      %3094 = vmatprep.subr.mxu0 0.0
      %3095 = vmatpush1.msra.mxu0 0.0
      %3096 = vmatprep.subr.mxu0 0.0
      %3097 = vmatpush1.msra.mxu0 0.0
      %3098 = vmatprep.subr.mxu0 0.0
      %3099 = vmatpush1.msra.mxu0 0.0
      %3100 = vmatprep.subr.mxu0 0.0
      %3101 = vmatpush1.msra.mxu0 0.0
      %3102 = vmatprep.subr.mxu0 0.0
      %3103 = vmatpush1.msra.mxu0 0.0
      %3104 = vmatprep.subr.mxu0 0.0
      %3105 = vmatpush1.msra.mxu0 0.0
      %3106 = vmatprep.subr.mxu0 0.0
      %3107 = vmatpush1.msra.mxu0 0.0
      %3108 = vmatprep.mubr.f32.mxu0 0.0
      %3109 = vmatmul.mubr.f32.gmra.mrb[0].mxu0 %v3042
      %v3110 = vpop.f32.mrb[0].mxu0
      %v3111 = vadd.f32 0.0, %v3110
      %v3112 = vpop.f32.mrb[0].mxu0
      %v3113 = vadd.f32 0.0, %v3112
      %3114 = vdwg.mxu0
      %3115 = vmatprep.subr.mxu0 %v3038
      %3116 = vmatpush1.msra.mxu0 %v3037
      %3117 = vmatprep.subr.mxu0 0.0
      %3118 = vmatpush1.msra.mxu0 0.0
      %3119 = vmatprep.subr.mxu0 0.0
      %3120 = vmatpush1.msra.mxu0 0.0
      %3121 = vmatprep.subr.mxu0 0.0
      %3122 = vmatpush1.msra.mxu0 0.0
      %3123 = vmatprep.subr.mxu0 0.0
      %3124 = vmatpush1.msra.mxu0 0.0
      %3125 = vmatprep.subr.mxu0 0.0
      %3126 = vmatpush1.msra.mxu0 0.0
      %3127 = vmatprep.subr.mxu0 0.0
      %3128 = vmatpush1.msra.mxu0 0.0
      %3129 = vmatprep.subr.mxu0 0.0
      %3130 = vmatpush1.msra.mxu0 0.0
      %3131 = vmatprep.subr.mxu0 0.0
      %3132 = vmatpush1.msra.mxu0 0.0
      %3133 = vmatprep.subr.mxu0 0.0
      %3134 = vmatpush1.msra.mxu0 0.0
      %3135 = vmatprep.subr.mxu0 0.0
      %3136 = vmatpush1.msra.mxu0 0.0
      %3137 = vmatprep.subr.mxu0 0.0
      %3138 = vmatpush1.msra.mxu0 0.0
      %3139 = vmatprep.subr.mxu0 0.0
      %3140 = vmatpush1.msra.mxu0 0.0
      %3141 = vmatprep.subr.mxu0 0.0
      %3142 = vmatpush1.msra.mxu0 0.0
      %3143 = vmatprep.subr.mxu0 0.0
      %3144 = vmatpush1.msra.mxu0 0.0
      %3145 = vmatprep.subr.mxu0 0.0
      %3146 = vmatpush1.msra.mxu0 0.0
      %3147 = vmatprep.subr.mxu0 0.0
      %3148 = vmatpush1.msra.mxu0 0.0
      %3149 = vmatprep.subr.mxu0 0.0
      %3150 = vmatpush1.msra.mxu0 0.0
      %3151 = vmatprep.subr.mxu0 0.0
      %3152 = vmatpush1.msra.mxu0 0.0
      %3153 = vmatprep.subr.mxu0 0.0
      %3154 = vmatpush1.msra.mxu0 0.0
      %3155 = vmatprep.subr.mxu0 0.0
      %3156 = vmatpush1.msra.mxu0 0.0
      %3157 = vmatprep.subr.mxu0 0.0
      %3158 = vmatpush1.msra.mxu0 0.0
      %3159 = vmatprep.subr.mxu0 0.0
      %3160 = vmatpush1.msra.mxu0 0.0
      %3161 = vmatprep.subr.mxu0 0.0
      %3162 = vmatpush1.msra.mxu0 0.0
      %3163 = vmatprep.subr.mxu0 0.0
      %3164 = vmatpush1.msra.mxu0 0.0
      %3165 = vmatprep.subr.mxu0 0.0
      %3166 = vmatpush1.msra.mxu0 0.0
      %3167 = vmatprep.subr.mxu0 0.0
      %3168 = vmatpush1.msra.mxu0 0.0
      %3169 = vmatprep.subr.mxu0 0.0
      %3170 = vmatpush1.msra.mxu0 0.0
      %3171 = vmatprep.subr.mxu0 0.0
      %3172 = vmatpush1.msra.mxu0 0.0
      %3173 = vmatprep.subr.mxu0 0.0
      %3174 = vmatpush1.msra.mxu0 0.0
      %3175 = vmatprep.subr.mxu0 0.0
      %3176 = vmatpush1.msra.mxu0 0.0
      %3177 = vmatprep.subr.mxu0 0.0
      %3178 = vmatpush1.msra.mxu0 0.0
      %3179 = vmatprep.mubr.f32.mxu0 0.0
      %3180 = vmatmul.mubr.f32.gmra.mrb[0].mxu0 %v3042
      %v3181 = vpop.f32.mrb[0].mxu0
      %v3182 = vadd.f32 0.0, %v3181
      %v3183 = vpop.f32.mrb[0].mxu0
      %v3184 = vadd.f32 0.0, %v3183
      %3185 = vdwg.mxu0
      %v3186 = vadd.f32 %v3019, %v3111
      %v3187 = vadd.f32 %v3020, %v3113
      %v3188 = vadd.f32 %v3021, %v3182
      %v3189 = vadd.f32 %v3022, %v3184
      %3190 = vrot.lane.b32.xlu0 %v1862, 111
      %v3191 = vpop.permute.xlu0 %3190
      %3192 = vrot.lane.b32.xlu0 %v1863, 111
      %v3193 = vpop.permute.xlu0 %3192
      %3194 = vrot.lane.b32.xlu0 %v1864, 111
      %v3195 = vpop.permute.xlu0 %3194
      %3196 = vrot.lane.b32.xlu0 %v1865, 111
      %v3197 = vpop.permute.xlu0 %3196
      %v3198 = vsel %vm1688, %v3195, %v3197
      %v3199 = vsel %vm1688, %v3193, %v3195
      %v3200 = vsel %vm1688, %v3191, %v3193
      %v3201 = vsel %vm1688, %v3197, %v3191
      %v3202 = vmul.f32 %v3200, %v1336
      %v3203 = vmul.f32 %v3199, %v1340
      %v3204 = vmul.f32 %v3198, %v1344
      %v3205 = vmul.f32 %v3201, %v1348
      %v3206 = vmul.f32 %v3202, %v660
      %v3207 = vmul.f32 %v3203, %v664
      %v3208 = vmul.f32 %v3204, %v668
      %v3209 = vmul.f32 %v3205, %v672
      %s3210 = scalar_lea.vmem %s2, 136
      %v3211 = vld [vmem:[%s3210] sm:$0xff]
      %v3213 = vsel %vm348, %v3211, 0
      %3215 = vmatprep.subr.mxu0 %v3207
      %3216 = vmatpush1.msra.mxu0 %v3206
      %3217 = vmatprep.subr.mxu0 0.0
      %3218 = vmatpush1.msra.mxu0 0.0
      %3219 = vmatprep.subr.mxu0 0.0
      %3220 = vmatpush1.msra.mxu0 0.0
      %3221 = vmatprep.subr.mxu0 0.0
      %3222 = vmatpush1.msra.mxu0 0.0
      %3223 = vmatprep.subr.mxu0 0.0
      %3224 = vmatpush1.msra.mxu0 0.0
      %3225 = vmatprep.subr.mxu0 0.0
      %3226 = vmatpush1.msra.mxu0 0.0
      %3227 = vmatprep.subr.mxu0 0.0
      %3228 = vmatpush1.msra.mxu0 0.0
      %3229 = vmatprep.subr.mxu0 0.0
      %3230 = vmatpush1.msra.mxu0 0.0
      %3231 = vmatprep.subr.mxu0 0.0
      %3232 = vmatpush1.msra.mxu0 0.0
      %3233 = vmatprep.subr.mxu0 0.0
      %3234 = vmatpush1.msra.mxu0 0.0
      %3235 = vmatprep.subr.mxu0 0.0
      %3236 = vmatpush1.msra.mxu0 0.0
      %3237 = vmatprep.subr.mxu0 0.0
      %3238 = vmatpush1.msra.mxu0 0.0
      %3239 = vmatprep.subr.mxu0 0.0
      %3240 = vmatpush1.msra.mxu0 0.0
      %3241 = vmatprep.subr.mxu0 0.0
      %3242 = vmatpush1.msra.mxu0 0.0
      %3243 = vmatprep.subr.mxu0 0.0
      %3244 = vmatpush1.msra.mxu0 0.0
      %3245 = vmatprep.subr.mxu0 0.0
      %3246 = vmatpush1.msra.mxu0 0.0
      %3247 = vmatprep.subr.mxu0 0.0
      %3248 = vmatpush1.msra.mxu0 0.0
      %3249 = vmatprep.subr.mxu0 0.0
      %3250 = vmatpush1.msra.mxu0 0.0
      %3251 = vmatprep.subr.mxu0 0.0
      %3252 = vmatpush1.msra.mxu0 0.0
      %3253 = vmatprep.subr.mxu0 0.0
      %3254 = vmatpush1.msra.mxu0 0.0
      %3255 = vmatprep.subr.mxu0 0.0
      %3256 = vmatpush1.msra.mxu0 0.0
      %3257 = vmatprep.subr.mxu0 0.0
      %3258 = vmatpush1.msra.mxu0 0.0
      %3259 = vmatprep.subr.mxu0 0.0
      %3260 = vmatpush1.msra.mxu0 0.0
      %3261 = vmatprep.subr.mxu0 0.0
      %3262 = vmatpush1.msra.mxu0 0.0
      %3263 = vmatprep.subr.mxu0 0.0
      %3264 = vmatpush1.msra.mxu0 0.0
      %3265 = vmatprep.subr.mxu0 0.0
      %3266 = vmatpush1.msra.mxu0 0.0
      %3267 = vmatprep.subr.mxu0 0.0
      %3268 = vmatpush1.msra.mxu0 0.0
      %3269 = vmatprep.subr.mxu0 0.0
      %3270 = vmatpush1.msra.mxu0 0.0
      %3271 = vmatprep.subr.mxu0 0.0
      %3272 = vmatpush1.msra.mxu0 0.0
      %3273 = vmatprep.subr.mxu0 0.0
      %3274 = vmatpush1.msra.mxu0 0.0
      %3275 = vmatprep.subr.mxu0 0.0
      %3276 = vmatpush1.msra.mxu0 0.0
      %3277 = vmatprep.subr.mxu0 0.0
      %3278 = vmatpush1.msra.mxu0 0.0
      %3279 = vmatprep.mubr.f32.mxu0 0.0
      %3280 = vmatmul.mubr.f32.gmra.mrb[0].mxu0 %v3213
      %v3281 = vpop.f32.mrb[0].mxu0
      %v3282 = vadd.f32 0.0, %v3281
      %v3283 = vpop.f32.mrb[0].mxu0
      %v3284 = vadd.f32 0.0, %v3283
      %3285 = vdwg.mxu0
      %3286 = vmatprep.subr.mxu0 %v3209
      %3287 = vmatpush1.msra.mxu0 %v3208
      %3288 = vmatprep.subr.mxu0 0.0
      %3289 = vmatpush1.msra.mxu0 0.0
      %3290 = vmatprep.subr.mxu0 0.0
      %3291 = vmatpush1.msra.mxu0 0.0
      %3292 = vmatprep.subr.mxu0 0.0
      %3293 = vmatpush1.msra.mxu0 0.0
      %3294 = vmatprep.subr.mxu0 0.0
      %3295 = vmatpush1.msra.mxu0 0.0
      %3296 = vmatprep.subr.mxu0 0.0
      %3297 = vmatpush1.msra.mxu0 0.0
      %3298 = vmatprep.subr.mxu0 0.0
      %3299 = vmatpush1.msra.mxu0 0.0
      %3300 = vmatprep.subr.mxu0 0.0
      %3301 = vmatpush1.msra.mxu0 0.0
      %3302 = vmatprep.subr.mxu0 0.0
      %3303 = vmatpush1.msra.mxu0 0.0
      %3304 = vmatprep.subr.mxu0 0.0
      %3305 = vmatpush1.msra.mxu0 0.0
      %3306 = vmatprep.subr.mxu0 0.0
      %3307 = vmatpush1.msra.mxu0 0.0
      %3308 = vmatprep.subr.mxu0 0.0
      %3309 = vmatpush1.msra.mxu0 0.0
      %3310 = vmatprep.subr.mxu0 0.0
      %3311 = vmatpush1.msra.mxu0 0.0
      %3312 = vmatprep.subr.mxu0 0.0
      %3313 = vmatpush1.msra.mxu0 0.0
      %3314 = vmatprep.subr.mxu0 0.0
      %3315 = vmatpush1.msra.mxu0 0.0
      %3316 = vmatprep.subr.mxu0 0.0
      %3317 = vmatpush1.msra.mxu0 0.0
      %3318 = vmatprep.subr.mxu0 0.0
      %3319 = vmatpush1.msra.mxu0 0.0
      %3320 = vmatprep.subr.mxu0 0.0
      %3321 = vmatpush1.msra.mxu0 0.0
      %3322 = vmatprep.subr.mxu0 0.0
      %3323 = vmatpush1.msra.mxu0 0.0
      %3324 = vmatprep.subr.mxu0 0.0
      %3325 = vmatpush1.msra.mxu0 0.0
      %3326 = vmatprep.subr.mxu0 0.0
      %3327 = vmatpush1.msra.mxu0 0.0
      %3328 = vmatprep.subr.mxu0 0.0
      %3329 = vmatpush1.msra.mxu0 0.0
      %3330 = vmatprep.subr.mxu0 0.0
      %3331 = vmatpush1.msra.mxu0 0.0
      %3332 = vmatprep.subr.mxu0 0.0
      %3333 = vmatpush1.msra.mxu0 0.0
      %3334 = vmatprep.subr.mxu0 0.0
      %3335 = vmatpush1.msra.mxu0 0.0
      %3336 = vmatprep.subr.mxu0 0.0
      %3337 = vmatpush1.msra.mxu0 0.0
      %3338 = vmatprep.subr.mxu0 0.0
      %3339 = vmatpush1.msra.mxu0 0.0
      %3340 = vmatprep.subr.mxu0 0.0
      %3341 = vmatpush1.msra.mxu0 0.0
      %3342 = vmatprep.subr.mxu0 0.0
      %3343 = vmatpush1.msra.mxu0 0.0
      %3344 = vmatprep.subr.mxu0 0.0
      %3345 = vmatpush1.msra.mxu0 0.0
      %3346 = vmatprep.subr.mxu0 0.0
      %3347 = vmatpush1.msra.mxu0 0.0
      %3348 = vmatprep.subr.mxu0 0.0
      %3349 = vmatpush1.msra.mxu0 0.0
      %3350 = vmatprep.mubr.f32.mxu0 0.0
      %3351 = vmatmul.mubr.f32.gmra.mrb[0].mxu0 %v3213
      %v3352 = vpop.f32.mrb[0].mxu0
      %v3353 = vadd.f32 0.0, %v3352
      %v3354 = vpop.f32.mrb[0].mxu0
      %v3355 = vadd.f32 0.0, %v3354
      %3356 = vdwg.mxu0
      %v3357 = vadd.f32 %v3186, %v3282
      %v3358 = vadd.f32 %v3187, %v3284
      %v3359 = vadd.f32 %v3188, %v3353
      %v3360 = vadd.f32 %v3189, %v3355
      %s3361 = scalar_lea.vmem %s3, 8
      %v3362 = vld [vmem:[%s3361] sm:$0xff]
      %3364 = vset.pattern.permute.xlu0 0
      %3365 = vperm.xlu0 %3364, %v3362
      %v3366 = vpop.permute.xlu0 %3365
      %v3368 = vadd.f32 %v3357, %v3366
      %v3369 = vadd.f32 %v3358, %v3366
      %v3370 = vadd.f32 %v3359, %v3366
      %v3371 = vadd.f32 %v3360, %v3366
      %v3372 = vmax.f32 %v3368, 0.0
      %v3373 = vmax.f32 %v3369, 0.0
      %v3374 = vmax.f32 %v3370, 0.0
      %v3375 = vmax.f32 %v3371, 0.0
      %3376 = vrot.lane.b32.xlu0 %v3372, 17
      %v3377 = vpop.permute.xlu0 %3376
      %3378 = vrot.lane.b32.xlu0 %v3373, 17
      %v3379 = vpop.permute.xlu0 %3378
      %3380 = vrot.lane.b32.xlu0 %v3374, 17
      %v3381 = vpop.permute.xlu0 %3380
      %3382 = vrot.lane.b32.xlu0 %v3375, 17
      %v3383 = vpop.permute.xlu0 %3382
      %v3384 = vsel %vm273, %v3381, %v3383
      %v3385 = vsel %vm273, %v3379, %v3381
      %v3386 = vsel %vm273, %v3377, %v3379
      %v3387 = vsel %vm273, %v3383, %v3377
      %v3388 = vmul.f32 %v3387, %v282
      %v3389 = vmul.f32 %v3386, %v286
      %v3390 = vmul.f32 %v3385, %v290
      %v3391 = vmul.f32 %v3384, %v294
      %v3392 = vmul.f32 %v3388, %v307
      %v3393 = vmul.f32 %v3389, %v311
      %v3394 = vmul.f32 %v3390, %v315
      %v3395 = vmul.f32 %v3391, %v319
      %s3396 = scalar_lea.vmem %s2, 144
      %v3397 = vld [vmem:[%s3396] sm:$0xff]
      %3398 = vrot.lane.b32.xlu0 %v3372, 16
      %v3399 = vpop.permute.xlu0 %3398
      %3400 = vrot.lane.b32.xlu0 %v3373, 16
      %v3401 = vpop.permute.xlu0 %3400
      %3402 = vrot.lane.b32.xlu0 %v3374, 16
      %v3403 = vpop.permute.xlu0 %3402
      %3404 = vrot.lane.b32.xlu0 %v3375, 16
      %v3405 = vpop.permute.xlu0 %3404
      %v3406 = vsel %vm337, %v3403, %v3405
      %v3407 = vsel %vm337, %v3401, %v3403
      %v3408 = vsel %vm337, %v3399, %v3401
      %v3409 = vsel %vm337, %v3405, %v3399
      %v3410 = vmul.f32 %v3409, %v282
      %v3411 = vmul.f32 %v3408, %v286
      %v3412 = vmul.f32 %v3407, %v290
      %v3413 = vmul.f32 %v3406, %v294
      %s3414 = scalar_lea.vmem %s2, 152
      %v3415 = vld [vmem:[%s3414] sm:$0xff]
      %v3417 = vsel %vm348, %v3415, 0
      %3419 = vmatprep.subr.mxu0 %v3411
      %3420 = vmatpush1.msra.mxu0 %v3410
      %3421 = vmatprep.subr.mxu0 0.0
      %3422 = vmatpush1.msra.mxu0 0.0
      %3423 = vmatprep.subr.mxu0 0.0
      %3424 = vmatpush1.msra.mxu0 0.0
      %3425 = vmatprep.subr.mxu0 0.0
      %3426 = vmatpush1.msra.mxu0 0.0
      %3427 = vmatprep.subr.mxu0 0.0
      %3428 = vmatpush1.msra.mxu0 0.0
      %3429 = vmatprep.subr.mxu0 0.0
      %3430 = vmatpush1.msra.mxu0 0.0
      %3431 = vmatprep.subr.mxu0 0.0
      %3432 = vmatpush1.msra.mxu0 0.0
      %3433 = vmatprep.subr.mxu0 0.0
      %3434 = vmatpush1.msra.mxu0 0.0
      %3435 = vmatprep.subr.mxu0 0.0
      %3436 = vmatpush1.msra.mxu0 0.0
      %3437 = vmatprep.subr.mxu0 0.0
      %3438 = vmatpush1.msra.mxu0 0.0
      %3439 = vmatprep.subr.mxu0 0.0
      %3440 = vmatpush1.msra.mxu0 0.0
      %3441 = vmatprep.subr.mxu0 0.0
      %3442 = vmatpush1.msra.mxu0 0.0
      %3443 = vmatprep.subr.mxu0 0.0
      %3444 = vmatpush1.msra.mxu0 0.0
      %3445 = vmatprep.subr.mxu0 0.0
      %3446 = vmatpush1.msra.mxu0 0.0
      %3447 = vmatprep.subr.mxu0 0.0
      %3448 = vmatpush1.msra.mxu0 0.0
      %3449 = vmatprep.subr.mxu0 0.0
      %3450 = vmatpush1.msra.mxu0 0.0
      %3451 = vmatprep.subr.mxu0 0.0
      %3452 = vmatpush1.msra.mxu0 0.0
      %3453 = vmatprep.subr.mxu0 0.0
      %3454 = vmatpush1.msra.mxu0 0.0
      %3455 = vmatprep.subr.mxu0 0.0
      %3456 = vmatpush1.msra.mxu0 0.0
      %3457 = vmatprep.subr.mxu0 0.0
      %3458 = vmatpush1.msra.mxu0 0.0
      %3459 = vmatprep.subr.mxu0 0.0
      %3460 = vmatpush1.msra.mxu0 0.0
      %3461 = vmatprep.subr.mxu0 0.0
      %3462 = vmatpush1.msra.mxu0 0.0
      %3463 = vmatprep.subr.mxu0 0.0
      %3464 = vmatpush1.msra.mxu0 0.0
      %3465 = vmatprep.subr.mxu0 0.0
      %3466 = vmatpush1.msra.mxu0 0.0
      %3467 = vmatprep.subr.mxu0 0.0
      %3468 = vmatpush1.msra.mxu0 0.0
      %3469 = vmatprep.subr.mxu0 0.0
      %3470 = vmatpush1.msra.mxu0 0.0
      %3471 = vmatprep.subr.mxu0 0.0
      %3472 = vmatpush1.msra.mxu0 0.0
      %3473 = vmatprep.subr.mxu0 0.0
      %3474 = vmatpush1.msra.mxu0 0.0
      %3475 = vmatprep.subr.mxu0 0.0
      %3476 = vmatpush1.msra.mxu0 0.0
      %3477 = vmatprep.subr.mxu0 0.0
      %3478 = vmatpush1.msra.mxu0 0.0
      %3479 = vmatprep.subr.mxu0 0.0
      %3480 = vmatpush1.msra.mxu0 0.0
      %3481 = vmatprep.subr.mxu0 0.0
      %3482 = vmatpush1.msra.mxu0 0.0
      %3483 = vmatprep.mubr.f32.mxu0 0.0
      %3484 = vmatmul.mubr.f32.gmra.mrb[0].mxu0 %v3417
      %v3485 = vpop.f32.mrb[0].mxu0
      %v3486 = vadd.f32 0.0, %v3485
      %v3487 = vpop.f32.mrb[0].mxu0
      %v3488 = vadd.f32 0.0, %v3487
      %3489 = vdwg.mxu0
      %3490 = vmatprep.subr.mxu0 %v3413
      %3491 = vmatpush1.msra.mxu0 %v3412
      %3492 = vmatprep.subr.mxu0 0.0
      %3493 = vmatpush1.msra.mxu0 0.0
      %3494 = vmatprep.subr.mxu0 0.0
      %3495 = vmatpush1.msra.mxu0 0.0
      %3496 = vmatprep.subr.mxu0 0.0
      %3497 = vmatpush1.msra.mxu0 0.0
      %3498 = vmatprep.subr.mxu0 0.0
      %3499 = vmatpush1.msra.mxu0 0.0
      %3500 = vmatprep.subr.mxu0 0.0
      %3501 = vmatpush1.msra.mxu0 0.0
      %3502 = vmatprep.subr.mxu0 0.0
      %3503 = vmatpush1.msra.mxu0 0.0
      %3504 = vmatprep.subr.mxu0 0.0
      %3505 = vmatpush1.msra.mxu0 0.0
      %3506 = vmatprep.subr.mxu0 0.0
      %3507 = vmatpush1.msra.mxu0 0.0
      %3508 = vmatprep.subr.mxu0 0.0
      %3509 = vmatpush1.msra.mxu0 0.0
      %3510 = vmatprep.subr.mxu0 0.0
      %3511 = vmatpush1.msra.mxu0 0.0
      %3512 = vmatprep.subr.mxu0 0.0
      %3513 = vmatpush1.msra.mxu0 0.0
      %3514 = vmatprep.subr.mxu0 0.0
      %3515 = vmatpush1.msra.mxu0 0.0
      %3516 = vmatprep.subr.mxu0 0.0
      %3517 = vmatpush1.msra.mxu0 0.0
      %3518 = vmatprep.subr.mxu0 0.0
      %3519 = vmatpush1.msra.mxu0 0.0
      %3520 = vmatprep.subr.mxu0 0.0
      %3521 = vmatpush1.msra.mxu0 0.0
      %3522 = vmatprep.subr.mxu0 0.0
      %3523 = vmatpush1.msra.mxu0 0.0
      %3524 = vmatprep.subr.mxu0 0.0
      %3525 = vmatpush1.msra.mxu0 0.0
      %3526 = vmatprep.subr.mxu0 0.0
      %3527 = vmatpush1.msra.mxu0 0.0
      %3528 = vmatprep.subr.mxu0 0.0
      %3529 = vmatpush1.msra.mxu0 0.0
      %3530 = vmatprep.subr.mxu0 0.0
      %3531 = vmatpush1.msra.mxu0 0.0
      %3532 = vmatprep.subr.mxu0 0.0
      %3533 = vmatpush1.msra.mxu0 0.0
      %3534 = vmatprep.subr.mxu0 0.0
      %3535 = vmatpush1.msra.mxu0 0.0
      %3536 = vmatprep.subr.mxu0 0.0
      %3537 = vmatpush1.msra.mxu0 0.0
      %3538 = vmatprep.subr.mxu0 0.0
      %3539 = vmatpush1.msra.mxu0 0.0
      %3540 = vmatprep.subr.mxu0 0.0
      %3541 = vmatpush1.msra.mxu0 0.0
      %3542 = vmatprep.subr.mxu0 0.0
      %3543 = vmatpush1.msra.mxu0 0.0
      %3544 = vmatprep.subr.mxu0 0.0
      %3545 = vmatpush1.msra.mxu0 0.0
      %3546 = vmatprep.subr.mxu0 0.0
      %3547 = vmatpush1.msra.mxu0 0.0
      %3548 = vmatprep.subr.mxu0 0.0
      %3549 = vmatpush1.msra.mxu0 0.0
      %3550 = vmatprep.subr.mxu0 0.0
      %3551 = vmatpush1.msra.mxu0 0.0
      %3552 = vmatprep.subr.mxu0 0.0
      %3553 = vmatpush1.msra.mxu0 0.0
      %3554 = vmatprep.mubr.f32.mxu0 0.0
      %3555 = vmatmul.mubr.f32.gmra.mrb[0].mxu0 %v3417
      %v3556 = vpop.f32.mrb[0].mxu0
      %v3557 = vadd.f32 0.0, %v3556
      %v3558 = vpop.f32.mrb[0].mxu0
      %v3559 = vadd.f32 0.0, %v3558
      %3560 = vdwg.mxu0
      %v3562 = vsel %vm348, %v3397, 0
      %3564 = vmatprep.subr.mxu0 %v3393
      %3565 = vmatpush1.msra.mxu0 %v3392
      %3566 = vmatprep.subr.mxu0 0.0
      %3567 = vmatpush1.msra.mxu0 0.0
      %3568 = vmatprep.subr.mxu0 0.0
      %3569 = vmatpush1.msra.mxu0 0.0
      %3570 = vmatprep.subr.mxu0 0.0
      %3571 = vmatpush1.msra.mxu0 0.0
      %3572 = vmatprep.subr.mxu0 0.0
      %3573 = vmatpush1.msra.mxu0 0.0
      %3574 = vmatprep.subr.mxu0 0.0
      %3575 = vmatpush1.msra.mxu0 0.0
      %3576 = vmatprep.subr.mxu0 0.0
      %3577 = vmatpush1.msra.mxu0 0.0
      %3578 = vmatprep.subr.mxu0 0.0
      %3579 = vmatpush1.msra.mxu0 0.0
      %3580 = vmatprep.subr.mxu0 0.0
      %3581 = vmatpush1.msra.mxu0 0.0
      %3582 = vmatprep.subr.mxu0 0.0
      %3583 = vmatpush1.msra.mxu0 0.0
      %3584 = vmatprep.subr.mxu0 0.0
      %3585 = vmatpush1.msra.mxu0 0.0
      %3586 = vmatprep.subr.mxu0 0.0
      %3587 = vmatpush1.msra.mxu0 0.0
      %3588 = vmatprep.subr.mxu0 0.0
      %3589 = vmatpush1.msra.mxu0 0.0
      %3590 = vmatprep.subr.mxu0 0.0
      %3591 = vmatpush1.msra.mxu0 0.0
      %3592 = vmatprep.subr.mxu0 0.0
      %3593 = vmatpush1.msra.mxu0 0.0
      %3594 = vmatprep.subr.mxu0 0.0
      %3595 = vmatpush1.msra.mxu0 0.0
      %3596 = vmatprep.subr.mxu0 0.0
      %3597 = vmatpush1.msra.mxu0 0.0
      %3598 = vmatprep.subr.mxu0 0.0
      %3599 = vmatpush1.msra.mxu0 0.0
      %3600 = vmatprep.subr.mxu0 0.0
      %3601 = vmatpush1.msra.mxu0 0.0
      %3602 = vmatprep.subr.mxu0 0.0
      %3603 = vmatpush1.msra.mxu0 0.0
      %3604 = vmatprep.subr.mxu0 0.0
      %3605 = vmatpush1.msra.mxu0 0.0
      %3606 = vmatprep.subr.mxu0 0.0
      %3607 = vmatpush1.msra.mxu0 0.0
      %3608 = vmatprep.subr.mxu0 0.0
      %3609 = vmatpush1.msra.mxu0 0.0
      %3610 = vmatprep.subr.mxu0 0.0
      %3611 = vmatpush1.msra.mxu0 0.0
      %3612 = vmatprep.subr.mxu0 0.0
      %3613 = vmatpush1.msra.mxu0 0.0
      %3614 = vmatprep.subr.mxu0 0.0
      %3615 = vmatpush1.msra.mxu0 0.0
      %3616 = vmatprep.subr.mxu0 0.0
      %3617 = vmatpush1.msra.mxu0 0.0
      %3618 = vmatprep.subr.mxu0 0.0
      %3619 = vmatpush1.msra.mxu0 0.0
      %3620 = vmatprep.subr.mxu0 0.0
      %3621 = vmatpush1.msra.mxu0 0.0
      %3622 = vmatprep.subr.mxu0 0.0
      %3623 = vmatpush1.msra.mxu0 0.0
      %3624 = vmatprep.subr.mxu0 0.0
      %3625 = vmatpush1.msra.mxu0 0.0
      %3626 = vmatprep.subr.mxu0 0.0
      %3627 = vmatpush1.msra.mxu0 0.0
      %3628 = vmatprep.mubr.f32.mxu0 0.0
      %3629 = vmatmul.mubr.f32.gmra.mrb[0].mxu0 %v3562
      %v3630 = vpop.f32.mrb[0].mxu0
      %v3631 = vadd.f32 %v3486, %v3630
      %v3632 = vpop.f32.mrb[0].mxu0
      %v3633 = vadd.f32 %v3488, %v3632
      %3634 = vdwg.mxu0
      %3635 = vmatprep.subr.mxu0 %v3395
      %3636 = vmatpush1.msra.mxu0 %v3394
      %3637 = vmatprep.subr.mxu0 0.0
      %3638 = vmatpush1.msra.mxu0 0.0
      %3639 = vmatprep.subr.mxu0 0.0
      %3640 = vmatpush1.msra.mxu0 0.0
      %3641 = vmatprep.subr.mxu0 0.0
      %3642 = vmatpush1.msra.mxu0 0.0
      %3643 = vmatprep.subr.mxu0 0.0
      %3644 = vmatpush1.msra.mxu0 0.0
      %3645 = vmatprep.subr.mxu0 0.0
      %3646 = vmatpush1.msra.mxu0 0.0
      %3647 = vmatprep.subr.mxu0 0.0
      %3648 = vmatpush1.msra.mxu0 0.0
      %3649 = vmatprep.subr.mxu0 0.0
      %3650 = vmatpush1.msra.mxu0 0.0
      %3651 = vmatprep.subr.mxu0 0.0
      %3652 = vmatpush1.msra.mxu0 0.0
      %3653 = vmatprep.subr.mxu0 0.0
      %3654 = vmatpush1.msra.mxu0 0.0
      %3655 = vmatprep.subr.mxu0 0.0
      %3656 = vmatpush1.msra.mxu0 0.0
      %3657 = vmatprep.subr.mxu0 0.0
      %3658 = vmatpush1.msra.mxu0 0.0
      %3659 = vmatprep.subr.mxu0 0.0
      %3660 = vmatpush1.msra.mxu0 0.0
      %3661 = vmatprep.subr.mxu0 0.0
      %3662 = vmatpush1.msra.mxu0 0.0
      %3663 = vmatprep.subr.mxu0 0.0
      %3664 = vmatpush1.msra.mxu0 0.0
      %3665 = vmatprep.subr.mxu0 0.0
      %3666 = vmatpush1.msra.mxu0 0.0
      %3667 = vmatprep.subr.mxu0 0.0
      %3668 = vmatpush1.msra.mxu0 0.0
      %3669 = vmatprep.subr.mxu0 0.0
      %3670 = vmatpush1.msra.mxu0 0.0
      %3671 = vmatprep.subr.mxu0 0.0
      %3672 = vmatpush1.msra.mxu0 0.0
      %3673 = vmatprep.subr.mxu0 0.0
      %3674 = vmatpush1.msra.mxu0 0.0
      %3675 = vmatprep.subr.mxu0 0.0
      %3676 = vmatpush1.msra.mxu0 0.0
      %3677 = vmatprep.subr.mxu0 0.0
      %3678 = vmatpush1.msra.mxu0 0.0
      %3679 = vmatprep.subr.mxu0 0.0
      %3680 = vmatpush1.msra.mxu0 0.0
      %3681 = vmatprep.subr.mxu0 0.0
      %3682 = vmatpush1.msra.mxu0 0.0
      %3683 = vmatprep.subr.mxu0 0.0
      %3684 = vmatpush1.msra.mxu0 0.0
      %3685 = vmatprep.subr.mxu0 0.0
      %3686 = vmatpush1.msra.mxu0 0.0
      %3687 = vmatprep.subr.mxu0 0.0
      %3688 = vmatpush1.msra.mxu0 0.0
      %3689 = vmatprep.subr.mxu0 0.0
      %3690 = vmatpush1.msra.mxu0 0.0
      %3691 = vmatprep.subr.mxu0 0.0
      %3692 = vmatpush1.msra.mxu0 0.0
      %3693 = vmatprep.subr.mxu0 0.0
      %3694 = vmatpush1.msra.mxu0 0.0
      %3695 = vmatprep.subr.mxu0 0.0
      %3696 = vmatpush1.msra.mxu0 0.0
      %3697 = vmatprep.subr.mxu0 0.0
      %3698 = vmatpush1.msra.mxu0 0.0
      %3699 = vmatprep.mubr.f32.mxu0 0.0
      %3700 = vmatmul.mubr.f32.gmra.mrb[0].mxu0 %v3562
      %v3701 = vpop.f32.mrb[0].mxu0
      %v3702 = vadd.f32 %v3557, %v3701
      %v3703 = vpop.f32.mrb[0].mxu0
      %v3704 = vadd.f32 %v3559, %v3703
      %3705 = vdwg.mxu0
      %3706 = vrot.lane.b32.xlu0 %v3372, 15
      %v3707 = vpop.permute.xlu0 %3706
      %3708 = vrot.lane.b32.xlu0 %v3373, 15
      %v3709 = vpop.permute.xlu0 %3708
      %3710 = vrot.lane.b32.xlu0 %v3374, 15
      %v3711 = vpop.permute.xlu0 %3710
      %3712 = vrot.lane.b32.xlu0 %v3375, 15
      %v3713 = vpop.permute.xlu0 %3712
      %v3714 = vsel %vm647, %v3711, %v3713
      %v3715 = vsel %vm647, %v3709, %v3711
      %v3716 = vsel %vm647, %v3707, %v3709
      %v3717 = vsel %vm647, %v3713, %v3707
      %v3718 = vmul.f32 %v3717, %v282
      %v3719 = vmul.f32 %v3716, %v286
      %v3720 = vmul.f32 %v3715, %v290
      %v3721 = vmul.f32 %v3714, %v294
      %v3722 = vmul.f32 %v3718, %v660
      %v3723 = vmul.f32 %v3719, %v664
      %v3724 = vmul.f32 %v3720, %v668
      %v3725 = vmul.f32 %v3721, %v672
      %s3726 = scalar_lea.vmem %s2, 160
      %v3727 = vld [vmem:[%s3726] sm:$0xff]
      %v3729 = vsel %vm348, %v3727, 0
      %3731 = vmatprep.subr.mxu0 %v3723
      %3732 = vmatpush1.msra.mxu0 %v3722
      %3733 = vmatprep.subr.mxu0 0.0
      %3734 = vmatpush1.msra.mxu0 0.0
      %3735 = vmatprep.subr.mxu0 0.0
      %3736 = vmatpush1.msra.mxu0 0.0
      %3737 = vmatprep.subr.mxu0 0.0
      %3738 = vmatpush1.msra.mxu0 0.0
      %3739 = vmatprep.subr.mxu0 0.0
      %3740 = vmatpush1.msra.mxu0 0.0
      %3741 = vmatprep.subr.mxu0 0.0
      %3742 = vmatpush1.msra.mxu0 0.0
      %3743 = vmatprep.subr.mxu0 0.0
      %3744 = vmatpush1.msra.mxu0 0.0
      %3745 = vmatprep.subr.mxu0 0.0
      %3746 = vmatpush1.msra.mxu0 0.0
      %3747 = vmatprep.subr.mxu0 0.0
      %3748 = vmatpush1.msra.mxu0 0.0
      %3749 = vmatprep.subr.mxu0 0.0
      %3750 = vmatpush1.msra.mxu0 0.0
      %3751 = vmatprep.subr.mxu0 0.0
      %3752 = vmatpush1.msra.mxu0 0.0
      %3753 = vmatprep.subr.mxu0 0.0
      %3754 = vmatpush1.msra.mxu0 0.0
      %3755 = vmatprep.subr.mxu0 0.0
      %3756 = vmatpush1.msra.mxu0 0.0
      %3757 = vmatprep.subr.mxu0 0.0
      %3758 = vmatpush1.msra.mxu0 0.0
      %3759 = vmatprep.subr.mxu0 0.0
      %3760 = vmatpush1.msra.mxu0 0.0
      %3761 = vmatprep.subr.mxu0 0.0
      %3762 = vmatpush1.msra.mxu0 0.0
      %3763 = vmatprep.subr.mxu0 0.0
      %3764 = vmatpush1.msra.mxu0 0.0
      %3765 = vmatprep.subr.mxu0 0.0
      %3766 = vmatpush1.msra.mxu0 0.0
      %3767 = vmatprep.subr.mxu0 0.0
      %3768 = vmatpush1.msra.mxu0 0.0
      %3769 = vmatprep.subr.mxu0 0.0
      %3770 = vmatpush1.msra.mxu0 0.0
      %3771 = vmatprep.subr.mxu0 0.0
      %3772 = vmatpush1.msra.mxu0 0.0
      %3773 = vmatprep.subr.mxu0 0.0
      %3774 = vmatpush1.msra.mxu0 0.0
      %3775 = vmatprep.subr.mxu0 0.0
      %3776 = vmatpush1.msra.mxu0 0.0
      %3777 = vmatprep.subr.mxu0 0.0
      %3778 = vmatpush1.msra.mxu0 0.0
      %3779 = vmatprep.subr.mxu0 0.0
      %3780 = vmatpush1.msra.mxu0 0.0
      %3781 = vmatprep.subr.mxu0 0.0
      %3782 = vmatpush1.msra.mxu0 0.0
      %3783 = vmatprep.subr.mxu0 0.0
      %3784 = vmatpush1.msra.mxu0 0.0
      %3785 = vmatprep.subr.mxu0 0.0
      %3786 = vmatpush1.msra.mxu0 0.0
      %3787 = vmatprep.subr.mxu0 0.0
      %3788 = vmatpush1.msra.mxu0 0.0
      %3789 = vmatprep.subr.mxu0 0.0
      %3790 = vmatpush1.msra.mxu0 0.0
      %3791 = vmatprep.subr.mxu0 0.0
      %3792 = vmatpush1.msra.mxu0 0.0
      %3793 = vmatprep.subr.mxu0 0.0
      %3794 = vmatpush1.msra.mxu0 0.0
      %3795 = vmatprep.mubr.f32.mxu0 0.0
      %3796 = vmatmul.mubr.f32.gmra.mrb[0].mxu0 %v3729
      %v3797 = vpop.f32.mrb[0].mxu0
      %v3798 = vadd.f32 0.0, %v3797
      %v3799 = vpop.f32.mrb[0].mxu0
      %v3800 = vadd.f32 0.0, %v3799
      %3801 = vdwg.mxu0
      %3802 = vmatprep.subr.mxu0 %v3725
      %3803 = vmatpush1.msra.mxu0 %v3724
      %3804 = vmatprep.subr.mxu0 0.0
      %3805 = vmatpush1.msra.mxu0 0.0
      %3806 = vmatprep.subr.mxu0 0.0
      %3807 = vmatpush1.msra.mxu0 0.0
      %3808 = vmatprep.subr.mxu0 0.0
      %3809 = vmatpush1.msra.mxu0 0.0
      %3810 = vmatprep.subr.mxu0 0.0
      %3811 = vmatpush1.msra.mxu0 0.0
      %3812 = vmatprep.subr.mxu0 0.0
      %3813 = vmatpush1.msra.mxu0 0.0
      %3814 = vmatprep.subr.mxu0 0.0
      %3815 = vmatpush1.msra.mxu0 0.0
      %3816 = vmatprep.subr.mxu0 0.0
      %3817 = vmatpush1.msra.mxu0 0.0
      %3818 = vmatprep.subr.mxu0 0.0
      %3819 = vmatpush1.msra.mxu0 0.0
      %3820 = vmatprep.subr.mxu0 0.0
      %3821 = vmatpush1.msra.mxu0 0.0
      %3822 = vmatprep.subr.mxu0 0.0
      %3823 = vmatpush1.msra.mxu0 0.0
      %3824 = vmatprep.subr.mxu0 0.0
      %3825 = vmatpush1.msra.mxu0 0.0
      %3826 = vmatprep.subr.mxu0 0.0
      %3827 = vmatpush1.msra.mxu0 0.0
      %3828 = vmatprep.subr.mxu0 0.0
      %3829 = vmatpush1.msra.mxu0 0.0
      %3830 = vmatprep.subr.mxu0 0.0
      %3831 = vmatpush1.msra.mxu0 0.0
      %3832 = vmatprep.subr.mxu0 0.0
      %3833 = vmatpush1.msra.mxu0 0.0
      %3834 = vmatprep.subr.mxu0 0.0
      %3835 = vmatpush1.msra.mxu0 0.0
      %3836 = vmatprep.subr.mxu0 0.0
      %3837 = vmatpush1.msra.mxu0 0.0
      %3838 = vmatprep.subr.mxu0 0.0
      %3839 = vmatpush1.msra.mxu0 0.0
      %3840 = vmatprep.subr.mxu0 0.0
      %3841 = vmatpush1.msra.mxu0 0.0
      %3842 = vmatprep.subr.mxu0 0.0
      %3843 = vmatpush1.msra.mxu0 0.0
      %3844 = vmatprep.subr.mxu0 0.0
      %3845 = vmatpush1.msra.mxu0 0.0
      %3846 = vmatprep.subr.mxu0 0.0
      %3847 = vmatpush1.msra.mxu0 0.0
      %3848 = vmatprep.subr.mxu0 0.0
      %3849 = vmatpush1.msra.mxu0 0.0
      %3850 = vmatprep.subr.mxu0 0.0
      %3851 = vmatpush1.msra.mxu0 0.0
      %3852 = vmatprep.subr.mxu0 0.0
      %3853 = vmatpush1.msra.mxu0 0.0
      %3854 = vmatprep.subr.mxu0 0.0
      %3855 = vmatpush1.msra.mxu0 0.0
      %3856 = vmatprep.subr.mxu0 0.0
      %3857 = vmatpush1.msra.mxu0 0.0
      %3858 = vmatprep.subr.mxu0 0.0
      %3859 = vmatpush1.msra.mxu0 0.0
      %3860 = vmatprep.subr.mxu0 0.0
      %3861 = vmatpush1.msra.mxu0 0.0
      %3862 = vmatprep.subr.mxu0 0.0
      %3863 = vmatpush1.msra.mxu0 0.0
      %3864 = vmatprep.subr.mxu0 0.0
      %3865 = vmatpush1.msra.mxu0 0.0
      %3866 = vmatprep.mubr.f32.mxu0 0.0
      %3867 = vmatmul.mubr.f32.gmra.mrb[0].mxu0 %v3729
      %v3868 = vpop.f32.mrb[0].mxu0
      %v3869 = vadd.f32 0.0, %v3868
      %v3870 = vpop.f32.mrb[0].mxu0
      %v3871 = vadd.f32 0.0, %v3870
      %3872 = vdwg.mxu0
      %v3873 = vadd.f32 %v3631, %v3798
      %v3874 = vadd.f32 %v3633, %v3800
      %v3875 = vadd.f32 %v3702, %v3869
      %v3876 = vadd.f32 %v3704, %v3871
      %3877 = vrot.lane.b32.xlu0 %v3372, 1
      %v3878 = vpop.permute.xlu0 %3877
      %3879 = vrot.lane.b32.xlu0 %v3373, 1
      %v3880 = vpop.permute.xlu0 %3879
      %3881 = vrot.lane.b32.xlu0 %v3374, 1
      %v3882 = vpop.permute.xlu0 %3881
      %3883 = vrot.lane.b32.xlu0 %v3375, 1
      %v3884 = vpop.permute.xlu0 %3883
      %v3885 = vsel %vm840, %v3882, %v3884
      %v3886 = vsel %vm840, %v3880, %v3882
      %v3887 = vsel %vm840, %v3878, %v3880
      %v3888 = vsel %vm840, %v3884, %v3878
      %v3889 = vmul.f32 %v3888, %v307
      %v3890 = vmul.f32 %v3887, %v311
      %v3891 = vmul.f32 %v3886, %v315
      %v3892 = vmul.f32 %v3885, %v319
      %s3893 = scalar_lea.vmem %s2, 168
      %v3894 = vld [vmem:[%s3893] sm:$0xff]
      %v3896 = vsel %vm348, %v3894, 0
      %3898 = vmatprep.subr.mxu0 %v3890
      %3899 = vmatpush1.msra.mxu0 %v3889
      %3900 = vmatprep.subr.mxu0 0.0
      %3901 = vmatpush1.msra.mxu0 0.0
      %3902 = vmatprep.subr.mxu0 0.0
      %3903 = vmatpush1.msra.mxu0 0.0
      %3904 = vmatprep.subr.mxu0 0.0
      %3905 = vmatpush1.msra.mxu0 0.0
      %3906 = vmatprep.subr.mxu0 0.0
      %3907 = vmatpush1.msra.mxu0 0.0
      %3908 = vmatprep.subr.mxu0 0.0
      %3909 = vmatpush1.msra.mxu0 0.0
      %3910 = vmatprep.subr.mxu0 0.0
      %3911 = vmatpush1.msra.mxu0 0.0
      %3912 = vmatprep.subr.mxu0 0.0
      %3913 = vmatpush1.msra.mxu0 0.0
      %3914 = vmatprep.subr.mxu0 0.0
      %3915 = vmatpush1.msra.mxu0 0.0
      %3916 = vmatprep.subr.mxu0 0.0
      %3917 = vmatpush1.msra.mxu0 0.0
      %3918 = vmatprep.subr.mxu0 0.0
      %3919 = vmatpush1.msra.mxu0 0.0
      %3920 = vmatprep.subr.mxu0 0.0
      %3921 = vmatpush1.msra.mxu0 0.0
      %3922 = vmatprep.subr.mxu0 0.0
      %3923 = vmatpush1.msra.mxu0 0.0
      %3924 = vmatprep.subr.mxu0 0.0
      %3925 = vmatpush1.msra.mxu0 0.0
      %3926 = vmatprep.subr.mxu0 0.0
      %3927 = vmatpush1.msra.mxu0 0.0
      %3928 = vmatprep.subr.mxu0 0.0
      %3929 = vmatpush1.msra.mxu0 0.0
      %3930 = vmatprep.subr.mxu0 0.0
      %3931 = vmatpush1.msra.mxu0 0.0
      %3932 = vmatprep.subr.mxu0 0.0
      %3933 = vmatpush1.msra.mxu0 0.0
      %3934 = vmatprep.subr.mxu0 0.0
      %3935 = vmatpush1.msra.mxu0 0.0
      %3936 = vmatprep.subr.mxu0 0.0
      %3937 = vmatpush1.msra.mxu0 0.0
      %3938 = vmatprep.subr.mxu0 0.0
      %3939 = vmatpush1.msra.mxu0 0.0
      %3940 = vmatprep.subr.mxu0 0.0
      %3941 = vmatpush1.msra.mxu0 0.0
      %3942 = vmatprep.subr.mxu0 0.0
      %3943 = vmatpush1.msra.mxu0 0.0
      %3944 = vmatprep.subr.mxu0 0.0
      %3945 = vmatpush1.msra.mxu0 0.0
      %3946 = vmatprep.subr.mxu0 0.0
      %3947 = vmatpush1.msra.mxu0 0.0
      %3948 = vmatprep.subr.mxu0 0.0
      %3949 = vmatpush1.msra.mxu0 0.0
      %3950 = vmatprep.subr.mxu0 0.0
      %3951 = vmatpush1.msra.mxu0 0.0
      %3952 = vmatprep.subr.mxu0 0.0
      %3953 = vmatpush1.msra.mxu0 0.0
      %3954 = vmatprep.subr.mxu0 0.0
      %3955 = vmatpush1.msra.mxu0 0.0
      %3956 = vmatprep.subr.mxu0 0.0
      %3957 = vmatpush1.msra.mxu0 0.0
      %3958 = vmatprep.subr.mxu0 0.0
      %3959 = vmatpush1.msra.mxu0 0.0
      %3960 = vmatprep.subr.mxu0 0.0
      %3961 = vmatpush1.msra.mxu0 0.0
      %3962 = vmatprep.mubr.f32.mxu0 0.0
      %3963 = vmatmul.mubr.f32.gmra.mrb[0].mxu0 %v3896
      %v3964 = vpop.f32.mrb[0].mxu0
      %v3965 = vadd.f32 0.0, %v3964
      %v3966 = vpop.f32.mrb[0].mxu0
      %v3967 = vadd.f32 0.0, %v3966
      %3968 = vdwg.mxu0
      %3969 = vmatprep.subr.mxu0 %v3892
      %3970 = vmatpush1.msra.mxu0 %v3891
      %3971 = vmatprep.subr.mxu0 0.0
      %3972 = vmatpush1.msra.mxu0 0.0
      %3973 = vmatprep.subr.mxu0 0.0
      %3974 = vmatpush1.msra.mxu0 0.0
      %3975 = vmatprep.subr.mxu0 0.0
      %3976 = vmatpush1.msra.mxu0 0.0
      %3977 = vmatprep.subr.mxu0 0.0
      %3978 = vmatpush1.msra.mxu0 0.0
      %3979 = vmatprep.subr.mxu0 0.0
      %3980 = vmatpush1.msra.mxu0 0.0
      %3981 = vmatprep.subr.mxu0 0.0
      %3982 = vmatpush1.msra.mxu0 0.0
      %3983 = vmatprep.subr.mxu0 0.0
      %3984 = vmatpush1.msra.mxu0 0.0
      %3985 = vmatprep.subr.mxu0 0.0
      %3986 = vmatpush1.msra.mxu0 0.0
      %3987 = vmatprep.subr.mxu0 0.0
      %3988 = vmatpush1.msra.mxu0 0.0
      %3989 = vmatprep.subr.mxu0 0.0
      %3990 = vmatpush1.msra.mxu0 0.0
      %3991 = vmatprep.subr.mxu0 0.0
      %3992 = vmatpush1.msra.mxu0 0.0
      %3993 = vmatprep.subr.mxu0 0.0
      %3994 = vmatpush1.msra.mxu0 0.0
      %3995 = vmatprep.subr.mxu0 0.0
      %3996 = vmatpush1.msra.mxu0 0.0
      %3997 = vmatprep.subr.mxu0 0.0
      %3998 = vmatpush1.msra.mxu0 0.0
      %3999 = vmatprep.subr.mxu0 0.0
      %4000 = vmatpush1.msra.mxu0 0.0
      %4001 = vmatprep.subr.mxu0 0.0
      %4002 = vmatpush1.msra.mxu0 0.0
      %4003 = vmatprep.subr.mxu0 0.0
      %4004 = vmatpush1.msra.mxu0 0.0
      %4005 = vmatprep.subr.mxu0 0.0
      %4006 = vmatpush1.msra.mxu0 0.0
      %4007 = vmatprep.subr.mxu0 0.0
      %4008 = vmatpush1.msra.mxu0 0.0
      %4009 = vmatprep.subr.mxu0 0.0
      %4010 = vmatpush1.msra.mxu0 0.0
      %4011 = vmatprep.subr.mxu0 0.0
      %4012 = vmatpush1.msra.mxu0 0.0
      %4013 = vmatprep.subr.mxu0 0.0
      %4014 = vmatpush1.msra.mxu0 0.0
      %4015 = vmatprep.subr.mxu0 0.0
      %4016 = vmatpush1.msra.mxu0 0.0
      %4017 = vmatprep.subr.mxu0 0.0
      %4018 = vmatpush1.msra.mxu0 0.0
      %4019 = vmatprep.subr.mxu0 0.0
      %4020 = vmatpush1.msra.mxu0 0.0
      %4021 = vmatprep.subr.mxu0 0.0
      %4022 = vmatpush1.msra.mxu0 0.0
      %4023 = vmatprep.subr.mxu0 0.0
      %4024 = vmatpush1.msra.mxu0 0.0
      %4025 = vmatprep.subr.mxu0 0.0
      %4026 = vmatpush1.msra.mxu0 0.0
      %4027 = vmatprep.subr.mxu0 0.0
      %4028 = vmatpush1.msra.mxu0 0.0
      %4029 = vmatprep.subr.mxu0 0.0
      %4030 = vmatpush1.msra.mxu0 0.0
      %4031 = vmatprep.subr.mxu0 0.0
      %4032 = vmatpush1.msra.mxu0 0.0
      %4033 = vmatprep.mubr.f32.mxu0 0.0
      %4034 = vmatmul.mubr.f32.gmra.mrb[0].mxu0 %v3896
      %v4035 = vpop.f32.mrb[0].mxu0
      %v4036 = vadd.f32 0.0, %v4035
      %v4037 = vpop.f32.mrb[0].mxu0
      %v4038 = vadd.f32 0.0, %v4037
      %4039 = vdwg.mxu0
      %v4040 = vadd.f32 %v3873, %v3965
      %v4041 = vadd.f32 %v3874, %v3967
      %v4042 = vadd.f32 %v3875, %v4036
      %v4043 = vadd.f32 %v3876, %v4038
      %s4044 = scalar_lea.vmem %s2, 176
      %v4045 = vld [vmem:[%s4044] sm:$0xff]
      %v4047 = vsel %vm348, %v4045, 0
      %4049 = vmatprep.subr.mxu0 %v3373
      %4050 = vmatpush1.msra.mxu0 %v3372
      %4051 = vmatprep.subr.mxu0 0.0
      %4052 = vmatpush1.msra.mxu0 0.0
      %4053 = vmatprep.subr.mxu0 0.0
      %4054 = vmatpush1.msra.mxu0 0.0
      %4055 = vmatprep.subr.mxu0 0.0
      %4056 = vmatpush1.msra.mxu0 0.0
      %4057 = vmatprep.subr.mxu0 0.0
      %4058 = vmatpush1.msra.mxu0 0.0
      %4059 = vmatprep.subr.mxu0 0.0
      %4060 = vmatpush1.msra.mxu0 0.0
      %4061 = vmatprep.subr.mxu0 0.0
      %4062 = vmatpush1.msra.mxu0 0.0
      %4063 = vmatprep.subr.mxu0 0.0
      %4064 = vmatpush1.msra.mxu0 0.0
      %4065 = vmatprep.subr.mxu0 0.0
      %4066 = vmatpush1.msra.mxu0 0.0
      %4067 = vmatprep.subr.mxu0 0.0
      %4068 = vmatpush1.msra.mxu0 0.0
      %4069 = vmatprep.subr.mxu0 0.0
      %4070 = vmatpush1.msra.mxu0 0.0
      %4071 = vmatprep.subr.mxu0 0.0
      %4072 = vmatpush1.msra.mxu0 0.0
      %4073 = vmatprep.subr.mxu0 0.0
      %4074 = vmatpush1.msra.mxu0 0.0
      %4075 = vmatprep.subr.mxu0 0.0
      %4076 = vmatpush1.msra.mxu0 0.0
      %4077 = vmatprep.subr.mxu0 0.0
      %4078 = vmatpush1.msra.mxu0 0.0
      %4079 = vmatprep.subr.mxu0 0.0
      %4080 = vmatpush1.msra.mxu0 0.0
      %4081 = vmatprep.subr.mxu0 0.0
      %4082 = vmatpush1.msra.mxu0 0.0
      %4083 = vmatprep.subr.mxu0 0.0
      %4084 = vmatpush1.msra.mxu0 0.0
      %4085 = vmatprep.subr.mxu0 0.0
      %4086 = vmatpush1.msra.mxu0 0.0
      %4087 = vmatprep.subr.mxu0 0.0
      %4088 = vmatpush1.msra.mxu0 0.0
      %4089 = vmatprep.subr.mxu0 0.0
      %4090 = vmatpush1.msra.mxu0 0.0
      %4091 = vmatprep.subr.mxu0 0.0
      %4092 = vmatpush1.msra.mxu0 0.0
      %4093 = vmatprep.subr.mxu0 0.0
      %4094 = vmatpush1.msra.mxu0 0.0
      %4095 = vmatprep.subr.mxu0 0.0
      %4096 = vmatpush1.msra.mxu0 0.0
      %4097 = vmatprep.subr.mxu0 0.0
      %4098 = vmatpush1.msra.mxu0 0.0
      %4099 = vmatprep.subr.mxu0 0.0
      %4100 = vmatpush1.msra.mxu0 0.0
      %4101 = vmatprep.subr.mxu0 0.0
      %4102 = vmatpush1.msra.mxu0 0.0
      %4103 = vmatprep.subr.mxu0 0.0
      %4104 = vmatpush1.msra.mxu0 0.0
      %4105 = vmatprep.subr.mxu0 0.0
      %4106 = vmatpush1.msra.mxu0 0.0
      %4107 = vmatprep.subr.mxu0 0.0
      %4108 = vmatpush1.msra.mxu0 0.0
      %4109 = vmatprep.subr.mxu0 0.0
      %4110 = vmatpush1.msra.mxu0 0.0
      %4111 = vmatprep.subr.mxu0 0.0
      %4112 = vmatpush1.msra.mxu0 0.0
      %4113 = vmatprep.mubr.f32.mxu0 0.0
      %4114 = vmatmul.mubr.f32.gmra.mrb[0].mxu0 %v4047
      %v4115 = vpop.f32.mrb[0].mxu0
      %v4116 = vadd.f32 0.0, %v4115
      %v4117 = vpop.f32.mrb[0].mxu0
      %v4118 = vadd.f32 0.0, %v4117
      %4119 = vdwg.mxu0
      %4120 = vmatprep.subr.mxu0 %v3375
      %4121 = vmatpush1.msra.mxu0 %v3374
      %4122 = vmatprep.subr.mxu0 0.0
      %4123 = vmatpush1.msra.mxu0 0.0
      %4124 = vmatprep.subr.mxu0 0.0
      %4125 = vmatpush1.msra.mxu0 0.0
      %4126 = vmatprep.subr.mxu0 0.0
      %4127 = vmatpush1.msra.mxu0 0.0
      %4128 = vmatprep.subr.mxu0 0.0
      %4129 = vmatpush1.msra.mxu0 0.0
      %4130 = vmatprep.subr.mxu0 0.0
      %4131 = vmatpush1.msra.mxu0 0.0
      %4132 = vmatprep.subr.mxu0 0.0
      %4133 = vmatpush1.msra.mxu0 0.0
      %4134 = vmatprep.subr.mxu0 0.0
      %4135 = vmatpush1.msra.mxu0 0.0
      %4136 = vmatprep.subr.mxu0 0.0
      %4137 = vmatpush1.msra.mxu0 0.0
      %4138 = vmatprep.subr.mxu0 0.0
      %4139 = vmatpush1.msra.mxu0 0.0
      %4140 = vmatprep.subr.mxu0 0.0
      %4141 = vmatpush1.msra.mxu0 0.0
      %4142 = vmatprep.subr.mxu0 0.0
      %4143 = vmatpush1.msra.mxu0 0.0
      %4144 = vmatprep.subr.mxu0 0.0
      %4145 = vmatpush1.msra.mxu0 0.0
      %4146 = vmatprep.subr.mxu0 0.0
      %4147 = vmatpush1.msra.mxu0 0.0
      %4148 = vmatprep.subr.mxu0 0.0
      %4149 = vmatpush1.msra.mxu0 0.0
      %4150 = vmatprep.subr.mxu0 0.0
      %4151 = vmatpush1.msra.mxu0 0.0
      %4152 = vmatprep.subr.mxu0 0.0
      %4153 = vmatpush1.msra.mxu0 0.0
      %4154 = vmatprep.subr.mxu0 0.0
      %4155 = vmatpush1.msra.mxu0 0.0
      %4156 = vmatprep.subr.mxu0 0.0
      %4157 = vmatpush1.msra.mxu0 0.0
      %4158 = vmatprep.subr.mxu0 0.0
      %4159 = vmatpush1.msra.mxu0 0.0
      %4160 = vmatprep.subr.mxu0 0.0
      %4161 = vmatpush1.msra.mxu0 0.0
      %4162 = vmatprep.subr.mxu0 0.0
      %4163 = vmatpush1.msra.mxu0 0.0
      %4164 = vmatprep.subr.mxu0 0.0
      %4165 = vmatpush1.msra.mxu0 0.0
      %4166 = vmatprep.subr.mxu0 0.0
      %4167 = vmatpush1.msra.mxu0 0.0
      %4168 = vmatprep.subr.mxu0 0.0
      %4169 = vmatpush1.msra.mxu0 0.0
      %4170 = vmatprep.subr.mxu0 0.0
      %4171 = vmatpush1.msra.mxu0 0.0
      %4172 = vmatprep.subr.mxu0 0.0
      %4173 = vmatpush1.msra.mxu0 0.0
      %4174 = vmatprep.subr.mxu0 0.0
      %4175 = vmatpush1.msra.mxu0 0.0
      %4176 = vmatprep.subr.mxu0 0.0
      %4177 = vmatpush1.msra.mxu0 0.0
      %4178 = vmatprep.subr.mxu0 0.0
      %4179 = vmatpush1.msra.mxu0 0.0
      %4180 = vmatprep.subr.mxu0 0.0
      %4181 = vmatpush1.msra.mxu0 0.0
      %4182 = vmatprep.subr.mxu0 0.0
      %4183 = vmatpush1.msra.mxu0 0.0
      %4184 = vmatprep.mubr.f32.mxu0 0.0
      %4185 = vmatmul.mubr.f32.gmra.mrb[0].mxu0 %v4047
      %v4186 = vpop.f32.mrb[0].mxu0
      %v4187 = vadd.f32 0.0, %v4186
      %v4188 = vpop.f32.mrb[0].mxu0
      %v4189 = vadd.f32 0.0, %v4188
      %4190 = vdwg.mxu0
      %v4191 = vadd.f32 %v4040, %v4116
      %v4192 = vadd.f32 %v4041, %v4118
      %v4193 = vadd.f32 %v4042, %v4187
      %v4194 = vadd.f32 %v4043, %v4189
      %4195 = vrot.lane.b32.xlu0 %v3372, 127
      %v4196 = vpop.permute.xlu0 %4195
      %4197 = vrot.lane.b32.xlu0 %v3373, 127
      %v4198 = vpop.permute.xlu0 %4197
      %4199 = vrot.lane.b32.xlu0 %v3374, 127
      %v4200 = vpop.permute.xlu0 %4199
      %4201 = vrot.lane.b32.xlu0 %v3375, 127
      %v4202 = vpop.permute.xlu0 %4201
      %v4203 = vsel %vm1159, %v4200, %v4202
      %v4204 = vsel %vm1159, %v4198, %v4200
      %v4205 = vsel %vm1159, %v4196, %v4198
      %v4206 = vsel %vm1159, %v4202, %v4196
      %v4207 = vmul.f32 %v4205, %v660
      %v4208 = vmul.f32 %v4204, %v664
      %v4209 = vmul.f32 %v4203, %v668
      %v4210 = vmul.f32 %v4206, %v672
      %s4211 = scalar_lea.vmem %s2, 184
      %v4212 = vld [vmem:[%s4211] sm:$0xff]
      %v4214 = vsel %vm348, %v4212, 0
      %4216 = vmatprep.subr.mxu0 %v4208
      %4217 = vmatpush1.msra.mxu0 %v4207
      %4218 = vmatprep.subr.mxu0 0.0
      %4219 = vmatpush1.msra.mxu0 0.0
      %4220 = vmatprep.subr.mxu0 0.0
      %4221 = vmatpush1.msra.mxu0 0.0
      %4222 = vmatprep.subr.mxu0 0.0
      %4223 = vmatpush1.msra.mxu0 0.0
      %4224 = vmatprep.subr.mxu0 0.0
      %4225 = vmatpush1.msra.mxu0 0.0
      %4226 = vmatprep.subr.mxu0 0.0
      %4227 = vmatpush1.msra.mxu0 0.0
      %4228 = vmatprep.subr.mxu0 0.0
      %4229 = vmatpush1.msra.mxu0 0.0
      %4230 = vmatprep.subr.mxu0 0.0
      %4231 = vmatpush1.msra.mxu0 0.0
      %4232 = vmatprep.subr.mxu0 0.0
      %4233 = vmatpush1.msra.mxu0 0.0
      %4234 = vmatprep.subr.mxu0 0.0
      %4235 = vmatpush1.msra.mxu0 0.0
      %4236 = vmatprep.subr.mxu0 0.0
      %4237 = vmatpush1.msra.mxu0 0.0
      %4238 = vmatprep.subr.mxu0 0.0
      %4239 = vmatpush1.msra.mxu0 0.0
      %4240 = vmatprep.subr.mxu0 0.0
      %4241 = vmatpush1.msra.mxu0 0.0
      %4242 = vmatprep.subr.mxu0 0.0
      %4243 = vmatpush1.msra.mxu0 0.0
      %4244 = vmatprep.subr.mxu0 0.0
      %4245 = vmatpush1.msra.mxu0 0.0
      %4246 = vmatprep.subr.mxu0 0.0
      %4247 = vmatpush1.msra.mxu0 0.0
      %4248 = vmatprep.subr.mxu0 0.0
      %4249 = vmatpush1.msra.mxu0 0.0
      %4250 = vmatprep.subr.mxu0 0.0
      %4251 = vmatpush1.msra.mxu0 0.0
      %4252 = vmatprep.subr.mxu0 0.0
      %4253 = vmatpush1.msra.mxu0 0.0
      %4254 = vmatprep.subr.mxu0 0.0
      %4255 = vmatpush1.msra.mxu0 0.0
      %4256 = vmatprep.subr.mxu0 0.0
      %4257 = vmatpush1.msra.mxu0 0.0
      %4258 = vmatprep.subr.mxu0 0.0
      %4259 = vmatpush1.msra.mxu0 0.0
      %4260 = vmatprep.subr.mxu0 0.0
      %4261 = vmatpush1.msra.mxu0 0.0
      %4262 = vmatprep.subr.mxu0 0.0
      %4263 = vmatpush1.msra.mxu0 0.0
      %4264 = vmatprep.subr.mxu0 0.0
      %4265 = vmatpush1.msra.mxu0 0.0
      %4266 = vmatprep.subr.mxu0 0.0
      %4267 = vmatpush1.msra.mxu0 0.0
      %4268 = vmatprep.subr.mxu0 0.0
      %4269 = vmatpush1.msra.mxu0 0.0
      %4270 = vmatprep.subr.mxu0 0.0
      %4271 = vmatpush1.msra.mxu0 0.0
      %4272 = vmatprep.subr.mxu0 0.0
      %4273 = vmatpush1.msra.mxu0 0.0
      %4274 = vmatprep.subr.mxu0 0.0
      %4275 = vmatpush1.msra.mxu0 0.0
      %4276 = vmatprep.subr.mxu0 0.0
      %4277 = vmatpush1.msra.mxu0 0.0
      %4278 = vmatprep.subr.mxu0 0.0
      %4279 = vmatpush1.msra.mxu0 0.0
      %4280 = vmatprep.mubr.f32.mxu0 0.0
      %4281 = vmatmul.mubr.f32.gmra.mrb[0].mxu0 %v4214
      %v4282 = vpop.f32.mrb[0].mxu0
      %v4283 = vadd.f32 0.0, %v4282
      %v4284 = vpop.f32.mrb[0].mxu0
      %v4285 = vadd.f32 0.0, %v4284
      %4286 = vdwg.mxu0
      %4287 = vmatprep.subr.mxu0 %v4210
      %4288 = vmatpush1.msra.mxu0 %v4209
      %4289 = vmatprep.subr.mxu0 0.0
      %4290 = vmatpush1.msra.mxu0 0.0
      %4291 = vmatprep.subr.mxu0 0.0
      %4292 = vmatpush1.msra.mxu0 0.0
      %4293 = vmatprep.subr.mxu0 0.0
      %4294 = vmatpush1.msra.mxu0 0.0
      %4295 = vmatprep.subr.mxu0 0.0
      %4296 = vmatpush1.msra.mxu0 0.0
      %4297 = vmatprep.subr.mxu0 0.0
      %4298 = vmatpush1.msra.mxu0 0.0
      %4299 = vmatprep.subr.mxu0 0.0
      %4300 = vmatpush1.msra.mxu0 0.0
      %4301 = vmatprep.subr.mxu0 0.0
      %4302 = vmatpush1.msra.mxu0 0.0
      %4303 = vmatprep.subr.mxu0 0.0
      %4304 = vmatpush1.msra.mxu0 0.0
      %4305 = vmatprep.subr.mxu0 0.0
      %4306 = vmatpush1.msra.mxu0 0.0
      %4307 = vmatprep.subr.mxu0 0.0
      %4308 = vmatpush1.msra.mxu0 0.0
      %4309 = vmatprep.subr.mxu0 0.0
      %4310 = vmatpush1.msra.mxu0 0.0
      %4311 = vmatprep.subr.mxu0 0.0
      %4312 = vmatpush1.msra.mxu0 0.0
      %4313 = vmatprep.subr.mxu0 0.0
      %4314 = vmatpush1.msra.mxu0 0.0
      %4315 = vmatprep.subr.mxu0 0.0
      %4316 = vmatpush1.msra.mxu0 0.0
      %4317 = vmatprep.subr.mxu0 0.0
      %4318 = vmatpush1.msra.mxu0 0.0
      %4319 = vmatprep.subr.mxu0 0.0
      %4320 = vmatpush1.msra.mxu0 0.0
      %4321 = vmatprep.subr.mxu0 0.0
      %4322 = vmatpush1.msra.mxu0 0.0
      %4323 = vmatprep.subr.mxu0 0.0
      %4324 = vmatpush1.msra.mxu0 0.0
      %4325 = vmatprep.subr.mxu0 0.0
      %4326 = vmatpush1.msra.mxu0 0.0
      %4327 = vmatprep.subr.mxu0 0.0
      %4328 = vmatpush1.msra.mxu0 0.0
      %4329 = vmatprep.subr.mxu0 0.0
      %4330 = vmatpush1.msra.mxu0 0.0
      %4331 = vmatprep.subr.mxu0 0.0
      %4332 = vmatpush1.msra.mxu0 0.0
      %4333 = vmatprep.subr.mxu0 0.0
      %4334 = vmatpush1.msra.mxu0 0.0
      %4335 = vmatprep.subr.mxu0 0.0
      %4336 = vmatpush1.msra.mxu0 0.0
      %4337 = vmatprep.subr.mxu0 0.0
      %4338 = vmatpush1.msra.mxu0 0.0
      %4339 = vmatprep.subr.mxu0 0.0
      %4340 = vmatpush1.msra.mxu0 0.0
      %4341 = vmatprep.subr.mxu0 0.0
      %4342 = vmatpush1.msra.mxu0 0.0
      %4343 = vmatprep.subr.mxu0 0.0
      %4344 = vmatpush1.msra.mxu0 0.0
      %4345 = vmatprep.subr.mxu0 0.0
      %4346 = vmatpush1.msra.mxu0 0.0
      %4347 = vmatprep.subr.mxu0 0.0
      %4348 = vmatpush1.msra.mxu0 0.0
      %4349 = vmatprep.subr.mxu0 0.0
      %4350 = vmatpush1.msra.mxu0 0.0
      %4351 = vmatprep.mubr.f32.mxu0 0.0
      %4352 = vmatmul.mubr.f32.gmra.mrb[0].mxu0 %v4214
      %v4353 = vpop.f32.mrb[0].mxu0
      %v4354 = vadd.f32 0.0, %v4353
      %v4355 = vpop.f32.mrb[0].mxu0
      %v4356 = vadd.f32 0.0, %v4355
      %4357 = vdwg.mxu0
      %v4358 = vadd.f32 %v4191, %v4283
      %v4359 = vadd.f32 %v4192, %v4285
      %v4360 = vadd.f32 %v4193, %v4354
      %v4361 = vadd.f32 %v4194, %v4356
      %4362 = vrot.lane.b32.xlu0 %v3372, 113
      %v4363 = vpop.permute.xlu0 %4362
      %4364 = vrot.lane.b32.xlu0 %v3373, 113
      %v4365 = vpop.permute.xlu0 %4364
      %4366 = vrot.lane.b32.xlu0 %v3374, 113
      %v4367 = vpop.permute.xlu0 %4366
      %4368 = vrot.lane.b32.xlu0 %v3375, 113
      %v4369 = vpop.permute.xlu0 %4368
      %v4370 = vsel %vm1327, %v4367, %v4369
      %v4371 = vsel %vm1327, %v4365, %v4367
      %v4372 = vsel %vm1327, %v4363, %v4365
      %v4373 = vsel %vm1327, %v4369, %v4363
      %v4374 = vmul.f32 %v4372, %v1336
      %v4375 = vmul.f32 %v4371, %v1340
      %v4376 = vmul.f32 %v4370, %v1344
      %v4377 = vmul.f32 %v4373, %v1348
      %v4378 = vmul.f32 %v4374, %v307
      %v4379 = vmul.f32 %v4375, %v311
      %v4380 = vmul.f32 %v4376, %v315
      %v4381 = vmul.f32 %v4377, %v319
      %s4382 = scalar_lea.vmem %s2, 192
      %v4383 = vld [vmem:[%s4382] sm:$0xff]
      %v4385 = vsel %vm348, %v4383, 0
      %4387 = vmatprep.subr.mxu0 %v4379
      %4388 = vmatpush1.msra.mxu0 %v4378
      %4389 = vmatprep.subr.mxu0 0.0
      %4390 = vmatpush1.msra.mxu0 0.0
      %4391 = vmatprep.subr.mxu0 0.0
      %4392 = vmatpush1.msra.mxu0 0.0
      %4393 = vmatprep.subr.mxu0 0.0
      %4394 = vmatpush1.msra.mxu0 0.0
      %4395 = vmatprep.subr.mxu0 0.0
      %4396 = vmatpush1.msra.mxu0 0.0
      %4397 = vmatprep.subr.mxu0 0.0
      %4398 = vmatpush1.msra.mxu0 0.0
      %4399 = vmatprep.subr.mxu0 0.0
      %4400 = vmatpush1.msra.mxu0 0.0
      %4401 = vmatprep.subr.mxu0 0.0
      %4402 = vmatpush1.msra.mxu0 0.0
      %4403 = vmatprep.subr.mxu0 0.0
      %4404 = vmatpush1.msra.mxu0 0.0
      %4405 = vmatprep.subr.mxu0 0.0
      %4406 = vmatpush1.msra.mxu0 0.0
      %4407 = vmatprep.subr.mxu0 0.0
      %4408 = vmatpush1.msra.mxu0 0.0
      %4409 = vmatprep.subr.mxu0 0.0
      %4410 = vmatpush1.msra.mxu0 0.0
      %4411 = vmatprep.subr.mxu0 0.0
      %4412 = vmatpush1.msra.mxu0 0.0
      %4413 = vmatprep.subr.mxu0 0.0
      %4414 = vmatpush1.msra.mxu0 0.0
      %4415 = vmatprep.subr.mxu0 0.0
      %4416 = vmatpush1.msra.mxu0 0.0
      %4417 = vmatprep.subr.mxu0 0.0
      %4418 = vmatpush1.msra.mxu0 0.0
      %4419 = vmatprep.subr.mxu0 0.0
      %4420 = vmatpush1.msra.mxu0 0.0
      %4421 = vmatprep.subr.mxu0 0.0
      %4422 = vmatpush1.msra.mxu0 0.0
      %4423 = vmatprep.subr.mxu0 0.0
      %4424 = vmatpush1.msra.mxu0 0.0
      %4425 = vmatprep.subr.mxu0 0.0
      %4426 = vmatpush1.msra.mxu0 0.0
      %4427 = vmatprep.subr.mxu0 0.0
      %4428 = vmatpush1.msra.mxu0 0.0
      %4429 = vmatprep.subr.mxu0 0.0
      %4430 = vmatpush1.msra.mxu0 0.0
      %4431 = vmatprep.subr.mxu0 0.0
      %4432 = vmatpush1.msra.mxu0 0.0
      %4433 = vmatprep.subr.mxu0 0.0
      %4434 = vmatpush1.msra.mxu0 0.0
      %4435 = vmatprep.subr.mxu0 0.0
      %4436 = vmatpush1.msra.mxu0 0.0
      %4437 = vmatprep.subr.mxu0 0.0
      %4438 = vmatpush1.msra.mxu0 0.0
      %4439 = vmatprep.subr.mxu0 0.0
      %4440 = vmatpush1.msra.mxu0 0.0
      %4441 = vmatprep.subr.mxu0 0.0
      %4442 = vmatpush1.msra.mxu0 0.0
      %4443 = vmatprep.subr.mxu0 0.0
      %4444 = vmatpush1.msra.mxu0 0.0
      %4445 = vmatprep.subr.mxu0 0.0
      %4446 = vmatpush1.msra.mxu0 0.0
      %4447 = vmatprep.subr.mxu0 0.0
      %4448 = vmatpush1.msra.mxu0 0.0
      %4449 = vmatprep.subr.mxu0 0.0
      %4450 = vmatpush1.msra.mxu0 0.0
      %4451 = vmatprep.mubr.f32.mxu0 0.0
      %4452 = vmatmul.mubr.f32.gmra.mrb[0].mxu0 %v4385
      %v4453 = vpop.f32.mrb[0].mxu0
      %v4454 = vadd.f32 0.0, %v4453
      %v4455 = vpop.f32.mrb[0].mxu0
      %v4456 = vadd.f32 0.0, %v4455
      %4457 = vdwg.mxu0
      %4458 = vmatprep.subr.mxu0 %v4381
      %4459 = vmatpush1.msra.mxu0 %v4380
      %4460 = vmatprep.subr.mxu0 0.0
      %4461 = vmatpush1.msra.mxu0 0.0
      %4462 = vmatprep.subr.mxu0 0.0
      %4463 = vmatpush1.msra.mxu0 0.0
      %4464 = vmatprep.subr.mxu0 0.0
      %4465 = vmatpush1.msra.mxu0 0.0
      %4466 = vmatprep.subr.mxu0 0.0
      %4467 = vmatpush1.msra.mxu0 0.0
      %4468 = vmatprep.subr.mxu0 0.0
      %4469 = vmatpush1.msra.mxu0 0.0
      %4470 = vmatprep.subr.mxu0 0.0
      %4471 = vmatpush1.msra.mxu0 0.0
      %4472 = vmatprep.subr.mxu0 0.0
      %4473 = vmatpush1.msra.mxu0 0.0
      %4474 = vmatprep.subr.mxu0 0.0
      %4475 = vmatpush1.msra.mxu0 0.0
      %4476 = vmatprep.subr.mxu0 0.0
      %4477 = vmatpush1.msra.mxu0 0.0
      %4478 = vmatprep.subr.mxu0 0.0
      %4479 = vmatpush1.msra.mxu0 0.0
      %4480 = vmatprep.subr.mxu0 0.0
      %4481 = vmatpush1.msra.mxu0 0.0
      %4482 = vmatprep.subr.mxu0 0.0
      %4483 = vmatpush1.msra.mxu0 0.0
      %4484 = vmatprep.subr.mxu0 0.0
      %4485 = vmatpush1.msra.mxu0 0.0
      %4486 = vmatprep.subr.mxu0 0.0
      %4487 = vmatpush1.msra.mxu0 0.0
      %4488 = vmatprep.subr.mxu0 0.0
      %4489 = vmatpush1.msra.mxu0 0.0
      %4490 = vmatprep.subr.mxu0 0.0
      %4491 = vmatpush1.msra.mxu0 0.0
      %4492 = vmatprep.subr.mxu0 0.0
      %4493 = vmatpush1.msra.mxu0 0.0
      %4494 = vmatprep.subr.mxu0 0.0
      %4495 = vmatpush1.msra.mxu0 0.0
      %4496 = vmatprep.subr.mxu0 0.0
      %4497 = vmatpush1.msra.mxu0 0.0
      %4498 = vmatprep.subr.mxu0 0.0
      %4499 = vmatpush1.msra.mxu0 0.0
      %4500 = vmatprep.subr.mxu0 0.0
      %4501 = vmatpush1.msra.mxu0 0.0
      %4502 = vmatprep.subr.mxu0 0.0
      %4503 = vmatpush1.msra.mxu0 0.0
      %4504 = vmatprep.subr.mxu0 0.0
      %4505 = vmatpush1.msra.mxu0 0.0
      %4506 = vmatprep.subr.mxu0 0.0
      %4507 = vmatpush1.msra.mxu0 0.0
      %4508 = vmatprep.subr.mxu0 0.0
      %4509 = vmatpush1.msra.mxu0 0.0
      %4510 = vmatprep.subr.mxu0 0.0
      %4511 = vmatpush1.msra.mxu0 0.0
      %4512 = vmatprep.subr.mxu0 0.0
      %4513 = vmatpush1.msra.mxu0 0.0
      %4514 = vmatprep.subr.mxu0 0.0
      %4515 = vmatpush1.msra.mxu0 0.0
      %4516 = vmatprep.subr.mxu0 0.0
      %4517 = vmatpush1.msra.mxu0 0.0
      %4518 = vmatprep.subr.mxu0 0.0
      %4519 = vmatpush1.msra.mxu0 0.0
      %4520 = vmatprep.subr.mxu0 0.0
      %4521 = vmatpush1.msra.mxu0 0.0
      %4522 = vmatprep.mubr.f32.mxu0 0.0
      %4523 = vmatmul.mubr.f32.gmra.mrb[0].mxu0 %v4385
      %v4524 = vpop.f32.mrb[0].mxu0
      %v4525 = vadd.f32 0.0, %v4524
      %v4526 = vpop.f32.mrb[0].mxu0
      %v4527 = vadd.f32 0.0, %v4526
      %4528 = vdwg.mxu0
      %v4529 = vadd.f32 %v4358, %v4454
      %v4530 = vadd.f32 %v4359, %v4456
      %v4531 = vadd.f32 %v4360, %v4525
      %v4532 = vadd.f32 %v4361, %v4527
      %4533 = vrot.lane.b32.xlu0 %v3372, 112
      %v4534 = vpop.permute.xlu0 %4533
      %4535 = vrot.lane.b32.xlu0 %v3373, 112
      %v4536 = vpop.permute.xlu0 %4535
      %4537 = vrot.lane.b32.xlu0 %v3374, 112
      %v4538 = vpop.permute.xlu0 %4537
      %4539 = vrot.lane.b32.xlu0 %v3375, 112
      %v4540 = vpop.permute.xlu0 %4539
      %v4541 = vsel %vm1520, %v4538, %v4540
      %v4542 = vsel %vm1520, %v4536, %v4538
      %v4543 = vsel %vm1520, %v4534, %v4536
      %v4544 = vsel %vm1520, %v4540, %v4534
      %v4545 = vmul.f32 %v4543, %v1336
      %v4546 = vmul.f32 %v4542, %v1340
      %v4547 = vmul.f32 %v4541, %v1344
      %v4548 = vmul.f32 %v4544, %v1348
      %s4549 = scalar_lea.vmem %s2, 200
      %v4550 = vld [vmem:[%s4549] sm:$0xff]
      %v4552 = vsel %vm348, %v4550, 0
      %4554 = vmatprep.subr.mxu0 %v4546
      %4555 = vmatpush1.msra.mxu0 %v4545
      %4556 = vmatprep.subr.mxu0 0.0
      %4557 = vmatpush1.msra.mxu0 0.0
      %4558 = vmatprep.subr.mxu0 0.0
      %4559 = vmatpush1.msra.mxu0 0.0
      %4560 = vmatprep.subr.mxu0 0.0
      %4561 = vmatpush1.msra.mxu0 0.0
      %4562 = vmatprep.subr.mxu0 0.0
      %4563 = vmatpush1.msra.mxu0 0.0
      %4564 = vmatprep.subr.mxu0 0.0
      %4565 = vmatpush1.msra.mxu0 0.0
      %4566 = vmatprep.subr.mxu0 0.0
      %4567 = vmatpush1.msra.mxu0 0.0
      %4568 = vmatprep.subr.mxu0 0.0
      %4569 = vmatpush1.msra.mxu0 0.0
      %4570 = vmatprep.subr.mxu0 0.0
      %4571 = vmatpush1.msra.mxu0 0.0
      %4572 = vmatprep.subr.mxu0 0.0
      %4573 = vmatpush1.msra.mxu0 0.0
      %4574 = vmatprep.subr.mxu0 0.0
      %4575 = vmatpush1.msra.mxu0 0.0
      %4576 = vmatprep.subr.mxu0 0.0
      %4577 = vmatpush1.msra.mxu0 0.0
      %4578 = vmatprep.subr.mxu0 0.0
      %4579 = vmatpush1.msra.mxu0 0.0
      %4580 = vmatprep.subr.mxu0 0.0
      %4581 = vmatpush1.msra.mxu0 0.0
      %4582 = vmatprep.subr.mxu0 0.0
      %4583 = vmatpush1.msra.mxu0 0.0
      %4584 = vmatprep.subr.mxu0 0.0
      %4585 = vmatpush1.msra.mxu0 0.0
      %4586 = vmatprep.subr.mxu0 0.0
      %4587 = vmatpush1.msra.mxu0 0.0
      %4588 = vmatprep.subr.mxu0 0.0
      %4589 = vmatpush1.msra.mxu0 0.0
      %4590 = vmatprep.subr.mxu0 0.0
      %4591 = vmatpush1.msra.mxu0 0.0
      %4592 = vmatprep.subr.mxu0 0.0
      %4593 = vmatpush1.msra.mxu0 0.0
      %4594 = vmatprep.subr.mxu0 0.0
      %4595 = vmatpush1.msra.mxu0 0.0
      %4596 = vmatprep.subr.mxu0 0.0
      %4597 = vmatpush1.msra.mxu0 0.0
      %4598 = vmatprep.subr.mxu0 0.0
      %4599 = vmatpush1.msra.mxu0 0.0
      %4600 = vmatprep.subr.mxu0 0.0
      %4601 = vmatpush1.msra.mxu0 0.0
      %4602 = vmatprep.subr.mxu0 0.0
      %4603 = vmatpush1.msra.mxu0 0.0
      %4604 = vmatprep.subr.mxu0 0.0
      %4605 = vmatpush1.msra.mxu0 0.0
      %4606 = vmatprep.subr.mxu0 0.0
      %4607 = vmatpush1.msra.mxu0 0.0
      %4608 = vmatprep.subr.mxu0 0.0
      %4609 = vmatpush1.msra.mxu0 0.0
      %4610 = vmatprep.subr.mxu0 0.0
      %4611 = vmatpush1.msra.mxu0 0.0
      %4612 = vmatprep.subr.mxu0 0.0
      %4613 = vmatpush1.msra.mxu0 0.0
      %4614 = vmatprep.subr.mxu0 0.0
      %4615 = vmatpush1.msra.mxu0 0.0
      %4616 = vmatprep.subr.mxu0 0.0
      %4617 = vmatpush1.msra.mxu0 0.0
      %4618 = vmatprep.mubr.f32.mxu0 0.0
      %4619 = vmatmul.mubr.f32.gmra.mrb[0].mxu0 %v4552
      %v4620 = vpop.f32.mrb[0].mxu0
      %v4621 = vadd.f32 0.0, %v4620
      %v4622 = vpop.f32.mrb[0].mxu0
      %v4623 = vadd.f32 0.0, %v4622
      %4624 = vdwg.mxu0
      %4625 = vmatprep.subr.mxu0 %v4548
      %4626 = vmatpush1.msra.mxu0 %v4547
      %4627 = vmatprep.subr.mxu0 0.0
      %4628 = vmatpush1.msra.mxu0 0.0
      %4629 = vmatprep.subr.mxu0 0.0
      %4630 = vmatpush1.msra.mxu0 0.0
      %4631 = vmatprep.subr.mxu0 0.0
      %4632 = vmatpush1.msra.mxu0 0.0
      %4633 = vmatprep.subr.mxu0 0.0
      %4634 = vmatpush1.msra.mxu0 0.0
      %4635 = vmatprep.subr.mxu0 0.0
      %4636 = vmatpush1.msra.mxu0 0.0
      %4637 = vmatprep.subr.mxu0 0.0
      %4638 = vmatpush1.msra.mxu0 0.0
      %4639 = vmatprep.subr.mxu0 0.0
      %4640 = vmatpush1.msra.mxu0 0.0
      %4641 = vmatprep.subr.mxu0 0.0
      %4642 = vmatpush1.msra.mxu0 0.0
      %4643 = vmatprep.subr.mxu0 0.0
      %4644 = vmatpush1.msra.mxu0 0.0
      %4645 = vmatprep.subr.mxu0 0.0
      %4646 = vmatpush1.msra.mxu0 0.0
      %4647 = vmatprep.subr.mxu0 0.0
      %4648 = vmatpush1.msra.mxu0 0.0
      %4649 = vmatprep.subr.mxu0 0.0
      %4650 = vmatpush1.msra.mxu0 0.0
      %4651 = vmatprep.subr.mxu0 0.0
      %4652 = vmatpush1.msra.mxu0 0.0
      %4653 = vmatprep.subr.mxu0 0.0
      %4654 = vmatpush1.msra.mxu0 0.0
      %4655 = vmatprep.subr.mxu0 0.0
      %4656 = vmatpush1.msra.mxu0 0.0
      %4657 = vmatprep.subr.mxu0 0.0
      %4658 = vmatpush1.msra.mxu0 0.0
      %4659 = vmatprep.subr.mxu0 0.0
      %4660 = vmatpush1.msra.mxu0 0.0
      %4661 = vmatprep.subr.mxu0 0.0
      %4662 = vmatpush1.msra.mxu0 0.0
      %4663 = vmatprep.subr.mxu0 0.0
      %4664 = vmatpush1.msra.mxu0 0.0
      %4665 = vmatprep.subr.mxu0 0.0
      %4666 = vmatpush1.msra.mxu0 0.0
      %4667 = vmatprep.subr.mxu0 0.0
      %4668 = vmatpush1.msra.mxu0 0.0
      %4669 = vmatprep.subr.mxu0 0.0
      %4670 = vmatpush1.msra.mxu0 0.0
      %4671 = vmatprep.subr.mxu0 0.0
      %4672 = vmatpush1.msra.mxu0 0.0
      %4673 = vmatprep.subr.mxu0 0.0
      %4674 = vmatpush1.msra.mxu0 0.0
      %4675 = vmatprep.subr.mxu0 0.0
      %4676 = vmatpush1.msra.mxu0 0.0
      %4677 = vmatprep.subr.mxu0 0.0
      %4678 = vmatpush1.msra.mxu0 0.0
      %4679 = vmatprep.subr.mxu0 0.0
      %4680 = vmatpush1.msra.mxu0 0.0
      %4681 = vmatprep.subr.mxu0 0.0
      %4682 = vmatpush1.msra.mxu0 0.0
      %4683 = vmatprep.subr.mxu0 0.0
      %4684 = vmatpush1.msra.mxu0 0.0
      %4685 = vmatprep.subr.mxu0 0.0
      %4686 = vmatpush1.msra.mxu0 0.0
      %4687 = vmatprep.subr.mxu0 0.0
      %4688 = vmatpush1.msra.mxu0 0.0
      %4689 = vmatprep.mubr.f32.mxu0 0.0
      %4690 = vmatmul.mubr.f32.gmra.mrb[0].mxu0 %v4552
      %v4691 = vpop.f32.mrb[0].mxu0
      %v4692 = vadd.f32 0.0, %v4691
      %v4693 = vpop.f32.mrb[0].mxu0
      %v4694 = vadd.f32 0.0, %v4693
      %4695 = vdwg.mxu0
      %v4696 = vadd.f32 %v4529, %v4621
      %v4697 = vadd.f32 %v4530, %v4623
      %v4698 = vadd.f32 %v4531, %v4692
      %v4699 = vadd.f32 %v4532, %v4694
      %4700 = vrot.lane.b32.xlu0 %v3372, 111
      %v4701 = vpop.permute.xlu0 %4700
      %4702 = vrot.lane.b32.xlu0 %v3373, 111
      %v4703 = vpop.permute.xlu0 %4702
      %4704 = vrot.lane.b32.xlu0 %v3374, 111
      %v4705 = vpop.permute.xlu0 %4704
      %4706 = vrot.lane.b32.xlu0 %v3375, 111
      %v4707 = vpop.permute.xlu0 %4706
      %v4708 = vsel %vm1688, %v4705, %v4707
      %v4709 = vsel %vm1688, %v4703, %v4705
      %v4710 = vsel %vm1688, %v4701, %v4703
      %v4711 = vsel %vm1688, %v4707, %v4701
      %v4712 = vmul.f32 %v4710, %v1336
      %v4713 = vmul.f32 %v4709, %v1340
      %v4714 = vmul.f32 %v4708, %v1344
      %v4715 = vmul.f32 %v4711, %v1348
      %v4716 = vmul.f32 %v4712, %v660
      %v4717 = vmul.f32 %v4713, %v664
      %v4718 = vmul.f32 %v4714, %v668
      %v4719 = vmul.f32 %v4715, %v672
      %s4720 = scalar_lea.vmem %s2, 208
      %v4721 = vld [vmem:[%s4720] sm:$0xff]
      %v4723 = vsel %vm348, %v4721, 0
      %4725 = vmatprep.subr.mxu0 %v4717
      %4726 = vmatpush1.msra.mxu0 %v4716
      %4727 = vmatprep.subr.mxu0 0.0
      %4728 = vmatpush1.msra.mxu0 0.0
      %4729 = vmatprep.subr.mxu0 0.0
      %4730 = vmatpush1.msra.mxu0 0.0
      %4731 = vmatprep.subr.mxu0 0.0
      %4732 = vmatpush1.msra.mxu0 0.0
      %4733 = vmatprep.subr.mxu0 0.0
      %4734 = vmatpush1.msra.mxu0 0.0
      %4735 = vmatprep.subr.mxu0 0.0
      %4736 = vmatpush1.msra.mxu0 0.0
      %4737 = vmatprep.subr.mxu0 0.0
      %4738 = vmatpush1.msra.mxu0 0.0
      %4739 = vmatprep.subr.mxu0 0.0
      %4740 = vmatpush1.msra.mxu0 0.0
      %4741 = vmatprep.subr.mxu0 0.0
      %4742 = vmatpush1.msra.mxu0 0.0
      %4743 = vmatprep.subr.mxu0 0.0
      %4744 = vmatpush1.msra.mxu0 0.0
      %4745 = vmatprep.subr.mxu0 0.0
      %4746 = vmatpush1.msra.mxu0 0.0
      %4747 = vmatprep.subr.mxu0 0.0
      %4748 = vmatpush1.msra.mxu0 0.0
      %4749 = vmatprep.subr.mxu0 0.0
      %4750 = vmatpush1.msra.mxu0 0.0
      %4751 = vmatprep.subr.mxu0 0.0
      %4752 = vmatpush1.msra.mxu0 0.0
      %4753 = vmatprep.subr.mxu0 0.0
      %4754 = vmatpush1.msra.mxu0 0.0
      %4755 = vmatprep.subr.mxu0 0.0
      %4756 = vmatpush1.msra.mxu0 0.0
      %4757 = vmatprep.subr.mxu0 0.0
      %4758 = vmatpush1.msra.mxu0 0.0
      %4759 = vmatprep.subr.mxu0 0.0
      %4760 = vmatpush1.msra.mxu0 0.0
      %4761 = vmatprep.subr.mxu0 0.0
      %4762 = vmatpush1.msra.mxu0 0.0
      %4763 = vmatprep.subr.mxu0 0.0
      %4764 = vmatpush1.msra.mxu0 0.0
      %4765 = vmatprep.subr.mxu0 0.0
      %4766 = vmatpush1.msra.mxu0 0.0
      %4767 = vmatprep.subr.mxu0 0.0
      %4768 = vmatpush1.msra.mxu0 0.0
      %4769 = vmatprep.subr.mxu0 0.0
      %4770 = vmatpush1.msra.mxu0 0.0
      %4771 = vmatprep.subr.mxu0 0.0
      %4772 = vmatpush1.msra.mxu0 0.0
      %4773 = vmatprep.subr.mxu0 0.0
      %4774 = vmatpush1.msra.mxu0 0.0
      %4775 = vmatprep.subr.mxu0 0.0
      %4776 = vmatpush1.msra.mxu0 0.0
      %4777 = vmatprep.subr.mxu0 0.0
      %4778 = vmatpush1.msra.mxu0 0.0
      %4779 = vmatprep.subr.mxu0 0.0
      %4780 = vmatpush1.msra.mxu0 0.0
      %4781 = vmatprep.subr.mxu0 0.0
      %4782 = vmatpush1.msra.mxu0 0.0
      %4783 = vmatprep.subr.mxu0 0.0
      %4784 = vmatpush1.msra.mxu0 0.0
      %4785 = vmatprep.subr.mxu0 0.0
      %4786 = vmatpush1.msra.mxu0 0.0
      %4787 = vmatprep.subr.mxu0 0.0
      %4788 = vmatpush1.msra.mxu0 0.0
      %4789 = vmatprep.mubr.f32.mxu0 0.0
      %4790 = vmatmul.mubr.f32.gmra.mrb[0].mxu0 %v4723
      %v4791 = vpop.f32.mrb[0].mxu0
      %v4792 = vadd.f32 0.0, %v4791
      %v4793 = vpop.f32.mrb[0].mxu0
      %v4794 = vadd.f32 0.0, %v4793
      %4795 = vdwg.mxu0
      %4796 = vmatprep.subr.mxu0 %v4719
      %4797 = vmatpush1.msra.mxu0 %v4718
      %4798 = vmatprep.subr.mxu0 0.0
      %4799 = vmatpush1.msra.mxu0 0.0
      %4800 = vmatprep.subr.mxu0 0.0
      %4801 = vmatpush1.msra.mxu0 0.0
      %4802 = vmatprep.subr.mxu0 0.0
      %4803 = vmatpush1.msra.mxu0 0.0
      %4804 = vmatprep.subr.mxu0 0.0
      %4805 = vmatpush1.msra.mxu0 0.0
      %4806 = vmatprep.subr.mxu0 0.0
      %4807 = vmatpush1.msra.mxu0 0.0
      %4808 = vmatprep.subr.mxu0 0.0
      %4809 = vmatpush1.msra.mxu0 0.0
      %4810 = vmatprep.subr.mxu0 0.0
      %4811 = vmatpush1.msra.mxu0 0.0
      %4812 = vmatprep.subr.mxu0 0.0
      %4813 = vmatpush1.msra.mxu0 0.0
      %4814 = vmatprep.subr.mxu0 0.0
      %4815 = vmatpush1.msra.mxu0 0.0
      %4816 = vmatprep.subr.mxu0 0.0
      %4817 = vmatpush1.msra.mxu0 0.0
      %4818 = vmatprep.subr.mxu0 0.0
      %4819 = vmatpush1.msra.mxu0 0.0
      %4820 = vmatprep.subr.mxu0 0.0
      %4821 = vmatpush1.msra.mxu0 0.0
      %4822 = vmatprep.subr.mxu0 0.0
      %4823 = vmatpush1.msra.mxu0 0.0
      %4824 = vmatprep.subr.mxu0 0.0
      %4825 = vmatpush1.msra.mxu0 0.0
      %4826 = vmatprep.subr.mxu0 0.0
      %4827 = vmatpush1.msra.mxu0 0.0
      %4828 = vmatprep.subr.mxu0 0.0
      %4829 = vmatpush1.msra.mxu0 0.0
      %4830 = vmatprep.subr.mxu0 0.0
      %4831 = vmatpush1.msra.mxu0 0.0
      %4832 = vmatprep.subr.mxu0 0.0
      %4833 = vmatpush1.msra.mxu0 0.0
      %4834 = vmatprep.subr.mxu0 0.0
      %4835 = vmatpush1.msra.mxu0 0.0
      %4836 = vmatprep.subr.mxu0 0.0
      %4837 = vmatpush1.msra.mxu0 0.0
      %4838 = vmatprep.subr.mxu0 0.0
      %4839 = vmatpush1.msra.mxu0 0.0
      %4840 = vmatprep.subr.mxu0 0.0
      %4841 = vmatpush1.msra.mxu0 0.0
      %4842 = vmatprep.subr.mxu0 0.0
      %4843 = vmatpush1.msra.mxu0 0.0
      %4844 = vmatprep.subr.mxu0 0.0
      %4845 = vmatpush1.msra.mxu0 0.0
      %4846 = vmatprep.subr.mxu0 0.0
      %4847 = vmatpush1.msra.mxu0 0.0
      %4848 = vmatprep.subr.mxu0 0.0
      %4849 = vmatpush1.msra.mxu0 0.0
      %4850 = vmatprep.subr.mxu0 0.0
      %4851 = vmatpush1.msra.mxu0 0.0
      %4852 = vmatprep.subr.mxu0 0.0
      %4853 = vmatpush1.msra.mxu0 0.0
      %4854 = vmatprep.subr.mxu0 0.0
      %4855 = vmatpush1.msra.mxu0 0.0
      %4856 = vmatprep.subr.mxu0 0.0
      %4857 = vmatpush1.msra.mxu0 0.0
      %4858 = vmatprep.subr.mxu0 0.0
      %4859 = vmatpush1.msra.mxu0 0.0
      %4860 = vmatprep.mubr.f32.mxu0 0.0
      %4861 = vmatmul.mubr.f32.gmra.mrb[0].mxu0 %v4723
      %v4862 = vpop.f32.mrb[0].mxu0
      %v4863 = vadd.f32 0.0, %v4862
      %v4864 = vpop.f32.mrb[0].mxu0
      %v4865 = vadd.f32 0.0, %v4864
      %4866 = vdwg.mxu0
      %v4867 = vadd.f32 %v4696, %v4792
      %v4868 = vadd.f32 %v4697, %v4794
      %v4869 = vadd.f32 %v4698, %v4863
      %v4870 = vadd.f32 %v4699, %v4865
      %s4871 = scalar_lea.vmem %s3, 16
      %v4872 = vld [vmem:[%s4871] sm:$0xff]
      %4874 = vset.pattern.permute.xlu0 0
      %4875 = vperm.xlu0 %4874, %v4872
      %v4876 = vpop.permute.xlu0 %4875
      %v4878 = vadd.f32 %v4867, %v4876
      %v4879 = vadd.f32 %v4868, %v4876
      %v4880 = vadd.f32 %v4869, %v4876
      %v4881 = vadd.f32 %v4870, %v4876
      %v4882 = vadd.f32 %v4878, %v1862
      %v4883 = vadd.f32 %v4879, %v1863
      %v4884 = vadd.f32 %v4880, %v1864
      %v4885 = vadd.f32 %v4881, %v1865
      %v4886 = vmax.f32 %v4882, 0.0
      %v4887 = vmax.f32 %v4883, 0.0
      %v4888 = vmax.f32 %v4884, 0.0
      %v4889 = vmax.f32 %v4885, 0.0
      %v4890 = vld [vmem:[%s4] sm:$0xff]
      %v4891 = vld [vmem:[%s5] sm:$0x1]
      %v4892 = vadd.f32 %v4886, %v4887
      %4893 = vadd.xlane.f32.xlu0 %v4892
      %v4894 = vpop.xlane.xlu0 %4893
      %v4895 = vmul.f32 %v4894, 0.00390625
      %v4896 = vmul.f32 %v4890, %v4895
      %v4897 = vrot.slane %v4896, 4
      %v4898 = vadd.f32 %v4896, %v4897
      %v4899 = vrot.slane %v4898, 2
      %v4900 = vadd.f32 %v4898, %v4899
      %v4901 = vrot.slane %v4900, 1
      %v4902 = vadd.f32 %v4900, %v4901
      %v4903 = vadd.f32 %v4902, %v4891
      %v4904 = vadd.f32 %v4888, %v4889
      %4905 = vadd.xlane.f32.xlu0 %v4904
      %v4906 = vpop.xlane.xlu0 %4905
      %v4907 = vmul.f32 %v4906, 0.00390625
      %v4908 = vmul.f32 %v4890, %v4907
      %v4909 = vrot.slane %v4908, 4
      %v4910 = vadd.f32 %v4908, %v4909
      %v4911 = vrot.slane %v4910, 2
      %v4912 = vadd.f32 %v4910, %v4911
      %v4913 = vrot.slane %v4912, 1
      %v4914 = vadd.f32 %v4912, %v4913
      %v4915 = vadd.f32 %v4914, %v4891
      %v4917 = vrot.slane %v4915, 7
      %vm4919 = vcmask 1040384
      %v4920 = vsel %vm4919, %v4903, %v4917
      %4921 = vst [vmem:[%s251] sm:$0x3] %v4920
      %p4922 = scmp.lt.s32.totalorder %s17, 1
      %s4923 = scalar_select %p4922, %s17, 1
      %s4924 = smul.addr %s4923, 2
      %s4925 = scalar_lea.vmem %s6, %s4924
      // Predicated region
      $region45: #{siamese_forward.1} parent=43 // pred_check
        %p4926 = pneg %p166
      $region46: #{siamese_forward.1} parent=43 // pred_check_branch
        %4928 = sbr.rel (%p4926) target = $region48
      $region47: #{siamese_forward.1} parent=43 // pred_region
        _
      $region48: #{siamese_forward.1} parent=43 // pred_fallthru
        _
    $region44: #{siamese_forward.1} parent=5 // pred_fallthru
      _
    %p4929 = scmp.le.s32.totalorder 2, %s12
    // Predicated region
    $region49: #{siamese_forward.1} parent=5 // pred_check
      %p4930 = pneg %p4929
    $region50: #{siamese_forward.1} parent=5 // pred_check_branch
      %4932 = sbr.rel (%p4930) target = $region52
    $region51: #{siamese_forward.1} parent=5 // pred_region
      %s4933 = ssub.s32 %s12, 2
      // Predicated region
      $region53: #{siamese_forward.1} parent=51 // pred_check
        %p4934 = pneg %p172
      $region54: #{siamese_forward.1} parent=51 // pred_check_branch
        %4936 = sbr.rel (%p4934) target = $region56
      $region55: #{siamese_forward.1} parent=51 // pred_region
        %p4937 = scmp.lt.s32.totalorder %s18, 1
        %s4938 = scalar_select %p4937, %s18, 1
        %s4939 = smul.addr %s4938, 2
        %s4940 = scalar_lea.vmem %s6, %s4939
      $region56: #{siamese_forward.1} parent=51 // pred_fallthru
        _
    $region52: #{siamese_forward.1} parent=5 // pred_fallthru
      _
  $region6: #{siamese_forward.1} parent=0 // loop_footer
    %s16 = sadd.s32 1, %s12
  $region7: #{siamese_forward.1} parent=0 // loop_footer_branch
    %11 = sbr.rel target = $region3
  $region8: #{siamese_forward.1} parent=0 // loop_exit
    _

</llo_original>
